<compile_context>
chip_gen: v5e
topology: v5e:2x2
jax: 0.10.0
libtpu: 0.0.40
codegen_flags: <defaults>
</compile_context>

<pallas_src>
import jax
import jax.numpy as jnp
from jax import lax
from jax.experimental import pallas as pl
from jax.experimental.pallas import tpu as pltpu

D_MODEL = 128
N_HEADS = 4
N_LAYERS = 2
D_FF = 256
MAX_SEQ = 42          # 6 * 7 board cells
SEQ_PAD = 64          # pad 42 -> 64: clean (8,128) tiles per batch
N_POLICY = 7
N_HEAD_HIDDEN = 256
LN_EPS = 1e-5
NEG_INF = -1e30


# ---------------------------------------------------------------------------
# small math helpers (shared by kernel and pure-JAX reference)
# ---------------------------------------------------------------------------
def _gelu(x):
    # TODO(synk): torch's activation='gelu' is the exact erf-GELU; tanh
    # approximation is used here (no guaranteed erf lowering in Mosaic).
    c = 0.7978845608028654  # sqrt(2/pi)
    return 0.5 * x * (1.0 + jnp.tanh(c * (x + 0.044715 * x * x * x)))


def _layer_norm(x, w, b):
    mu = jnp.mean(x, axis=-1, keepdims=True)
    xc = x - mu
    var = jnp.mean(xc * xc, axis=-1, keepdims=True)
    return xc * lax.rsqrt(var + LN_EPS) * w + b


def _mm(a, b):
    return jnp.dot(a, b, preferred_element_type=jnp.float32)


# ---------------------------------------------------------------------------
# Fused Pallas kernel: one grid step == one batch element's full forward pass
# ---------------------------------------------------------------------------
def fused_forward_kernel(
        board_ref, embed_ref, pos_ref,
        wqkv_ref, wo_ref, w1_ref, w2_ref, lay_ref, b1_ref,
        wh1_ref, bh1_ref, wh2_ref, bh2_ref,
        out_ref, attn_scr):
    S = SEQ_PAD
    D = D_MODEL
    H = N_HEADS
    dh = D // H

    # ---- embedding (vocab=3 -> two selects, no gather) + positional encoding
    board = board_ref[0]                                            # (S, 1) int32
    emb = embed_ref[...]                                            # (3, D)  f32
    x = jnp.where(board == 1, emb[1:2, :],
                  jnp.where(board == 2, emb[2:3, :], emb[0:1, :]))  # (S, D)
    x = x + pos_ref[...]                                            # pre-padded pos

    # additive bias masking the padded key columns (positions >= MAX_SEQ)
    kv_idx = lax.broadcasted_iota(jnp.int32, (S, S), 1)
    key_bias = jnp.where(kv_idx < MAX_SEQ, 0.0, NEG_INF).astype(jnp.float32)

    for l in range(N_LAYERS):                    # weights all resident in VMEM
        lay = lay_ref[l]                         # (9, D) packed f32 small params
        xb = x.astype(jnp.bfloat16)

        # fused QKV projection: one (S,128)@(128,384) MXU matmul
        qkv = _mm(xb, wqkv_ref[l])                                  # (S, 3D) f32
        q = (qkv[:, 0:D] + lay[0:1]).astype(jnp.bfloat16)           # scale folded
        k = (qkv[:, D:2 * D] + lay[1:2]).astype(jnp.bfloat16)
        v = (qkv[:, 2 * D:3 * D] + lay[2:3]).astype(jnp.bfloat16)

        # per-head attention; head results concatenated into scratch lanes
        for h in range(H):
            c0 = h * dh
            s = lax.dot_general(q[:, c0:c0 + dh], k[:, c0:c0 + dh],
                                (((1,), (1,)), ((), ())),
                                preferred_element_type=jnp.float32)  # (S, S)
            s = s + key_bias
            s = s - jnp.max(s, axis=-1, keepdims=True)
            p = jnp.exp(s)
            p = p * pl.reciprocal(jnp.sum(p, axis=-1, keepdims=True), approx=True)
            head = _mm(p.astype(jnp.bfloat16), v[:, c0:c0 + dh])     # (S, dh)
            attn_scr[:, c0:c0 + dh] = head.astype(jnp.bfloat16)

        # single output projection over the lane-concatenated heads
        a = _mm(attn_scr[...], wo_ref[l]) + lay[3:4]                 # (S, D)
        x = _layer_norm(x + a, lay[4:5], lay[5:6])                   # post-norm 1

        # FFN
        ff = _gelu(_mm(x.astype(jnp.bfloat16), w1_ref[l]) + b1_ref[l])   # (S, F)
        ff = _mm(ff.astype(jnp.bfloat16), w2_ref[l]) + lay[6:7]          # (S, D)
        x = _layer_norm(x + ff, lay[7:8], lay[8:9])                      # post-norm 2

    # ---- masked mean-pool as a matmul (row 0 of pool = 1/42 on valid cols) ----
    row = lax.broadcasted_iota(jnp.int32, (8, S), 0)
    col = lax.broadcasted_iota(jnp.int32, (8, S), 1)
    pool = jnp.where((row == 0) & (col < MAX_SEQ),
                     1.0 / MAX_SEQ, 0.0).astype(jnp.float32)         # (8, S)
    pooled = _mm(pool, x)                                            # (8, D) f32

    # ---- fused policy + value heads, single lane-dense (8, 128) output ----
    pb = pooled.astype(jnp.bfloat16)
    hcat = jnp.maximum(_mm(pb, wh1_ref[...]) + bh1_ref[...], 0.0)    # (8, 512)
    y = _mm(hcat.astype(jnp.bfloat16), wh2_ref[...]) + bh2_ref[...]  # (8, 128)
    lane = lax.broadcasted_iota(jnp.int32, y.shape, 1)
    y = jnp.where(lane == N_POLICY, jnp.tanh(y), y)    # tanh only the value lane
    out_ref[0] = y


# ---------------------------------------------------------------------------
# Wrapper: one pallas_call, grid over batch (parallel -> dual-TC on v7x)
# ---------------------------------------------------------------------------
@jax.jit
def forward(board, params):
    B = board.shape[0]
    bf = board.reshape(B, -1).astype(jnp.int32)                      # (B, 42)
    bpad = jnp.pad(bf, ((0, 0), (0, SEQ_PAD - bf.shape[1])))         # (B, SEQ_PAD)
    board_rows = bpad.reshape(B, SEQ_PAD, 1)

    L, D, F = N_LAYERS, D_MODEL, D_FF

    def rep(shape):   # full-array block, constant index -> fetched once, resident
        return pl.BlockSpec(shape, lambda b: tuple(0 for _ in shape))

    out = pl.pallas_call(
        fused_forward_kernel,
        grid=(B,),
        in_specs=[
            pl.BlockSpec((1, SEQ_PAD, 1), lambda b: (b, 0, 0)),      # board
            rep((3, D)),                                             # embed
            rep((SEQ_PAD, D)),                                       # pos (padded)
            rep((L, D, 3 * D)),                                      # wqkv (bf16)
            rep((L, D, D)),                                          # wo   (bf16)
            rep((L, D, F)),                                          # w1   (bf16)
            rep((L, F, D)),                                          # w2   (bf16)
            rep((L, 9, D)),                                          # packed f32 biases/LN
            rep((L, 1, F)),                                          # b1
            rep((D, 2 * N_HEAD_HIDDEN)),                             # fused head W1
            rep((1, 2 * N_HEAD_HIDDEN)),                             # fused head b1
            rep((2 * N_HEAD_HIDDEN, 128)),                           # fused head W2 (block-diag)
            rep((1, 128)),                                           # fused head b2
        ],
        out_specs=pl.BlockSpec((1, 8, 128), lambda b: (b, 0, 0)),
        out_shape=jax.ShapeDtypeStruct((B, 8, 128), jnp.float32),
        scratch_shapes=[pltpu.VMEM((SEQ_PAD, D_MODEL), jnp.bfloat16)],
        compiler_params=pltpu.CompilerParams(
            dimension_semantics=("parallel",)),
    )(board_rows, params["embed"], params["pos"],
      params["wqkv"], params["wo"], params["w1"], params["w2"],
      params["lay128"], params["b1"],
      params["whead1"], params["bhead1"], params["whead2"], params["bhead2"])

    policy = out[:, 0, :N_POLICY]
    value = out[:, 0, N_POLICY:N_POLICY + 1]
    return policy, value


# ---------------------------------------------------------------------------
# Deterministic parameter init (synthetic). Matmul weights in bf16, packed;
# small f32 params packed into two slabs; 1/sqrt(dh) folded into Wq/bq.
# ---------------------------------------------------------------------------
def init_params(key):
    D, L, F, H = D_MODEL, N_LAYERS, D_FF, N_HEADS
    dh = D // H
    scale = 1.0 / float(dh) ** 0.5
    ks = jax.random.split(key, 26)

    def nrm(k, shape, s=0.02):
        return (s * jax.random.normal(k, shape)).astype(jnp.float32)

    p = {}
    p["embed"] = nrm(ks[0], (3, D), 1.0)                    # nn.Embedding(3, d_model)
    pos = nrm(ks[1], (MAX_SEQ, D), 1.0)                     # positional encoding
    p["pos"] = jnp.pad(pos, ((0, SEQ_PAD - MAX_SEQ), (0, 0)))

    wq = nrm(ks[2], (L, D, D)) * scale                      # scale folded into Wq
    wk = nrm(ks[3], (L, D, D))
    wv = nrm(ks[4], (L, D, D))
    p["wqkv"] = jnp.concatenate([wq, wk, wv], axis=-1).astype(jnp.bfloat16)  # (L,D,3D)
    p["wo"] = nrm(ks[5], (L, D, D)).astype(jnp.bfloat16)

    bq = nrm(ks[6], (L, 1, D)) * scale                      # scale folded into bq
    bk = nrm(ks[7], (L, 1, D))
    bv = nrm(ks[8], (L, 1, D))
    bo = nrm(ks[9], (L, 1, D))
    ln1w = 1.0 + nrm(ks[10], (L, 1, D))
    ln1b = nrm(ks[11], (L, 1, D))
    ln2w = 1.0 + nrm(ks[12], (L, 1, D))
    ln2b = nrm(ks[13], (L, 1, D))
    b2 = nrm(ks[14], (L, 1, D))
    # packed per-layer slab: rows = [bq, bk, bv, bo, ln1w, ln1b, b2, ln2w, ln2b]
    p["lay128"] = jnp.concatenate(
        [bq, bk, bv, bo, ln1w, ln1b, b2, ln2w, ln2b], axis=1)        # (L, 9, D)

    p["w1"] = nrm(ks[15], (L, D, F)).astype(jnp.bfloat16)
    p["b1"] = nrm(ks[16], (L, 1, F))
    p["w2"] = nrm(ks[17], (L, F, D)).astype(jnp.bfloat16)

    # fused policy/value heads
    wp1 = nrm(ks[18], (D, N_HEAD_HIDDEN))
    wv1 = nrm(ks[19], (D, N_HEAD_HIDDEN))
    p["whead1"] = jnp.concatenate([wp1, wv1], axis=1).astype(jnp.bfloat16)   # (D, 512)
    bp1 = nrm(ks[20], (N_HEAD_HIDDEN,))
    bv1 = nrm(ks[21], (N_HEAD_HIDDEN,))
    p["bhead1"] = jnp.concatenate([bp1, bv1])[None, :]                        # (1, 512)
    wp2 = nrm(ks[22], (N_HEAD_HIDDEN, N_POLICY))
    wv2 = nrm(ks[23], (N_HEAD_HIDDEN, 1))
    wh2 = jnp.zeros((2 * N_HEAD_HIDDEN, 128), jnp.float32)
    wh2 = wh2.at[:N_HEAD_HIDDEN, :N_POLICY].set(wp2)
    wh2 = wh2.at[N_HEAD_HIDDEN:, N_POLICY:N_POLICY + 1].set(wv2)
    p["whead2"] = wh2.astype(jnp.bfloat16)                                    # (512, 128)
    bp2 = nrm(ks[24], (N_POLICY,))
    bv2 = nrm(ks[25], (1,))
    bh2 = jnp.zeros((1, 128), jnp.float32)
    bh2 = bh2.at[0, :N_POLICY].set(bp2).at[0, N_POLICY].set(bv2[0])
    p["bhead2"] = bh2                                                          # (1, 128)
    return p


# ---------------------------------------------------------------------------
# Pure-JAX reference (same stored weights upcast to f32; correctness oracle)
# ---------------------------------------------------------------------------
def forward_ref(board, params):
    B = board.shape[0]
    D, H, dh = D_MODEL, N_HEADS, D_MODEL // N_HEADS
    f32 = jnp.float32
    bf = board.reshape(B, -1)
    x = params["embed"][bf] + params["pos"][None, :MAX_SEQ, :]
    for l in range(N_LAYERS):
        lay = params["lay128"][l]
        wqkv = params["wqkv"][l].astype(f32)
        q = x @ wqkv[:, :D] + lay[0]          # scale already folded into Wq/bq
        k = x @ wqkv[:, D:2 * D] + lay[1]
        v = x @ wqkv[:, 2 * D:] + lay[2]

        def split(t):
            return t.reshape(B, MAX_SEQ, H, dh).transpose(0, 2, 1, 3)
        s = jnp.einsum('bhqd,bhkd->bhqk', split(q), split(k))
        pr = jax.nn.softmax(s, axis=-1)
        a = jnp.einsum('bhqk,bhkd->bhqd', pr, split(v))
        a = a.transpose(0, 2, 1, 3).reshape(B, MAX_SEQ, D)
        a = a @ params["wo"][l].astype(f32) + lay[3]
        x = _layer_norm(x + a, lay[4], lay[5])
        ff = _gelu(x @ params["w1"][l].astype(f32) + params["b1"][l][0])
        ff = ff @ params["w2"][l].astype(f32) + lay[6]
        x = _layer_norm(x + ff, lay[7], lay[8])
    pooled = x.mean(axis=1)
    wh1 = params["whead1"].astype(f32)
    bh1 = params["bhead1"][0]
    wh2 = params["whead2"].astype(f32)
    bh2 = params["bhead2"][0]
    wp1, wv1 = wh1[:, :N_HEAD_HIDDEN], wh1[:, N_HEAD_HIDDEN:]
    bp1, bv1 = bh1[:N_HEAD_HIDDEN], bh1[N_HEAD_HIDDEN:]
    wp2, bp2 = wh2[:N_HEAD_HIDDEN, :N_POLICY], bh2[:N_POLICY]
    wv2, bv2 = wh2[N_HEAD_HIDDEN:, N_POLICY:N_POLICY + 1], bh2[N_POLICY:N_POLICY + 1]
    policy = jnp.maximum(pooled @ wp1 + bp1, 0.0) @ wp2 + bp2
    value = jnp.tanh(jnp.maximum(pooled @ wv1 + bv1, 0.0) @ wv2 + bv2)
    return policy, value


if __name__ == "__main__":
    # deterministic example input: a 2 x 6 x 7 Connect-Four board, cells in {0,1,2}
    board = jax.random.randint(jax.random.PRNGKey(0), (2, 6, 7), 0, 3, dtype=jnp.int32)
    params = init_params(jax.random.PRNGKey(1))

    policy, value = forward(board, params)
    jax.block_until_ready((policy, value))

    assert policy.shape == (2, N_POLICY) and value.shape == (2, 1)
    assert bool(jnp.all(jnp.isfinite(policy))) and bool(jnp.all(jnp.isfinite(value)))
    p_ref, v_ref = forward_ref(board, params)
    assert jnp.allclose(policy, p_ref, atol=2e-2, rtol=2e-2), "policy mismatch vs reference"
    assert jnp.allclose(value, v_ref, atol=2e-2, rtol=2e-2), "value mismatch vs reference"

    print("KERNEL_OK")
</pallas_src>

<mosaic_0001>
module attributes {stable_mosaic.version = 11 : i64} {
  func.func @fused_forward_kernel(%arg0: i32, %arg1: memref<1x64x1xi32, #tpu.memory_space<vmem>>, %arg2: memref<3x128xf32, #tpu.memory_space<vmem>>, %arg3: memref<64x128xf32, #tpu.memory_space<vmem>>, %arg4: memref<2x128x384xbf16, #tpu.memory_space<vmem>>, %arg5: memref<2x128x128xbf16, #tpu.memory_space<vmem>>, %arg6: memref<2x128x256xbf16, #tpu.memory_space<vmem>>, %arg7: memref<2x256x128xbf16, #tpu.memory_space<vmem>>, %arg8: memref<2x9x128xf32, #tpu.memory_space<vmem>>, %arg9: memref<2x1x256xf32, #tpu.memory_space<vmem>>, %arg10: memref<128x512xbf16, #tpu.memory_space<vmem>>, %arg11: memref<1x512xf32, #tpu.memory_space<vmem>>, %arg12: memref<512x128xbf16, #tpu.memory_space<vmem>>, %arg13: memref<1x128xf32, #tpu.memory_space<vmem>>, %arg14: memref<1x8x128xf32, #tpu.memory_space<vmem>>, %arg15: memref<64x128xbf16, #tpu.memory_space<vmem>>) attributes {dimension_semantics = [#tpu.dimension_semantics<parallel>], iteration_bounds = array<i64: 2>, scalar_prefetch = 0 : i64, scratch_operands = 1 : i64, tpu.core_type = #tpu.core_type<tc>, window_params = [{transform_indices = @transform_0, window_bounds = array<i64: 1, 64, 1>}, {pipeline_mode = #tpu.pipeline_mode<synchronous>, transform_indices = @transform_1, window_bounds = array<i64: 3, 128>}, {pipeline_mode = #tpu.pipeline_mode<synchronous>, transform_indices = @transform_2, window_bounds = array<i64: 64, 128>}, {pipeline_mode = #tpu.pipeline_mode<synchronous>, transform_indices = @transform_3, window_bounds = array<i64: 2, 128, 384>}, {pipeline_mode = #tpu.pipeline_mode<synchronous>, transform_indices = @transform_4, window_bounds = array<i64: 2, 128, 128>}, {pipeline_mode = #tpu.pipeline_mode<synchronous>, transform_indices = @transform_5, window_bounds = array<i64: 2, 128, 256>}, {pipeline_mode = #tpu.pipeline_mode<synchronous>, transform_indices = @transform_6, window_bounds = array<i64: 2, 256, 128>}, {pipeline_mode = #tpu.pipeline_mode<synchronous>, transform_indices = @transform_7, window_bounds = array<i64: 2, 9, 128>}, {pipeline_mode = #tpu.pipeline_mode<synchronous>, transform_indices = @transform_8, window_bounds = array<i64: 2, 1, 256>}, {pipeline_mode = #tpu.pipeline_mode<synchronous>, transform_indices = @transform_9, window_bounds = array<i64: 128, 512>}, {pipeline_mode = #tpu.pipeline_mode<synchronous>, transform_indices = @transform_10, window_bounds = array<i64: 1, 512>}, {pipeline_mode = #tpu.pipeline_mode<synchronous>, transform_indices = @transform_11, window_bounds = array<i64: 512, 128>}, {pipeline_mode = #tpu.pipeline_mode<synchronous>, transform_indices = @transform_12, window_bounds = array<i64: 1, 128>}, {transform_indices = @transform_13, window_bounds = array<i64: 1, 8, 128>}]} {
    %c0 = arith.constant 0 : index
    %c0_0 = arith.constant 0 : index
    %c0_1 = arith.constant 0 : index
    %0 = vector.load %arg1[%c0, %c0_0, %c0_1] : memref<1x64x1xi32, #tpu.memory_space<vmem>>, vector<1x64x1xi32>
    %1 = vector.shape_cast %0 : vector<1x64x1xi32> to vector<64x1xi32>
    %c0_2 = arith.constant 0 : index
    %c0_3 = arith.constant 0 : index
    %2 = vector.load %arg2[%c0_2, %c0_3] : memref<3x128xf32, #tpu.memory_space<vmem>>, vector<3x128xf32>
    %c1_i32 = arith.constant 1 : i32
    %3 = vector.broadcast %c1_i32 : i32 to vector<64x1xi32>
    %4 = arith.cmpi eq, %1, %3 : vector<64x1xi32>
    %5 = vector.extract_strided_slice %2 {offsets = [1, 0], sizes = [1, 128], strides = [1, 1]} : vector<3x128xf32> to vector<1x128xf32>
    %c2_i32 = arith.constant 2 : i32
    %6 = vector.broadcast %c2_i32 : i32 to vector<64x1xi32>
    %7 = arith.cmpi eq, %1, %6 : vector<64x1xi32>
    %8 = vector.extract_strided_slice %2 {offsets = [2, 0], sizes = [1, 128], strides = [1, 1]} : vector<3x128xf32> to vector<1x128xf32>
    %9 = vector.extract_strided_slice %2 {offsets = [0, 0], sizes = [1, 128], strides = [1, 1]} : vector<3x128xf32> to vector<1x128xf32>
    %10 = vector.shape_cast %7 : vector<64x1xi1> to vector<64x1xi1>
    %11 = vector.broadcast %10 : vector<64x1xi1> to vector<64x128xi1>
    %12 = vector.shape_cast %8 : vector<1x128xf32> to vector<1x128xf32>
    %13 = vector.broadcast %12 : vector<1x128xf32> to vector<64x128xf32>
    %14 = vector.shape_cast %9 : vector<1x128xf32> to vector<1x128xf32>
    %15 = vector.broadcast %14 : vector<1x128xf32> to vector<64x128xf32>
    %16 = arith.select %11, %13, %15 : vector<64x128xi1>, vector<64x128xf32>
    %17 = vector.shape_cast %4 : vector<64x1xi1> to vector<64x1xi1>
    %18 = vector.broadcast %17 : vector<64x1xi1> to vector<64x128xi1>
    %19 = vector.shape_cast %5 : vector<1x128xf32> to vector<1x128xf32>
    %20 = vector.broadcast %19 : vector<1x128xf32> to vector<64x128xf32>
    %21 = arith.select %18, %20, %16 : vector<64x128xi1>, vector<64x128xf32>
    %c0_4 = arith.constant 0 : index
    %c0_5 = arith.constant 0 : index
    %22 = vector.load %arg3[%c0_4, %c0_5] : memref<64x128xf32, #tpu.memory_space<vmem>>, vector<64x128xf32>
    %23 = arith.addf %21, %22 : vector<64x128xf32>
    %24 = tpu.iota {dimensions = array<i32: 1>} : vector<64x64xi32>
    %c42_i32 = arith.constant 42 : i32
    %25 = vector.broadcast %c42_i32 : i32 to vector<64x64xi32>
    %26 = arith.cmpi slt, %24, %25 : vector<64x64xi32>
    %cst = arith.constant 0.000000e+00 : f32
    %cst_6 = arith.constant -1.000000e+30 : f32
    %27 = vector.broadcast %cst : f32 to vector<64x64xf32>
    %28 = vector.broadcast %cst_6 : f32 to vector<64x64xf32>
    %29 = arith.select %26, %27, %28 : vector<64x64xi1>, vector<64x64xf32>
    %c0_7 = arith.constant 0 : index
    %c0_8 = arith.constant 0 : index
    %c0_9 = arith.constant 0 : index
    %30 = vector.load %arg8[%c0_7, %c0_8, %c0_9] : memref<2x9x128xf32, #tpu.memory_space<vmem>>, vector<1x9x128xf32>
    %31 = vector.shape_cast %30 : vector<1x9x128xf32> to vector<9x128xf32>
    %32 = arith.truncf %23 : vector<64x128xf32> to vector<64x128xbf16>
    %c0_10 = arith.constant 0 : index
    %c0_11 = arith.constant 0 : index
    %c0_12 = arith.constant 0 : index
    %33 = vector.load %arg4[%c0_10, %c0_11, %c0_12] : memref<2x128x384xbf16, #tpu.memory_space<vmem>>, vector<1x128x384xbf16>
    %34 = vector.shape_cast %33 : vector<1x128x384xbf16> to vector<128x384xbf16>
    %cst_13 = arith.constant dense<0.000000e+00> : vector<64x384xf32>
    %35 = tpu.matmul %32, %34, %cst_13 {dimension_numbers = #tpu.dot_dimension_numbers<[1], [0], [0], [1], [0, 0, 1, 1], [], []>} : vector<64x128xbf16>, vector<128x384xbf16>, vector<64x384xf32> -> vector<64x384xf32>
    %36 = vector.extract_strided_slice %35 {offsets = [0, 0], sizes = [64, 128], strides = [1, 1]} : vector<64x384xf32> to vector<64x128xf32>
    %37 = vector.extract_strided_slice %31 {offsets = [0, 0], sizes = [1, 128], strides = [1, 1]} : vector<9x128xf32> to vector<1x128xf32>
    %38 = vector.broadcast %37 : vector<1x128xf32> to vector<64x128xf32>
    %39 = arith.addf %36, %38 : vector<64x128xf32>
    %40 = arith.truncf %39 : vector<64x128xf32> to vector<64x128xbf16>
    %41 = vector.extract_strided_slice %35 {offsets = [0, 128], sizes = [64, 128], strides = [1, 1]} : vector<64x384xf32> to vector<64x128xf32>
    %42 = vector.extract_strided_slice %31 {offsets = [1, 0], sizes = [1, 128], strides = [1, 1]} : vector<9x128xf32> to vector<1x128xf32>
    %43 = vector.broadcast %42 : vector<1x128xf32> to vector<64x128xf32>
    %44 = arith.addf %41, %43 : vector<64x128xf32>
    %45 = arith.truncf %44 : vector<64x128xf32> to vector<64x128xbf16>
    %46 = vector.extract_strided_slice %35 {offsets = [0, 256], sizes = [64, 128], strides = [1, 1]} : vector<64x384xf32> to vector<64x128xf32>
    %47 = vector.extract_strided_slice %31 {offsets = [2, 0], sizes = [1, 128], strides = [1, 1]} : vector<9x128xf32> to vector<1x128xf32>
    %48 = vector.broadcast %47 : vector<1x128xf32> to vector<64x128xf32>
    %49 = arith.addf %46, %48 : vector<64x128xf32>
    %50 = arith.truncf %49 : vector<64x128xf32> to vector<64x128xbf16>
    %51 = vector.extract_strided_slice %40 {offsets = [0, 0], sizes = [64, 32], strides = [1, 1]} : vector<64x128xbf16> to vector<64x32xbf16>
    %52 = vector.extract_strided_slice %45 {offsets = [0, 0], sizes = [64, 32], strides = [1, 1]} : vector<64x128xbf16> to vector<64x32xbf16>
    %cst_14 = arith.constant dense<0.000000e+00> : vector<64x64xf32>
    %53 = tpu.matmul %51, %52, %cst_14 {dimension_numbers = #tpu.dot_dimension_numbers<[1], [1], [0], [0], [0, 0, 1, 0], [], []>} : vector<64x32xbf16>, vector<64x32xbf16>, vector<64x64xf32> -> vector<64x64xf32>
    %54 = arith.addf %53, %29 : vector<64x64xf32>
    %cst_15 = arith.constant dense<0xFF800000> : vector<64xf32>
    %55 = vector.multi_reduction <maximumf>, %54, %cst_15 [1] : vector<64x64xf32> to vector<64xf32>
    %56 = vector.shape_cast %55 : vector<64xf32> to vector<64x1xf32>
    %57 = vector.broadcast %56 : vector<64x1xf32> to vector<64x64xf32>
    %58 = arith.subf %54, %57 : vector<64x64xf32>
    %59 = math.exp %58 : vector<64x64xf32>
    %cst_16 = arith.constant dense<0.000000e+00> : vector<64xf32>
    %60 = vector.multi_reduction <add>, %59, %cst_16 [1] : vector<64x64xf32> to vector<64xf32>
    %61 = vector.shape_cast %60 : vector<64xf32> to vector<64x1xf32>
    %62 = tpu.reciprocal %61 {approx = true} : vector<64x1xf32> -> vector<64x1xf32>
    %63 = vector.broadcast %62 : vector<64x1xf32> to vector<64x64xf32>
    %64 = arith.mulf %59, %63 : vector<64x64xf32>
    %65 = arith.truncf %64 : vector<64x64xf32> to vector<64x64xbf16>
    %66 = vector.extract_strided_slice %50 {offsets = [0, 0], sizes = [64, 32], strides = [1, 1]} : vector<64x128xbf16> to vector<64x32xbf16>
    %cst_17 = arith.constant dense<0.000000e+00> : vector<64x32xf32>
    %67 = tpu.matmul %65, %66, %cst_17 {dimension_numbers = #tpu.dot_dimension_numbers<[1], [0], [0], [1], [0, 0, 1, 1], [], []>} : vector<64x64xbf16>, vector<64x32xbf16>, vector<64x32xf32> -> vector<64x32xf32>
    %68 = arith.truncf %67 : vector<64x32xf32> to vector<64x32xbf16>
    %c0_18 = arith.constant 0 : index
    %c0_19 = arith.constant 0 : index
    %69 = vector.load %arg15[%c0_18, %c0_19] : memref<64x128xbf16, #tpu.memory_space<vmem>>, vector<64x32xbf16>
    tpu.vector_store %arg15[%c0_18, %c0_19], %68 {strides = array<i32>} : memref<64x128xbf16, #tpu.memory_space<vmem>>, vector<64x32xbf16>,
    %70 = vector.extract_strided_slice %40 {offsets = [0, 32], sizes = [64, 32], strides = [1, 1]} : vector<64x128xbf16> to vector<64x32xbf16>
    %71 = vector.extract_strided_slice %45 {offsets = [0, 32], sizes = [64, 32], strides = [1, 1]} : vector<64x128xbf16> to vector<64x32xbf16>
    %cst_20 = arith.constant dense<0.000000e+00> : vector<64x64xf32>
    %72 = tpu.matmul %70, %71, %cst_20 {dimension_numbers = #tpu.dot_dimension_numbers<[1], [1], [0], [0], [0, 0, 1, 0], [], []>} : vector<64x32xbf16>, vector<64x32xbf16>, vector<64x64xf32> -> vector<64x64xf32>
    %73 = arith.addf %72, %29 : vector<64x64xf32>
    %cst_21 = arith.constant dense<0xFF800000> : vector<64xf32>
    %74 = vector.multi_reduction <maximumf>, %73, %cst_21 [1] : vector<64x64xf32> to vector<64xf32>
    %75 = vector.shape_cast %74 : vector<64xf32> to vector<64x1xf32>
    %76 = vector.broadcast %75 : vector<64x1xf32> to vector<64x64xf32>
    %77 = arith.subf %73, %76 : vector<64x64xf32>
    %78 = math.exp %77 : vector<64x64xf32>
    %cst_22 = arith.constant dense<0.000000e+00> : vector<64xf32>
    %79 = vector.multi_reduction <add>, %78, %cst_22 [1] : vector<64x64xf32> to vector<64xf32>
    %80 = vector.shape_cast %79 : vector<64xf32> to vector<64x1xf32>
    %81 = tpu.reciprocal %80 {approx = true} : vector<64x1xf32> -> vector<64x1xf32>
    %82 = vector.broadcast %81 : vector<64x1xf32> to vector<64x64xf32>
    %83 = arith.mulf %78, %82 : vector<64x64xf32>
    %84 = arith.truncf %83 : vector<64x64xf32> to vector<64x64xbf16>
    %85 = vector.extract_strided_slice %50 {offsets = [0, 32], sizes = [64, 32], strides = [1, 1]} : vector<64x128xbf16> to vector<64x32xbf16>
    %cst_23 = arith.constant dense<0.000000e+00> : vector<64x32xf32>
    %86 = tpu.matmul %84, %85, %cst_23 {dimension_numbers = #tpu.dot_dimension_numbers<[1], [0], [0], [1], [0, 0, 1, 1], [], []>} : vector<64x64xbf16>, vector<64x32xbf16>, vector<64x32xf32> -> vector<64x32xf32>
    %87 = arith.truncf %86 : vector<64x32xf32> to vector<64x32xbf16>
    %c0_24 = arith.constant 0 : index
    %c32 = arith.constant 32 : index
    %88 = vector.load %arg15[%c0_24, %c32] : memref<64x128xbf16, #tpu.memory_space<vmem>>, vector<64x32xbf16>
    tpu.vector_store %arg15[%c0_24, %c32], %87 {strides = array<i32>} : memref<64x128xbf16, #tpu.memory_space<vmem>>, vector<64x32xbf16>,
    %89 = vector.extract_strided_slice %40 {offsets = [0, 64], sizes = [64, 32], strides = [1, 1]} : vector<64x128xbf16> to vector<64x32xbf16>
    %90 = vector.extract_strided_slice %45 {offsets = [0, 64], sizes = [64, 32], strides = [1, 1]} : vector<64x128xbf16> to vector<64x32xbf16>
    %cst_25 = arith.constant dense<0.000000e+00> : vector<64x64xf32>
    %91 = tpu.matmul %89, %90, %cst_25 {dimension_numbers = #tpu.dot_dimension_numbers<[1], [1], [0], [0], [0, 0, 1, 0], [], []>} : vector<64x32xbf16>, vector<64x32xbf16>, vector<64x64xf32> -> vector<64x64xf32>
    %92 = arith.addf %91, %29 : vector<64x64xf32>
    %cst_26 = arith.constant dense<0xFF800000> : vector<64xf32>
    %93 = vector.multi_reduction <maximumf>, %92, %cst_26 [1] : vector<64x64xf32> to vector<64xf32>
    %94 = vector.shape_cast %93 : vector<64xf32> to vector<64x1xf32>
    %95 = vector.broadcast %94 : vector<64x1xf32> to vector<64x64xf32>
    %96 = arith.subf %92, %95 : vector<64x64xf32>
    %97 = math.exp %96 : vector<64x64xf32>
    %cst_27 = arith.constant dense<0.000000e+00> : vector<64xf32>
    %98 = vector.multi_reduction <add>, %97, %cst_27 [1] : vector<64x64xf32> to vector<64xf32>
    %99 = vector.shape_cast %98 : vector<64xf32> to vector<64x1xf32>
    %100 = tpu.reciprocal %99 {approx = true} : vector<64x1xf32> -> vector<64x1xf32>
    %101 = vector.broadcast %100 : vector<64x1xf32> to vector<64x64xf32>
    %102 = arith.mulf %97, %101 : vector<64x64xf32>
    %103 = arith.truncf %102 : vector<64x64xf32> to vector<64x64xbf16>
    %104 = vector.extract_strided_slice %50 {offsets = [0, 64], sizes = [64, 32], strides = [1, 1]} : vector<64x128xbf16> to vector<64x32xbf16>
    %cst_28 = arith.constant dense<0.000000e+00> : vector<64x32xf32>
    %105 = tpu.matmul %103, %104, %cst_28 {dimension_numbers = #tpu.dot_dimension_numbers<[1], [0], [0], [1], [0, 0, 1, 1], [], []>} : vector<64x64xbf16>, vector<64x32xbf16>, vector<64x32xf32> -> vector<64x32xf32>
    %106 = arith.truncf %105 : vector<64x32xf32> to vector<64x32xbf16>
    %c0_29 = arith.constant 0 : index
    %c64 = arith.constant 64 : index
    %107 = vector.load %arg15[%c0_29, %c64] : memref<64x128xbf16, #tpu.memory_space<vmem>>, vector<64x32xbf16>
    tpu.vector_store %arg15[%c0_29, %c64], %106 {strides = array<i32>} : memref<64x128xbf16, #tpu.memory_space<vmem>>, vector<64x32xbf16>,
    %108 = vector.extract_strided_slice %40 {offsets = [0, 96], sizes = [64, 32], strides = [1, 1]} : vector<64x128xbf16> to vector<64x32xbf16>
    %109 = vector.extract_strided_slice %45 {offsets = [0, 96], sizes = [64, 32], strides = [1, 1]} : vector<64x128xbf16> to vector<64x32xbf16>
    %cst_30 = arith.constant dense<0.000000e+00> : vector<64x64xf32>
    %110 = tpu.matmul %108, %109, %cst_30 {dimension_numbers = #tpu.dot_dimension_numbers<[1], [1], [0], [0], [0, 0, 1, 0], [], []>} : vector<64x32xbf16>, vector<64x32xbf16>, vector<64x64xf32> -> vector<64x64xf32>
    %111 = arith.addf %110, %29 : vector<64x64xf32>
    %cst_31 = arith.constant dense<0xFF800000> : vector<64xf32>
    %112 = vector.multi_reduction <maximumf>, %111, %cst_31 [1] : vector<64x64xf32> to vector<64xf32>
    %113 = vector.shape_cast %112 : vector<64xf32> to vector<64x1xf32>
    %114 = vector.broadcast %113 : vector<64x1xf32> to vector<64x64xf32>
    %115 = arith.subf %111, %114 : vector<64x64xf32>
    %116 = math.exp %115 : vector<64x64xf32>
    %cst_32 = arith.constant dense<0.000000e+00> : vector<64xf32>
    %117 = vector.multi_reduction <add>, %116, %cst_32 [1] : vector<64x64xf32> to vector<64xf32>
    %118 = vector.shape_cast %117 : vector<64xf32> to vector<64x1xf32>
    %119 = tpu.reciprocal %118 {approx = true} : vector<64x1xf32> -> vector<64x1xf32>
    %120 = vector.broadcast %119 : vector<64x1xf32> to vector<64x64xf32>
    %121 = arith.mulf %116, %120 : vector<64x64xf32>
    %122 = arith.truncf %121 : vector<64x64xf32> to vector<64x64xbf16>
    %123 = vector.extract_strided_slice %50 {offsets = [0, 96], sizes = [64, 32], strides = [1, 1]} : vector<64x128xbf16> to vector<64x32xbf16>
    %cst_33 = arith.constant dense<0.000000e+00> : vector<64x32xf32>
    %124 = tpu.matmul %122, %123, %cst_33 {dimension_numbers = #tpu.dot_dimension_numbers<[1], [0], [0], [1], [0, 0, 1, 1], [], []>} : vector<64x64xbf16>, vector<64x32xbf16>, vector<64x32xf32> -> vector<64x32xf32>
    %125 = arith.truncf %124 : vector<64x32xf32> to vector<64x32xbf16>
    %c0_34 = arith.constant 0 : index
    %c96 = arith.constant 96 : index
    %126 = vector.load %arg15[%c0_34, %c96] : memref<64x128xbf16, #tpu.memory_space<vmem>>, vector<64x32xbf16>
    tpu.vector_store %arg15[%c0_34, %c96], %125 {strides = array<i32>} : memref<64x128xbf16, #tpu.memory_space<vmem>>, vector<64x32xbf16>,
    %c0_35 = arith.constant 0 : index
    %c0_36 = arith.constant 0 : index
    %127 = vector.load %arg15[%c0_35, %c0_36] : memref<64x128xbf16, #tpu.memory_space<vmem>>, vector<64x128xbf16>
    %c0_37 = arith.constant 0 : index
    %c0_38 = arith.constant 0 : index
    %c0_39 = arith.constant 0 : index
    %128 = vector.load %arg5[%c0_37, %c0_38, %c0_39] : memref<2x128x128xbf16, #tpu.memory_space<vmem>>, vector<1x128x128xbf16>
    %129 = vector.shape_cast %128 : vector<1x128x128xbf16> to vector<128x128xbf16>
    %cst_40 = arith.constant dense<0.000000e+00> : vector<64x128xf32>
    %130 = tpu.matmul %127, %129, %cst_40 {dimension_numbers = #tpu.dot_dimension_numbers<[1], [0], [0], [1], [0, 0, 1, 1], [], []>} : vector<64x128xbf16>, vector<128x128xbf16>, vector<64x128xf32> -> vector<64x128xf32>
    %131 = vector.extract_strided_slice %31 {offsets = [3, 0], sizes = [1, 128], strides = [1, 1]} : vector<9x128xf32> to vector<1x128xf32>
    %132 = vector.broadcast %131 : vector<1x128xf32> to vector<64x128xf32>
    %133 = arith.addf %130, %132 : vector<64x128xf32>
    %134 = arith.addf %23, %133 : vector<64x128xf32>
    %135 = vector.extract_strided_slice %31 {offsets = [4, 0], sizes = [1, 128], strides = [1, 1]} : vector<9x128xf32> to vector<1x128xf32>
    %136 = vector.extract_strided_slice %31 {offsets = [5, 0], sizes = [1, 128], strides = [1, 1]} : vector<9x128xf32> to vector<1x128xf32>
    %cst_41 = arith.constant dense<0.000000e+00> : vector<64xf32>
    %137 = vector.multi_reduction <add>, %134, %cst_41 [1] : vector<64x128xf32> to vector<64xf32>
    %138 = vector.shape_cast %137 : vector<64xf32> to vector<64x1xf32>
    %cst_42 = arith.constant 1.280000e+02 : f32
    %139 = vector.broadcast %cst_42 : f32 to vector<64x1xf32>
    %140 = arith.divf %138, %139 : vector<64x1xf32>
    %141 = vector.broadcast %140 : vector<64x1xf32> to vector<64x128xf32>
    %142 = arith.subf %134, %141 : vector<64x128xf32>
    %143 = arith.mulf %142, %142 : vector<64x128xf32>
    %cst_43 = arith.constant dense<0.000000e+00> : vector<64xf32>
    %144 = vector.multi_reduction <add>, %143, %cst_43 [1] : vector<64x128xf32> to vector<64xf32>
    %145 = vector.shape_cast %144 : vector<64xf32> to vector<64x1xf32>
    %cst_44 = arith.constant 1.280000e+02 : f32
    %146 = vector.broadcast %cst_44 : f32 to vector<64x1xf32>
    %147 = arith.divf %145, %146 : vector<64x1xf32>
    %cst_45 = arith.constant 9.99999974E-6 : f32
    %148 = vector.broadcast %cst_45 : f32 to vector<64x1xf32>
    %149 = arith.addf %147, %148 : vector<64x1xf32>
    %150 = math.rsqrt %149 : vector<64x1xf32>
    %151 = vector.broadcast %150 : vector<64x1xf32> to vector<64x128xf32>
    %152 = arith.mulf %142, %151 : vector<64x128xf32>
    %153 = vector.broadcast %135 : vector<1x128xf32> to vector<64x128xf32>
    %154 = arith.mulf %152, %153 : vector<64x128xf32>
    %155 = vector.broadcast %136 : vector<1x128xf32> to vector<64x128xf32>
    %156 = arith.addf %154, %155 : vector<64x128xf32>
    %157 = arith.truncf %156 : vector<64x128xf32> to vector<64x128xbf16>
    %c0_46 = arith.constant 0 : index
    %c0_47 = arith.constant 0 : index
    %c0_48 = arith.constant 0 : index
    %158 = vector.load %arg6[%c0_46, %c0_47, %c0_48] : memref<2x128x256xbf16, #tpu.memory_space<vmem>>, vector<1x128x256xbf16>
    %159 = vector.shape_cast %158 : vector<1x128x256xbf16> to vector<128x256xbf16>
    %cst_49 = arith.constant dense<0.000000e+00> : vector<64x256xf32>
    %160 = tpu.matmul %157, %159, %cst_49 {dimension_numbers = #tpu.dot_dimension_numbers<[1], [0], [0], [1], [0, 0, 1, 1], [], []>} : vector<64x128xbf16>, vector<128x256xbf16>, vector<64x256xf32> -> vector<64x256xf32>
    %c0_50 = arith.constant 0 : index
    %c0_51 = arith.constant 0 : index
    %c0_52 = arith.constant 0 : index
    %161 = vector.load %arg9[%c0_50, %c0_51, %c0_52] : memref<2x1x256xf32, #tpu.memory_space<vmem>>, vector<1x1x256xf32>
    %162 = vector.shape_cast %161 : vector<1x1x256xf32> to vector<1x256xf32>
    %163 = vector.broadcast %162 : vector<1x256xf32> to vector<64x256xf32>
    %164 = arith.addf %160, %163 : vector<64x256xf32>
    %cst_53 = arith.constant 5.000000e-01 : f32
    %165 = vector.broadcast %cst_53 : f32 to vector<64x256xf32>
    %166 = arith.mulf %165, %164 : vector<64x256xf32>
    %cst_54 = arith.constant 4.471500e-02 : f32
    %167 = vector.broadcast %cst_54 : f32 to vector<64x256xf32>
    %168 = arith.mulf %167, %164 : vector<64x256xf32>
    %169 = arith.mulf %168, %164 : vector<64x256xf32>
    %170 = arith.mulf %169, %164 : vector<64x256xf32>
    %171 = arith.addf %164, %170 : vector<64x256xf32>
    %cst_55 = arith.constant 0.797884583 : f32
    %172 = vector.broadcast %cst_55 : f32 to vector<64x256xf32>
    %173 = arith.mulf %172, %171 : vector<64x256xf32>
    %174 = math.tanh %173 : vector<64x256xf32>
    %cst_56 = arith.constant 1.000000e+00 : f32
    %175 = vector.broadcast %cst_56 : f32 to vector<64x256xf32>
    %176 = arith.addf %175, %174 : vector<64x256xf32>
    %177 = arith.mulf %166, %176 : vector<64x256xf32>
    %178 = arith.truncf %177 : vector<64x256xf32> to vector<64x256xbf16>
    %c0_57 = arith.constant 0 : index
    %c0_58 = arith.constant 0 : index
    %c0_59 = arith.constant 0 : index
    %179 = vector.load %arg7[%c0_57, %c0_58, %c0_59] : memref<2x256x128xbf16, #tpu.memory_space<vmem>>, vector<1x256x128xbf16>
    %180 = vector.shape_cast %179 : vector<1x256x128xbf16> to vector<256x128xbf16>
    %cst_60 = arith.constant dense<0.000000e+00> : vector<64x128xf32>
    %181 = tpu.matmul %178, %180, %cst_60 {dimension_numbers = #tpu.dot_dimension_numbers<[1], [0], [0], [1], [0, 0, 1, 1], [], []>} : vector<64x256xbf16>, vector<256x128xbf16>, vector<64x128xf32> -> vector<64x128xf32>
    %182 = vector.extract_strided_slice %31 {offsets = [6, 0], sizes = [1, 128], strides = [1, 1]} : vector<9x128xf32> to vector<1x128xf32>
    %183 = vector.broadcast %182 : vector<1x128xf32> to vector<64x128xf32>
    %184 = arith.addf %181, %183 : vector<64x128xf32>
    %185 = arith.addf %156, %184 : vector<64x128xf32>
    %186 = vector.extract_strided_slice %31 {offsets = [7, 0], sizes = [1, 128], strides = [1, 1]} : vector<9x128xf32> to vector<1x128xf32>
    %187 = vector.extract_strided_slice %31 {offsets = [8, 0], sizes = [1, 128], strides = [1, 1]} : vector<9x128xf32> to vector<1x128xf32>
    %cst_61 = arith.constant dense<0.000000e+00> : vector<64xf32>
    %188 = vector.multi_reduction <add>, %185, %cst_61 [1] : vector<64x128xf32> to vector<64xf32>
    %189 = vector.shape_cast %188 : vector<64xf32> to vector<64x1xf32>
    %cst_62 = arith.constant 1.280000e+02 : f32
    %190 = vector.broadcast %cst_62 : f32 to vector<64x1xf32>
    %191 = arith.divf %189, %190 : vector<64x1xf32>
    %192 = vector.broadcast %191 : vector<64x1xf32> to vector<64x128xf32>
    %193 = arith.subf %185, %192 : vector<64x128xf32>
    %194 = arith.mulf %193, %193 : vector<64x128xf32>
    %cst_63 = arith.constant dense<0.000000e+00> : vector<64xf32>
    %195 = vector.multi_reduction <add>, %194, %cst_63 [1] : vector<64x128xf32> to vector<64xf32>
    %196 = vector.shape_cast %195 : vector<64xf32> to vector<64x1xf32>
    %cst_64 = arith.constant 1.280000e+02 : f32
    %197 = vector.broadcast %cst_64 : f32 to vector<64x1xf32>
    %198 = arith.divf %196, %197 : vector<64x1xf32>
    %cst_65 = arith.constant 9.99999974E-6 : f32
    %199 = vector.broadcast %cst_65 : f32 to vector<64x1xf32>
    %200 = arith.addf %198, %199 : vector<64x1xf32>
    %201 = math.rsqrt %200 : vector<64x1xf32>
    %202 = vector.broadcast %201 : vector<64x1xf32> to vector<64x128xf32>
    %203 = arith.mulf %193, %202 : vector<64x128xf32>
    %204 = vector.broadcast %186 : vector<1x128xf32> to vector<64x128xf32>
    %205 = arith.mulf %203, %204 : vector<64x128xf32>
    %206 = vector.broadcast %187 : vector<1x128xf32> to vector<64x128xf32>
    %207 = arith.addf %205, %206 : vector<64x128xf32>
    %c1 = arith.constant 1 : index
    %c0_66 = arith.constant 0 : index
    %c0_67 = arith.constant 0 : index
    %208 = vector.load %arg8[%c1, %c0_66, %c0_67] : memref<2x9x128xf32, #tpu.memory_space<vmem>>, vector<1x9x128xf32>
    %209 = vector.shape_cast %208 : vector<1x9x128xf32> to vector<9x128xf32>
    %210 = arith.truncf %207 : vector<64x128xf32> to vector<64x128xbf16>
    %c1_68 = arith.constant 1 : index
    %c0_69 = arith.constant 0 : index
    %c0_70 = arith.constant 0 : index
    %211 = vector.load %arg4[%c1_68, %c0_69, %c0_70] : memref<2x128x384xbf16, #tpu.memory_space<vmem>>, vector<1x128x384xbf16>
    %212 = vector.shape_cast %211 : vector<1x128x384xbf16> to vector<128x384xbf16>
    %cst_71 = arith.constant dense<0.000000e+00> : vector<64x384xf32>
    %213 = tpu.matmul %210, %212, %cst_71 {dimension_numbers = #tpu.dot_dimension_numbers<[1], [0], [0], [1], [0, 0, 1, 1], [], []>} : vector<64x128xbf16>, vector<128x384xbf16>, vector<64x384xf32> -> vector<64x384xf32>
    %214 = vector.extract_strided_slice %213 {offsets = [0, 0], sizes = [64, 128], strides = [1, 1]} : vector<64x384xf32> to vector<64x128xf32>
    %215 = vector.extract_strided_slice %209 {offsets = [0, 0], sizes = [1, 128], strides = [1, 1]} : vector<9x128xf32> to vector<1x128xf32>
    %216 = vector.broadcast %215 : vector<1x128xf32> to vector<64x128xf32>
    %217 = arith.addf %214, %216 : vector<64x128xf32>
    %218 = arith.truncf %217 : vector<64x128xf32> to vector<64x128xbf16>
    %219 = vector.extract_strided_slice %213 {offsets = [0, 128], sizes = [64, 128], strides = [1, 1]} : vector<64x384xf32> to vector<64x128xf32>
    %220 = vector.extract_strided_slice %209 {offsets = [1, 0], sizes = [1, 128], strides = [1, 1]} : vector<9x128xf32> to vector<1x128xf32>
    %221 = vector.broadcast %220 : vector<1x128xf32> to vector<64x128xf32>
    %222 = arith.addf %219, %221 : vector<64x128xf32>
    %223 = arith.truncf %222 : vector<64x128xf32> to vector<64x128xbf16>
    %224 = vector.extract_strided_slice %213 {offsets = [0, 256], sizes = [64, 128], strides = [1, 1]} : vector<64x384xf32> to vector<64x128xf32>
    %225 = vector.extract_strided_slice %209 {offsets = [2, 0], sizes = [1, 128], strides = [1, 1]} : vector<9x128xf32> to vector<1x128xf32>
    %226 = vector.broadcast %225 : vector<1x128xf32> to vector<64x128xf32>
    %227 = arith.addf %224, %226 : vector<64x128xf32>
    %228 = arith.truncf %227 : vector<64x128xf32> to vector<64x128xbf16>
    %229 = vector.extract_strided_slice %218 {offsets = [0, 0], sizes = [64, 32], strides = [1, 1]} : vector<64x128xbf16> to vector<64x32xbf16>
    %230 = vector.extract_strided_slice %223 {offsets = [0, 0], sizes = [64, 32], strides = [1, 1]} : vector<64x128xbf16> to vector<64x32xbf16>
    %cst_72 = arith.constant dense<0.000000e+00> : vector<64x64xf32>
    %231 = tpu.matmul %229, %230, %cst_72 {dimension_numbers = #tpu.dot_dimension_numbers<[1], [1], [0], [0], [0, 0, 1, 0], [], []>} : vector<64x32xbf16>, vector<64x32xbf16>, vector<64x64xf32> -> vector<64x64xf32>
    %232 = arith.addf %231, %29 : vector<64x64xf32>
    %cst_73 = arith.constant dense<0xFF800000> : vector<64xf32>
    %233 = vector.multi_reduction <maximumf>, %232, %cst_73 [1] : vector<64x64xf32> to vector<64xf32>
    %234 = vector.shape_cast %233 : vector<64xf32> to vector<64x1xf32>
    %235 = vector.broadcast %234 : vector<64x1xf32> to vector<64x64xf32>
    %236 = arith.subf %232, %235 : vector<64x64xf32>
    %237 = math.exp %236 : vector<64x64xf32>
    %cst_74 = arith.constant dense<0.000000e+00> : vector<64xf32>
    %238 = vector.multi_reduction <add>, %237, %cst_74 [1] : vector<64x64xf32> to vector<64xf32>
    %239 = vector.shape_cast %238 : vector<64xf32> to vector<64x1xf32>
    %240 = tpu.reciprocal %239 {approx = true} : vector<64x1xf32> -> vector<64x1xf32>
    %241 = vector.broadcast %240 : vector<64x1xf32> to vector<64x64xf32>
    %242 = arith.mulf %237, %241 : vector<64x64xf32>
    %243 = arith.truncf %242 : vector<64x64xf32> to vector<64x64xbf16>
    %244 = vector.extract_strided_slice %228 {offsets = [0, 0], sizes = [64, 32], strides = [1, 1]} : vector<64x128xbf16> to vector<64x32xbf16>
    %cst_75 = arith.constant dense<0.000000e+00> : vector<64x32xf32>
    %245 = tpu.matmul %243, %244, %cst_75 {dimension_numbers = #tpu.dot_dimension_numbers<[1], [0], [0], [1], [0, 0, 1, 1], [], []>} : vector<64x64xbf16>, vector<64x32xbf16>, vector<64x32xf32> -> vector<64x32xf32>
    %246 = arith.truncf %245 : vector<64x32xf32> to vector<64x32xbf16>
    %c0_76 = arith.constant 0 : index
    %c0_77 = arith.constant 0 : index
    %247 = vector.load %arg15[%c0_76, %c0_77] : memref<64x128xbf16, #tpu.memory_space<vmem>>, vector<64x32xbf16>
    tpu.vector_store %arg15[%c0_76, %c0_77], %246 {strides = array<i32>} : memref<64x128xbf16, #tpu.memory_space<vmem>>, vector<64x32xbf16>,
    %248 = vector.extract_strided_slice %218 {offsets = [0, 32], sizes = [64, 32], strides = [1, 1]} : vector<64x128xbf16> to vector<64x32xbf16>
    %249 = vector.extract_strided_slice %223 {offsets = [0, 32], sizes = [64, 32], strides = [1, 1]} : vector<64x128xbf16> to vector<64x32xbf16>
    %cst_78 = arith.constant dense<0.000000e+00> : vector<64x64xf32>
    %250 = tpu.matmul %248, %249, %cst_78 {dimension_numbers = #tpu.dot_dimension_numbers<[1], [1], [0], [0], [0, 0, 1, 0], [], []>} : vector<64x32xbf16>, vector<64x32xbf16>, vector<64x64xf32> -> vector<64x64xf32>
    %251 = arith.addf %250, %29 : vector<64x64xf32>
    %cst_79 = arith.constant dense<0xFF800000> : vector<64xf32>
    %252 = vector.multi_reduction <maximumf>, %251, %cst_79 [1] : vector<64x64xf32> to vector<64xf32>
    %253 = vector.shape_cast %252 : vector<64xf32> to vector<64x1xf32>
    %254 = vector.broadcast %253 : vector<64x1xf32> to vector<64x64xf32>
    %255 = arith.subf %251, %254 : vector<64x64xf32>
    %256 = math.exp %255 : vector<64x64xf32>
    %cst_80 = arith.constant dense<0.000000e+00> : vector<64xf32>
    %257 = vector.multi_reduction <add>, %256, %cst_80 [1] : vector<64x64xf32> to vector<64xf32>
    %258 = vector.shape_cast %257 : vector<64xf32> to vector<64x1xf32>
    %259 = tpu.reciprocal %258 {approx = true} : vector<64x1xf32> -> vector<64x1xf32>
    %260 = vector.broadcast %259 : vector<64x1xf32> to vector<64x64xf32>
    %261 = arith.mulf %256, %260 : vector<64x64xf32>
    %262 = arith.truncf %261 : vector<64x64xf32> to vector<64x64xbf16>
    %263 = vector.extract_strided_slice %228 {offsets = [0, 32], sizes = [64, 32], strides = [1, 1]} : vector<64x128xbf16> to vector<64x32xbf16>
    %cst_81 = arith.constant dense<0.000000e+00> : vector<64x32xf32>
    %264 = tpu.matmul %262, %263, %cst_81 {dimension_numbers = #tpu.dot_dimension_numbers<[1], [0], [0], [1], [0, 0, 1, 1], [], []>} : vector<64x64xbf16>, vector<64x32xbf16>, vector<64x32xf32> -> vector<64x32xf32>
    %265 = arith.truncf %264 : vector<64x32xf32> to vector<64x32xbf16>
    %c0_82 = arith.constant 0 : index
    %c32_83 = arith.constant 32 : index
    %266 = vector.load %arg15[%c0_82, %c32_83] : memref<64x128xbf16, #tpu.memory_space<vmem>>, vector<64x32xbf16>
    tpu.vector_store %arg15[%c0_82, %c32_83], %265 {strides = array<i32>} : memref<64x128xbf16, #tpu.memory_space<vmem>>, vector<64x32xbf16>,
    %267 = vector.extract_strided_slice %218 {offsets = [0, 64], sizes = [64, 32], strides = [1, 1]} : vector<64x128xbf16> to vector<64x32xbf16>
    %268 = vector.extract_strided_slice %223 {offsets = [0, 64], sizes = [64, 32], strides = [1, 1]} : vector<64x128xbf16> to vector<64x32xbf16>
    %cst_84 = arith.constant dense<0.000000e+00> : vector<64x64xf32>
    %269 = tpu.matmul %267, %268, %cst_84 {dimension_numbers = #tpu.dot_dimension_numbers<[1], [1], [0], [0], [0, 0, 1, 0], [], []>} : vector<64x32xbf16>, vector<64x32xbf16>, vector<64x64xf32> -> vector<64x64xf32>
    %270 = arith.addf %269, %29 : vector<64x64xf32>
    %cst_85 = arith.constant dense<0xFF800000> : vector<64xf32>
    %271 = vector.multi_reduction <maximumf>, %270, %cst_85 [1] : vector<64x64xf32> to vector<64xf32>
    %272 = vector.shape_cast %271 : vector<64xf32> to vector<64x1xf32>
    %273 = vector.broadcast %272 : vector<64x1xf32> to vector<64x64xf32>
    %274 = arith.subf %270, %273 : vector<64x64xf32>
    %275 = math.exp %274 : vector<64x64xf32>
    %cst_86 = arith.constant dense<0.000000e+00> : vector<64xf32>
    %276 = vector.multi_reduction <add>, %275, %cst_86 [1] : vector<64x64xf32> to vector<64xf32>
    %277 = vector.shape_cast %276 : vector<64xf32> to vector<64x1xf32>
    %278 = tpu.reciprocal %277 {approx = true} : vector<64x1xf32> -> vector<64x1xf32>
    %279 = vector.broadcast %278 : vector<64x1xf32> to vector<64x64xf32>
    %280 = arith.mulf %275, %279 : vector<64x64xf32>
    %281 = arith.truncf %280 : vector<64x64xf32> to vector<64x64xbf16>
    %282 = vector.extract_strided_slice %228 {offsets = [0, 64], sizes = [64, 32], strides = [1, 1]} : vector<64x128xbf16> to vector<64x32xbf16>
    %cst_87 = arith.constant dense<0.000000e+00> : vector<64x32xf32>
    %283 = tpu.matmul %281, %282, %cst_87 {dimension_numbers = #tpu.dot_dimension_numbers<[1], [0], [0], [1], [0, 0, 1, 1], [], []>} : vector<64x64xbf16>, vector<64x32xbf16>, vector<64x32xf32> -> vector<64x32xf32>
    %284 = arith.truncf %283 : vector<64x32xf32> to vector<64x32xbf16>
    %c0_88 = arith.constant 0 : index
    %c64_89 = arith.constant 64 : index
    %285 = vector.load %arg15[%c0_88, %c64_89] : memref<64x128xbf16, #tpu.memory_space<vmem>>, vector<64x32xbf16>
    tpu.vector_store %arg15[%c0_88, %c64_89], %284 {strides = array<i32>} : memref<64x128xbf16, #tpu.memory_space<vmem>>, vector<64x32xbf16>,
    %286 = vector.extract_strided_slice %218 {offsets = [0, 96], sizes = [64, 32], strides = [1, 1]} : vector<64x128xbf16> to vector<64x32xbf16>
    %287 = vector.extract_strided_slice %223 {offsets = [0, 96], sizes = [64, 32], strides = [1, 1]} : vector<64x128xbf16> to vector<64x32xbf16>
    %cst_90 = arith.constant dense<0.000000e+00> : vector<64x64xf32>
    %288 = tpu.matmul %286, %287, %cst_90 {dimension_numbers = #tpu.dot_dimension_numbers<[1], [1], [0], [0], [0, 0, 1, 0], [], []>} : vector<64x32xbf16>, vector<64x32xbf16>, vector<64x64xf32> -> vector<64x64xf32>
    %289 = arith.addf %288, %29 : vector<64x64xf32>
    %cst_91 = arith.constant dense<0xFF800000> : vector<64xf32>
    %290 = vector.multi_reduction <maximumf>, %289, %cst_91 [1] : vector<64x64xf32> to vector<64xf32>
    %291 = vector.shape_cast %290 : vector<64xf32> to vector<64x1xf32>
    %292 = vector.broadcast %291 : vector<64x1xf32> to vector<64x64xf32>
    %293 = arith.subf %289, %292 : vector<64x64xf32>
    %294 = math.exp %293 : vector<64x64xf32>
    %cst_92 = arith.constant dense<0.000000e+00> : vector<64xf32>
    %295 = vector.multi_reduction <add>, %294, %cst_92 [1] : vector<64x64xf32> to vector<64xf32>
    %296 = vector.shape_cast %295 : vector<64xf32> to vector<64x1xf32>
    %297 = tpu.reciprocal %296 {approx = true} : vector<64x1xf32> -> vector<64x1xf32>
    %298 = vector.broadcast %297 : vector<64x1xf32> to vector<64x64xf32>
    %299 = arith.mulf %294, %298 : vector<64x64xf32>
    %300 = arith.truncf %299 : vector<64x64xf32> to vector<64x64xbf16>
    %301 = vector.extract_strided_slice %228 {offsets = [0, 96], sizes = [64, 32], strides = [1, 1]} : vector<64x128xbf16> to vector<64x32xbf16>
    %cst_93 = arith.constant dense<0.000000e+00> : vector<64x32xf32>
    %302 = tpu.matmul %300, %301, %cst_93 {dimension_numbers = #tpu.dot_dimension_numbers<[1], [0], [0], [1], [0, 0, 1, 1], [], []>} : vector<64x64xbf16>, vector<64x32xbf16>, vector<64x32xf32> -> vector<64x32xf32>
    %303 = arith.truncf %302 : vector<64x32xf32> to vector<64x32xbf16>
    %c0_94 = arith.constant 0 : index
    %c96_95 = arith.constant 96 : index
    %304 = vector.load %arg15[%c0_94, %c96_95] : memref<64x128xbf16, #tpu.memory_space<vmem>>, vector<64x32xbf16>
    tpu.vector_store %arg15[%c0_94, %c96_95], %303 {strides = array<i32>} : memref<64x128xbf16, #tpu.memory_space<vmem>>, vector<64x32xbf16>,
    %c0_96 = arith.constant 0 : index
    %c0_97 = arith.constant 0 : index
    %305 = vector.load %arg15[%c0_96, %c0_97] : memref<64x128xbf16, #tpu.memory_space<vmem>>, vector<64x128xbf16>
    %c1_98 = arith.constant 1 : index
    %c0_99 = arith.constant 0 : index
    %c0_100 = arith.constant 0 : index
    %306 = vector.load %arg5[%c1_98, %c0_99, %c0_100] : memref<2x128x128xbf16, #tpu.memory_space<vmem>>, vector<1x128x128xbf16>
    %307 = vector.shape_cast %306 : vector<1x128x128xbf16> to vector<128x128xbf16>
    %cst_101 = arith.constant dense<0.000000e+00> : vector<64x128xf32>
    %308 = tpu.matmul %305, %307, %cst_101 {dimension_numbers = #tpu.dot_dimension_numbers<[1], [0], [0], [1], [0, 0, 1, 1], [], []>} : vector<64x128xbf16>, vector<128x128xbf16>, vector<64x128xf32> -> vector<64x128xf32>
    %309 = vector.extract_strided_slice %209 {offsets = [3, 0], sizes = [1, 128], strides = [1, 1]} : vector<9x128xf32> to vector<1x128xf32>
    %310 = vector.broadcast %309 : vector<1x128xf32> to vector<64x128xf32>
    %311 = arith.addf %308, %310 : vector<64x128xf32>
    %312 = arith.addf %207, %311 : vector<64x128xf32>
    %313 = vector.extract_strided_slice %209 {offsets = [4, 0], sizes = [1, 128], strides = [1, 1]} : vector<9x128xf32> to vector<1x128xf32>
    %314 = vector.extract_strided_slice %209 {offsets = [5, 0], sizes = [1, 128], strides = [1, 1]} : vector<9x128xf32> to vector<1x128xf32>
    %cst_102 = arith.constant dense<0.000000e+00> : vector<64xf32>
    %315 = vector.multi_reduction <add>, %312, %cst_102 [1] : vector<64x128xf32> to vector<64xf32>
    %316 = vector.shape_cast %315 : vector<64xf32> to vector<64x1xf32>
    %cst_103 = arith.constant 1.280000e+02 : f32
    %317 = vector.broadcast %cst_103 : f32 to vector<64x1xf32>
    %318 = arith.divf %316, %317 : vector<64x1xf32>
    %319 = vector.broadcast %318 : vector<64x1xf32> to vector<64x128xf32>
    %320 = arith.subf %312, %319 : vector<64x128xf32>
    %321 = arith.mulf %320, %320 : vector<64x128xf32>
    %cst_104 = arith.constant dense<0.000000e+00> : vector<64xf32>
    %322 = vector.multi_reduction <add>, %321, %cst_104 [1] : vector<64x128xf32> to vector<64xf32>
    %323 = vector.shape_cast %322 : vector<64xf32> to vector<64x1xf32>
    %cst_105 = arith.constant 1.280000e+02 : f32
    %324 = vector.broadcast %cst_105 : f32 to vector<64x1xf32>
    %325 = arith.divf %323, %324 : vector<64x1xf32>
    %cst_106 = arith.constant 9.99999974E-6 : f32
    %326 = vector.broadcast %cst_106 : f32 to vector<64x1xf32>
    %327 = arith.addf %325, %326 : vector<64x1xf32>
    %328 = math.rsqrt %327 : vector<64x1xf32>
    %329 = vector.broadcast %328 : vector<64x1xf32> to vector<64x128xf32>
    %330 = arith.mulf %320, %329 : vector<64x128xf32>
    %331 = vector.broadcast %313 : vector<1x128xf32> to vector<64x128xf32>
    %332 = arith.mulf %330, %331 : vector<64x128xf32>
    %333 = vector.broadcast %314 : vector<1x128xf32> to vector<64x128xf32>
    %334 = arith.addf %332, %333 : vector<64x128xf32>
    %335 = arith.truncf %334 : vector<64x128xf32> to vector<64x128xbf16>
    %c1_107 = arith.constant 1 : index
    %c0_108 = arith.constant 0 : index
    %c0_109 = arith.constant 0 : index
    %336 = vector.load %arg6[%c1_107, %c0_108, %c0_109] : memref<2x128x256xbf16, #tpu.memory_space<vmem>>, vector<1x128x256xbf16>
    %337 = vector.shape_cast %336 : vector<1x128x256xbf16> to vector<128x256xbf16>
    %cst_110 = arith.constant dense<0.000000e+00> : vector<64x256xf32>
    %338 = tpu.matmul %335, %337, %cst_110 {dimension_numbers = #tpu.dot_dimension_numbers<[1], [0], [0], [1], [0, 0, 1, 1], [], []>} : vector<64x128xbf16>, vector<128x256xbf16>, vector<64x256xf32> -> vector<64x256xf32>
    %c1_111 = arith.constant 1 : index
    %c0_112 = arith.constant 0 : index
    %c0_113 = arith.constant 0 : index
    %339 = vector.load %arg9[%c1_111, %c0_112, %c0_113] : memref<2x1x256xf32, #tpu.memory_space<vmem>>, vector<1x1x256xf32>
    %340 = vector.shape_cast %339 : vector<1x1x256xf32> to vector<1x256xf32>
    %341 = vector.broadcast %340 : vector<1x256xf32> to vector<64x256xf32>
    %342 = arith.addf %338, %341 : vector<64x256xf32>
    %cst_114 = arith.constant 5.000000e-01 : f32
    %343 = vector.broadcast %cst_114 : f32 to vector<64x256xf32>
    %344 = arith.mulf %343, %342 : vector<64x256xf32>
    %cst_115 = arith.constant 4.471500e-02 : f32
    %345 = vector.broadcast %cst_115 : f32 to vector<64x256xf32>
    %346 = arith.mulf %345, %342 : vector<64x256xf32>
    %347 = arith.mulf %346, %342 : vector<64x256xf32>
    %348 = arith.mulf %347, %342 : vector<64x256xf32>
    %349 = arith.addf %342, %348 : vector<64x256xf32>
    %cst_116 = arith.constant 0.797884583 : f32
    %350 = vector.broadcast %cst_116 : f32 to vector<64x256xf32>
    %351 = arith.mulf %350, %349 : vector<64x256xf32>
    %352 = math.tanh %351 : vector<64x256xf32>
    %cst_117 = arith.constant 1.000000e+00 : f32
    %353 = vector.broadcast %cst_117 : f32 to vector<64x256xf32>
    %354 = arith.addf %353, %352 : vector<64x256xf32>
    %355 = arith.mulf %344, %354 : vector<64x256xf32>
    %356 = arith.truncf %355 : vector<64x256xf32> to vector<64x256xbf16>
    %c1_118 = arith.constant 1 : index
    %c0_119 = arith.constant 0 : index
    %c0_120 = arith.constant 0 : index
    %357 = vector.load %arg7[%c1_118, %c0_119, %c0_120] : memref<2x256x128xbf16, #tpu.memory_space<vmem>>, vector<1x256x128xbf16>
    %358 = vector.shape_cast %357 : vector<1x256x128xbf16> to vector<256x128xbf16>
    %cst_121 = arith.constant dense<0.000000e+00> : vector<64x128xf32>
    %359 = tpu.matmul %356, %358, %cst_121 {dimension_numbers = #tpu.dot_dimension_numbers<[1], [0], [0], [1], [0, 0, 1, 1], [], []>} : vector<64x256xbf16>, vector<256x128xbf16>, vector<64x128xf32> -> vector<64x128xf32>
    %360 = vector.extract_strided_slice %209 {offsets = [6, 0], sizes = [1, 128], strides = [1, 1]} : vector<9x128xf32> to vector<1x128xf32>
    %361 = vector.broadcast %360 : vector<1x128xf32> to vector<64x128xf32>
    %362 = arith.addf %359, %361 : vector<64x128xf32>
    %363 = arith.addf %334, %362 : vector<64x128xf32>
    %364 = vector.extract_strided_slice %209 {offsets = [7, 0], sizes = [1, 128], strides = [1, 1]} : vector<9x128xf32> to vector<1x128xf32>
    %365 = vector.extract_strided_slice %209 {offsets = [8, 0], sizes = [1, 128], strides = [1, 1]} : vector<9x128xf32> to vector<1x128xf32>
    %cst_122 = arith.constant dense<0.000000e+00> : vector<64xf32>
    %366 = vector.multi_reduction <add>, %363, %cst_122 [1] : vector<64x128xf32> to vector<64xf32>
    %367 = vector.shape_cast %366 : vector<64xf32> to vector<64x1xf32>
    %cst_123 = arith.constant 1.280000e+02 : f32
    %368 = vector.broadcast %cst_123 : f32 to vector<64x1xf32>
    %369 = arith.divf %367, %368 : vector<64x1xf32>
    %370 = vector.broadcast %369 : vector<64x1xf32> to vector<64x128xf32>
    %371 = arith.subf %363, %370 : vector<64x128xf32>
    %372 = arith.mulf %371, %371 : vector<64x128xf32>
    %cst_124 = arith.constant dense<0.000000e+00> : vector<64xf32>
    %373 = vector.multi_reduction <add>, %372, %cst_124 [1] : vector<64x128xf32> to vector<64xf32>
    %374 = vector.shape_cast %373 : vector<64xf32> to vector<64x1xf32>
    %cst_125 = arith.constant 1.280000e+02 : f32
    %375 = vector.broadcast %cst_125 : f32 to vector<64x1xf32>
    %376 = arith.divf %374, %375 : vector<64x1xf32>
    %cst_126 = arith.constant 9.99999974E-6 : f32
    %377 = vector.broadcast %cst_126 : f32 to vector<64x1xf32>
    %378 = arith.addf %376, %377 : vector<64x1xf32>
    %379 = math.rsqrt %378 : vector<64x1xf32>
    %380 = vector.broadcast %379 : vector<64x1xf32> to vector<64x128xf32>
    %381 = arith.mulf %371, %380 : vector<64x128xf32>
    %382 = vector.broadcast %364 : vector<1x128xf32> to vector<64x128xf32>
    %383 = arith.mulf %381, %382 : vector<64x128xf32>
    %384 = vector.broadcast %365 : vector<1x128xf32> to vector<64x128xf32>
    %385 = arith.addf %383, %384 : vector<64x128xf32>
    %386 = tpu.iota {dimensions = array<i32: 0>} : vector<8x64xi32>
    %387 = tpu.iota {dimensions = array<i32: 1>} : vector<8x64xi32>
    %c0_i32 = arith.constant 0 : i32
    %388 = vector.broadcast %c0_i32 : i32 to vector<8x64xi32>
    %389 = arith.cmpi eq, %386, %388 : vector<8x64xi32>
    %c42_i32_127 = arith.constant 42 : i32
    %390 = vector.broadcast %c42_i32_127 : i32 to vector<8x64xi32>
    %391 = arith.cmpi slt, %387, %390 : vector<8x64xi32>
    %392 = arith.andi %389, %391 : vector<8x64xi1>
    %cst_128 = arith.constant 0.0238095243 : f32
    %cst_129 = arith.constant 0.000000e+00 : f32
    %393 = vector.broadcast %cst_128 : f32 to vector<8x64xf32>
    %394 = vector.broadcast %cst_129 : f32 to vector<8x64xf32>
    %395 = arith.select %392, %393, %394 : vector<8x64xi1>, vector<8x64xf32>
    %cst_130 = arith.constant dense<0.000000e+00> : vector<8x128xf32>
    %396 = tpu.matmul %395, %385, %cst_130 {dimension_numbers = #tpu.dot_dimension_numbers<[1], [0], [0], [1], [0, 0, 1, 1], [], []>} : vector<8x64xf32>, vector<64x128xf32>, vector<8x128xf32> -> vector<8x128xf32>
    %397 = arith.truncf %396 : vector<8x128xf32> to vector<8x128xbf16>
    %c0_131 = arith.constant 0 : index
    %c0_132 = arith.constant 0 : index
    %398 = vector.load %arg10[%c0_131, %c0_132] : memref<128x512xbf16, #tpu.memory_space<vmem>>, vector<128x512xbf16>
    %cst_133 = arith.constant dense<0.000000e+00> : vector<8x512xf32>
    %399 = tpu.matmul %397, %398, %cst_133 {dimension_numbers = #tpu.dot_dimension_numbers<[1], [0], [0], [1], [0, 0, 1, 1], [], []>} : vector<8x128xbf16>, vector<128x512xbf16>, vector<8x512xf32> -> vector<8x512xf32>
    %c0_134 = arith.constant 0 : index
    %c0_135 = arith.constant 0 : index
    %400 = vector.load %arg11[%c0_134, %c0_135] : memref<1x512xf32, #tpu.memory_space<vmem>>, vector<1x512xf32>
    %401 = vector.broadcast %400 : vector<1x512xf32> to vector<8x512xf32>
    %402 = arith.addf %399, %401 : vector<8x512xf32>
    %cst_136 = arith.constant 0.000000e+00 : f32
    %403 = vector.broadcast %cst_136 : f32 to vector<8x512xf32>
    %404 = arith.maximumf %402, %403 : vector<8x512xf32>
    %405 = arith.truncf %404 : vector<8x512xf32> to vector<8x512xbf16>
    %c0_137 = arith.constant 0 : index
    %c0_138 = arith.constant 0 : index
    %406 = vector.load %arg12[%c0_137, %c0_138] : memref<512x128xbf16, #tpu.memory_space<vmem>>, vector<512x128xbf16>
    %cst_139 = arith.constant dense<0.000000e+00> : vector<8x128xf32>
    %407 = tpu.matmul %405, %406, %cst_139 {dimension_numbers = #tpu.dot_dimension_numbers<[1], [0], [0], [1], [0, 0, 1, 1], [], []>} : vector<8x512xbf16>, vector<512x128xbf16>, vector<8x128xf32> -> vector<8x128xf32>
    %c0_140 = arith.constant 0 : index
    %c0_141 = arith.constant 0 : index
    %408 = vector.load %arg13[%c0_140, %c0_141] : memref<1x128xf32, #tpu.memory_space<vmem>>, vector<1x128xf32>
    %409 = vector.broadcast %408 : vector<1x128xf32> to vector<8x128xf32>
    %410 = arith.addf %407, %409 : vector<8x128xf32>
    %411 = tpu.iota {dimensions = array<i32: 1>} : vector<8x128xi32>
    %c7_i32 = arith.constant 7 : i32
    %412 = vector.broadcast %c7_i32 : i32 to vector<8x128xi32>
    %413 = arith.cmpi eq, %411, %412 : vector<8x128xi32>
    %414 = math.tanh %410 : vector<8x128xf32>
    %415 = arith.select %413, %414, %410 : vector<8x128xi1>, vector<8x128xf32>
    %c0_142 = arith.constant 0 : index
    %c0_143 = arith.constant 0 : index
    %c0_144 = arith.constant 0 : index
    %416 = vector.load %arg14[%c0_142, %c0_143, %c0_144] : memref<1x8x128xf32, #tpu.memory_space<vmem>>, vector<1x8x128xf32>
    %417 = vector.shape_cast %416 : vector<1x8x128xf32> to vector<8x128xf32>
    %418 = vector.shape_cast %415 : vector<8x128xf32> to vector<1x8x128xf32>
    tpu.vector_store %arg14[%c0_142, %c0_143, %c0_144], %418 {strides = array<i32>} : memref<1x8x128xf32, #tpu.memory_space<vmem>>, vector<1x8x128xf32>,
    return
  }
  func.func @transform_0(%arg0: i32) -> (i32, i32, i32) {
    %c0_i32 = arith.constant 0 : i32
    %c0_i32_0 = arith.constant 0 : i32
    %c0_i32_1 = arith.constant 0 : i32
    return %arg0, %c0_i32, %c0_i32_0 : i32, i32, i32
  }
  func.func @transform_1(%arg0: i32) -> (i32, i32) {
    %c0_i32 = arith.constant 0 : i32
    %c0_i32_0 = arith.constant 0 : i32
    %c0_i32_1 = arith.constant 0 : i32
    return %c0_i32, %c0_i32_0 : i32, i32
  }
  func.func @transform_2(%arg0: i32) -> (i32, i32) {
    %c0_i32 = arith.constant 0 : i32
    %c0_i32_0 = arith.constant 0 : i32
    %c0_i32_1 = arith.constant 0 : i32
    return %c0_i32, %c0_i32_0 : i32, i32
  }
  func.func @transform_3(%arg0: i32) -> (i32, i32, i32) {
    %c0_i32 = arith.constant 0 : i32
    %c0_i32_0 = arith.constant 0 : i32
    %c0_i32_1 = arith.constant 0 : i32
    %c0_i32_2 = arith.constant 0 : i32
    return %c0_i32, %c0_i32_0, %c0_i32_1 : i32, i32, i32
  }
  func.func @transform_4(%arg0: i32) -> (i32, i32, i32) {
    %c0_i32 = arith.constant 0 : i32
    %c0_i32_0 = arith.constant 0 : i32
    %c0_i32_1 = arith.constant 0 : i32
    %c0_i32_2 = arith.constant 0 : i32
    return %c0_i32, %c0_i32_0, %c0_i32_1 : i32, i32, i32
  }
  func.func @transform_5(%arg0: i32) -> (i32, i32, i32) {
    %c0_i32 = arith.constant 0 : i32
    %c0_i32_0 = arith.constant 0 : i32
    %c0_i32_1 = arith.constant 0 : i32
    %c0_i32_2 = arith.constant 0 : i32
    return %c0_i32, %c0_i32_0, %c0_i32_1 : i32, i32, i32
  }
  func.func @transform_6(%arg0: i32) -> (i32, i32, i32) {
    %c0_i32 = arith.constant 0 : i32
    %c0_i32_0 = arith.constant 0 : i32
    %c0_i32_1 = arith.constant 0 : i32
    %c0_i32_2 = arith.constant 0 : i32
    return %c0_i32, %c0_i32_0, %c0_i32_1 : i32, i32, i32
  }
  func.func @transform_7(%arg0: i32) -> (i32, i32, i32) {
    %c0_i32 = arith.constant 0 : i32
    %c0_i32_0 = arith.constant 0 : i32
    %c0_i32_1 = arith.constant 0 : i32
    %c0_i32_2 = arith.constant 0 : i32
    return %c0_i32, %c0_i32_0, %c0_i32_1 : i32, i32, i32
  }
  func.func @transform_8(%arg0: i32) -> (i32, i32, i32) {
    %c0_i32 = arith.constant 0 : i32
    %c0_i32_0 = arith.constant 0 : i32
    %c0_i32_1 = arith.constant 0 : i32
    %c0_i32_2 = arith.constant 0 : i32
    return %c0_i32, %c0_i32_0, %c0_i32_1 : i32, i32, i32
  }
  func.func @transform_9(%arg0: i32) -> (i32, i32) {
    %c0_i32 = arith.constant 0 : i32
    %c0_i32_0 = arith.constant 0 : i32
    %c0_i32_1 = arith.constant 0 : i32
    return %c0_i32, %c0_i32_0 : i32, i32
  }
  func.func @transform_10(%arg0: i32) -> (i32, i32) {
    %c0_i32 = arith.constant 0 : i32
    %c0_i32_0 = arith.constant 0 : i32
    %c0_i32_1 = arith.constant 0 : i32
    return %c0_i32, %c0_i32_0 : i32, i32
  }
  func.func @transform_11(%arg0: i32) -> (i32, i32) {
    %c0_i32 = arith.constant 0 : i32
    %c0_i32_0 = arith.constant 0 : i32
    %c0_i32_1 = arith.constant 0 : i32
    return %c0_i32, %c0_i32_0 : i32, i32
  }
  func.func @transform_12(%arg0: i32) -> (i32, i32) {
    %c0_i32 = arith.constant 0 : i32
    %c0_i32_0 = arith.constant 0 : i32
    %c0_i32_1 = arith.constant 0 : i32
    return %c0_i32, %c0_i32_0 : i32, i32
  }
  func.func @transform_13(%arg0: i32) -> (i32, i32, i32) {
    %c0_i32 = arith.constant 0 : i32
    %c0_i32_0 = arith.constant 0 : i32
    %c0_i32_1 = arith.constant 0 : i32
    return %arg0, %c0_i32, %c0_i32_0 : i32, i32, i32
  }
}

</mosaic_0001>

<llo_original>
// kernel: forward.1
$region0: #{forward.1}
  #allocation0 [shape = 'u32[]', space=smem, size = 0x4, offset = 0x4, fixed_abs, tag = 'smem constant byte address 0x4 - core index']
  #allocation1 [shape = 'u32[72,128]{1,0:T(1,128)}', space=vmem, size = 0x9000, scoped, tag = 'internal scratch']
  #allocation2 [shape = 'bf16[64,128]{1,0:T(8,128)(2,1)}', space=vmem, size = 0x4000, scoped, tag = 'scratch operand']
  %s0 = inlined_call_operand.vmem [shape: s32[2,64,1], index: 0, kind: input, shape index: {}]
  %s1 = inlined_call_operand.vmem [shape: f32[3,128], index: 1, kind: input, shape index: {}]
  %s2 = inlined_call_operand.hbm [shape: f32[64,128], index: 2, kind: input, shape index: {}]
  %s3 = inlined_call_operand.hbm [shape: bf16[2,128,384], index: 3, kind: input, shape index: {}]
  %s4 = inlined_call_operand.vmem [shape: bf16[2,128,128], index: 4, kind: input, shape index: {}]
  %s5 = inlined_call_operand.hbm [shape: bf16[2,128,256], index: 5, kind: input, shape index: {}]
  %s6 = inlined_call_operand.hbm [shape: bf16[2,256,128], index: 6, kind: input, shape index: {}]
  %s7 = inlined_call_operand.vmem [shape: f32[2,9,128], index: 7, kind: input, shape index: {}]
  %s8 = inlined_call_operand.vmem [shape: f32[2,1,256], index: 8, kind: input, shape index: {}]
  %s9 = inlined_call_operand.hbm [shape: bf16[128,512], index: 9, kind: input, shape index: {}]
  %s10 = inlined_call_operand.vmem [shape: f32[1,512], index: 10, kind: input, shape index: {}]
  %s11 = inlined_call_operand.hbm [shape: bf16[512,128], index: 11, kind: input, shape index: {}]
  %s12 = inlined_call_operand.vmem [shape: f32[1,128], index: 12, kind: input, shape index: {}]
  %s13 = inlined_call_operand.vmem [shape: f32[2,8,128], index: 13, kind: output, shape index: {}]
  %s14 = sld [smem:[#allocation0]]
  $region109: #{forward.1} parent=0
    _
  %s16 = ssub.s32 1, %s14
  %s17 = scalar_select 0, %s16, %s14
  $region1: #{forward.1} parent=0
    #allocation3 [shape = 'u8[32768]{0}', space=vmem, size = 0x8000, scoped, tag = 'input window, operand 2, single buffered']
    #allocation4 [shape = 's32[2]{0}', space=sflag, size = 0x8, scoped, tag = 'scoped memory for forward.1']
    #allocation5 [shape = 'u8[196608]{0}', space=vmem, size = 0x30000, scoped, tag = 'input window, operand 3, single buffered']
    #allocation6 [shape = 's32[1]{0}', space=sflag, size = 0x4, scoped, tag = 'scoped memory for forward.1']
    #allocation7 [shape = 'u8[131072]{0}', space=vmem, size = 0x20000, scoped, tag = 'input window, operand 5, single buffered']
    #allocation8 [shape = 'u8[131072]{0}', space=vmem, size = 0x20000, scoped, tag = 'input window, operand 6, single buffered']
    #allocation9 [shape = 's32[1]{0}', space=sflag, size = 0x4, scoped, tag = 'scoped memory for forward.1']
    #allocation10 [shape = 'u8[131072]{0}', space=vmem, size = 0x20000, scoped, tag = 'input window, operand 9, single buffered']
    #allocation11 [shape = 'u8[131072]{0}', space=vmem, size = 0x20000, scoped, tag = 'input window, operand 11, single buffered']
    #allocation12 [shape = 's32[1]{0}', space=sflag, size = 0x4, scoped, tag = 'scoped memory for forward.1']
    %18 = vsyncpa [#allocation4], 0
    %19 = vsyncpa [#allocation6], 0
    %20 = vsyncpa [#allocation9], 0
    %21 = vsyncpa [#allocation12], 0
    loop: start=0, step=1, limit=4
    $region2: #{forward.1} parent=1 // loop_pre_header
      _
    $region3: #{forward.1} parent=1 // loop_header
      %s23 = sphi 0, %s27
      %p24 = scmp.ge.s32.totalorder %s23, 4
      %s33 = sphi 0, %s35
      %s36 = sphi 0, %s33
      %s37 = sphi 0, %s36
      %s53 = sphi 0, %s37
      %s57 = sphi 0, %s57
      %s59 = sphi 0, %s57
      %s60 = sphi 0, %s59
      %s74 = sphi 0, %s60
      %s78 = sphi 0, %s78
      %s80 = sphi 0, %s78
      %s81 = sphi 0, %s80
      %s95 = sphi 0, %s81
      %s99 = sphi 0, %s99
      %s101 = sphi 0, %s99
      %s102 = sphi 0, %s101
      %s116 = sphi 0, %s102
      %s120 = sphi 0, %s120
      %s122 = sphi 0, %s120
      %s123 = sphi 0, %s122
      %s137 = sphi 0, %s123
      %s141 = sphi 0, %s141
      %s143 = sphi 0, %s141
      %s144 = sphi 0, %s143
      %s158 = sphi 0, %s144
      %s162 = sphi 0, %s162
      %s164 = sphi 0, %s162
      %s165 = sphi 0, %s164
      %s179 = sphi 0, %s165
      %s183 = sphi 0, %s183
      %s185 = sphi 0, %s183
      %s186 = sphi 0, %s185
      %s200 = sphi 0, %s186
      %s204 = sphi 0, %s204
      %s206 = sphi 0, %s204
      %s207 = sphi 0, %s206
      %s221 = sphi 0, %s207
      %s225 = sphi 0, %s225
      %s227 = sphi 0, %s225
      %s228 = sphi 0, %s227
      %s242 = sphi 0, %s228
      %s246 = sphi 0, %s246
      %s248 = sphi 0, %s246
      %s249 = sphi 0, %s248
      %s263 = sphi 0, %s249
      %s267 = sphi 0, %s267
      %s269 = sphi 0, %s267
      %s270 = sphi 0, %s269
      %s284 = sphi 0, %s270
      %s288 = sphi 0, %s288
      %s290 = sphi 0, %s288
      %s291 = sphi 0, %s290
      %s305 = sphi 0, %s291
      %s311 = sphi 0, %s313
      %s314 = sphi 0, %s311
      %s315 = sphi 0, %s314
      %s331 = sphi 0, %s315
    $region4: #{forward.1} parent=1 // loop_header_branch
      %26 = sbr.rel (%p24) target = $region8
    $region5: #{forward.1} parent=1 // loop_body
      %s28 = ssub.s32 %s23, 1
      %s29 = ssub.s32 %s23, 2
      %s30 = sadd.s32 %s23, 1
      %s31 = ssub.s32 %s23, %s30
      %p32 = scmp.eq.s32.totalorder %s31, 0
      %s34 = sadd.s32 %s33, 1
      %s35 = scalar_select %p32, %s33, %s34
      %p38 = pneg %p32
      %p39 = scmp.eq.s32.totalorder %s23, 1
      %p40 = por %p38, %p39
      %p41 = scmp.ne.s32.totalorder %s33, %s36
      %p42 = scmp.eq.s32.totalorder %s23, 0
      %p43 = por %p41, %p42
      %p44 = scmp.ne.s32.totalorder %s33, %s36
      %p45 = scmp.eq.s32.totalorder %s28, 1
      %p46 = por %p44, %p45
      %p47 = scmp.ne.s32.totalorder %s36, %s37
      %p48 = scmp.eq.s32.totalorder %s28, 0
      %p49 = por %p47, %p48
      %p50 = scmp.ne.s32.totalorder %s36, %s37
      %p51 = scmp.eq.s32.totalorder %s29, 1
      %p52 = por %p50, %p51
      %p54 = scmp.ne.s32.totalorder %s37, %s53
      %p55 = scmp.eq.s32.totalorder %s29, 0
      %p56 = por %p54, %p55
      %s58 = sadd.s32 %s57, 1
      %p61 = scmp.eq.s32.totalorder %s23, 1
      %p62 = scmp.ne.s32.totalorder %s57, %s59
      %p63 = scmp.eq.s32.totalorder %s23, 0
      %p64 = por %p62, %p63
      %p65 = scmp.ne.s32.totalorder %s57, %s59
      %p66 = scmp.eq.s32.totalorder %s28, 1
      %p67 = por %p65, %p66
      %p68 = scmp.ne.s32.totalorder %s59, %s60
      %p69 = scmp.eq.s32.totalorder %s28, 0
      %p70 = por %p68, %p69
      %p71 = scmp.ne.s32.totalorder %s59, %s60
      %p72 = scmp.eq.s32.totalorder %s29, 1
      %p73 = por %p71, %p72
      %p75 = scmp.ne.s32.totalorder %s60, %s74
      %p76 = scmp.eq.s32.totalorder %s29, 0
      %p77 = por %p75, %p76
      %s79 = sadd.s32 %s78, 1
      %p82 = scmp.eq.s32.totalorder %s23, 1
      %p83 = scmp.ne.s32.totalorder %s78, %s80
      %p84 = scmp.eq.s32.totalorder %s23, 0
      %p85 = por %p83, %p84
      %p86 = scmp.ne.s32.totalorder %s78, %s80
      %p87 = scmp.eq.s32.totalorder %s28, 1
      %p88 = por %p86, %p87
      %p89 = scmp.ne.s32.totalorder %s80, %s81
      %p90 = scmp.eq.s32.totalorder %s28, 0
      %p91 = por %p89, %p90
      %p92 = scmp.ne.s32.totalorder %s80, %s81
      %p93 = scmp.eq.s32.totalorder %s29, 1
      %p94 = por %p92, %p93
      %p96 = scmp.ne.s32.totalorder %s81, %s95
      %p97 = scmp.eq.s32.totalorder %s29, 0
      %p98 = por %p96, %p97
      %s100 = sadd.s32 %s99, 1
      %p103 = scmp.eq.s32.totalorder %s23, 1
      %p104 = scmp.ne.s32.totalorder %s99, %s101
      %p105 = scmp.eq.s32.totalorder %s23, 0
      %p106 = por %p104, %p105
      %p107 = scmp.ne.s32.totalorder %s99, %s101
      %p108 = scmp.eq.s32.totalorder %s28, 1
      %p109 = por %p107, %p108
      %p110 = scmp.ne.s32.totalorder %s101, %s102
      %p111 = scmp.eq.s32.totalorder %s28, 0
      %p112 = por %p110, %p111
      %p113 = scmp.ne.s32.totalorder %s101, %s102
      %p114 = scmp.eq.s32.totalorder %s29, 1
      %p115 = por %p113, %p114
      %p117 = scmp.ne.s32.totalorder %s102, %s116
      %p118 = scmp.eq.s32.totalorder %s29, 0
      %p119 = por %p117, %p118
      %s121 = sadd.s32 %s120, 1
      %p124 = scmp.eq.s32.totalorder %s23, 1
      %p125 = scmp.ne.s32.totalorder %s120, %s122
      %p126 = scmp.eq.s32.totalorder %s23, 0
      %p127 = por %p125, %p126
      %p128 = scmp.ne.s32.totalorder %s120, %s122
      %p129 = scmp.eq.s32.totalorder %s28, 1
      %p130 = por %p128, %p129
      %p131 = scmp.ne.s32.totalorder %s122, %s123
      %p132 = scmp.eq.s32.totalorder %s28, 0
      %p133 = por %p131, %p132
      %p134 = scmp.ne.s32.totalorder %s122, %s123
      %p135 = scmp.eq.s32.totalorder %s29, 1
      %p136 = por %p134, %p135
      %p138 = scmp.ne.s32.totalorder %s123, %s137
      %p139 = scmp.eq.s32.totalorder %s29, 0
      %p140 = por %p138, %p139
      %s142 = sadd.s32 %s141, 1
      %p145 = scmp.eq.s32.totalorder %s23, 1
      %p146 = scmp.ne.s32.totalorder %s141, %s143
      %p147 = scmp.eq.s32.totalorder %s23, 0
      %p148 = por %p146, %p147
      %p149 = scmp.ne.s32.totalorder %s141, %s143
      %p150 = scmp.eq.s32.totalorder %s28, 1
      %p151 = por %p149, %p150
      %p152 = scmp.ne.s32.totalorder %s143, %s144
      %p153 = scmp.eq.s32.totalorder %s28, 0
      %p154 = por %p152, %p153
      %p155 = scmp.ne.s32.totalorder %s143, %s144
      %p156 = scmp.eq.s32.totalorder %s29, 1
      %p157 = por %p155, %p156
      %p159 = scmp.ne.s32.totalorder %s144, %s158
      %p160 = scmp.eq.s32.totalorder %s29, 0
      %p161 = por %p159, %p160
      %s163 = sadd.s32 %s162, 1
      %p166 = scmp.eq.s32.totalorder %s23, 1
      %p167 = scmp.ne.s32.totalorder %s162, %s164
      %p168 = scmp.eq.s32.totalorder %s23, 0
      %p169 = por %p167, %p168
      %p170 = scmp.ne.s32.totalorder %s162, %s164
      %p171 = scmp.eq.s32.totalorder %s28, 1
      %p172 = por %p170, %p171
      %p173 = scmp.ne.s32.totalorder %s164, %s165
      %p174 = scmp.eq.s32.totalorder %s28, 0
      %p175 = por %p173, %p174
      %p176 = scmp.ne.s32.totalorder %s164, %s165
      %p177 = scmp.eq.s32.totalorder %s29, 1
      %p178 = por %p176, %p177
      %p180 = scmp.ne.s32.totalorder %s165, %s179
      %p181 = scmp.eq.s32.totalorder %s29, 0
      %p182 = por %p180, %p181
      %s184 = sadd.s32 %s183, 1
      %p187 = scmp.eq.s32.totalorder %s23, 1
      %p188 = scmp.ne.s32.totalorder %s183, %s185
      %p189 = scmp.eq.s32.totalorder %s23, 0
      %p190 = por %p188, %p189
      %p191 = scmp.ne.s32.totalorder %s183, %s185
      %p192 = scmp.eq.s32.totalorder %s28, 1
      %p193 = por %p191, %p192
      %p194 = scmp.ne.s32.totalorder %s185, %s186
      %p195 = scmp.eq.s32.totalorder %s28, 0
      %p196 = por %p194, %p195
      %p197 = scmp.ne.s32.totalorder %s185, %s186
      %p198 = scmp.eq.s32.totalorder %s29, 1
      %p199 = por %p197, %p198
      %p201 = scmp.ne.s32.totalorder %s186, %s200
      %p202 = scmp.eq.s32.totalorder %s29, 0
      %p203 = por %p201, %p202
      %s205 = sadd.s32 %s204, 1
      %p208 = scmp.eq.s32.totalorder %s23, 1
      %p209 = scmp.ne.s32.totalorder %s204, %s206
      %p210 = scmp.eq.s32.totalorder %s23, 0
      %p211 = por %p209, %p210
      %p212 = scmp.ne.s32.totalorder %s204, %s206
      %p213 = scmp.eq.s32.totalorder %s28, 1
      %p214 = por %p212, %p213
      %p215 = scmp.ne.s32.totalorder %s206, %s207
      %p216 = scmp.eq.s32.totalorder %s28, 0
      %p217 = por %p215, %p216
      %p218 = scmp.ne.s32.totalorder %s206, %s207
      %p219 = scmp.eq.s32.totalorder %s29, 1
      %p220 = por %p218, %p219
      %p222 = scmp.ne.s32.totalorder %s207, %s221
      %p223 = scmp.eq.s32.totalorder %s29, 0
      %p224 = por %p222, %p223
      %s226 = sadd.s32 %s225, 1
      %p229 = scmp.eq.s32.totalorder %s23, 1
      %p230 = scmp.ne.s32.totalorder %s225, %s227
      %p231 = scmp.eq.s32.totalorder %s23, 0
      %p232 = por %p230, %p231
      %p233 = scmp.ne.s32.totalorder %s225, %s227
      %p234 = scmp.eq.s32.totalorder %s28, 1
      %p235 = por %p233, %p234
      %p236 = scmp.ne.s32.totalorder %s227, %s228
      %p237 = scmp.eq.s32.totalorder %s28, 0
      %p238 = por %p236, %p237
      %p239 = scmp.ne.s32.totalorder %s227, %s228
      %p240 = scmp.eq.s32.totalorder %s29, 1
      %p241 = por %p239, %p240
      %p243 = scmp.ne.s32.totalorder %s228, %s242
      %p244 = scmp.eq.s32.totalorder %s29, 0
      %p245 = por %p243, %p244
      %s247 = sadd.s32 %s246, 1
      %p250 = scmp.eq.s32.totalorder %s23, 1
      %p251 = scmp.ne.s32.totalorder %s246, %s248
      %p252 = scmp.eq.s32.totalorder %s23, 0
      %p253 = por %p251, %p252
      %p254 = scmp.ne.s32.totalorder %s246, %s248
      %p255 = scmp.eq.s32.totalorder %s28, 1
      %p256 = por %p254, %p255
      %p257 = scmp.ne.s32.totalorder %s248, %s249
      %p258 = scmp.eq.s32.totalorder %s28, 0
      %p259 = por %p257, %p258
      %p260 = scmp.ne.s32.totalorder %s248, %s249
      %p261 = scmp.eq.s32.totalorder %s29, 1
      %p262 = por %p260, %p261
      %p264 = scmp.ne.s32.totalorder %s249, %s263
      %p265 = scmp.eq.s32.totalorder %s29, 0
      %p266 = por %p264, %p265
      %s268 = sadd.s32 %s267, 1
      %p271 = scmp.eq.s32.totalorder %s23, 1
      %p272 = scmp.ne.s32.totalorder %s267, %s269
      %p273 = scmp.eq.s32.totalorder %s23, 0
      %p274 = por %p272, %p273
      %p275 = scmp.ne.s32.totalorder %s267, %s269
      %p276 = scmp.eq.s32.totalorder %s28, 1
      %p277 = por %p275, %p276
      %p278 = scmp.ne.s32.totalorder %s269, %s270
      %p279 = scmp.eq.s32.totalorder %s28, 0
      %p280 = por %p278, %p279
      %p281 = scmp.ne.s32.totalorder %s269, %s270
      %p282 = scmp.eq.s32.totalorder %s29, 1
      %p283 = por %p281, %p282
      %p285 = scmp.ne.s32.totalorder %s270, %s284
      %p286 = scmp.eq.s32.totalorder %s29, 0
      %p287 = por %p285, %p286
      %s289 = sadd.s32 %s288, 1
      %p292 = scmp.eq.s32.totalorder %s23, 1
      %p293 = scmp.ne.s32.totalorder %s288, %s290
      %p294 = scmp.eq.s32.totalorder %s23, 0
      %p295 = por %p293, %p294
      %p296 = scmp.ne.s32.totalorder %s288, %s290
      %p297 = scmp.eq.s32.totalorder %s28, 1
      %p298 = por %p296, %p297
      %p299 = scmp.ne.s32.totalorder %s290, %s291
      %p300 = scmp.eq.s32.totalorder %s28, 0
      %p301 = por %p299, %p300
      %p302 = scmp.ne.s32.totalorder %s290, %s291
      %p303 = scmp.eq.s32.totalorder %s29, 1
      %p304 = por %p302, %p303
      %p306 = scmp.ne.s32.totalorder %s291, %s305
      %p307 = scmp.eq.s32.totalorder %s29, 0
      %p308 = por %p306, %p307
      %s309 = ssub.s32 %s23, %s30
      %p310 = scmp.eq.s32.totalorder %s309, 0
      %s312 = sadd.s32 %s311, 1
      %s313 = scalar_select %p310, %s311, %s312
      %p316 = pneg %p310
      %p317 = scmp.eq.s32.totalorder %s23, 1
      %p318 = por %p316, %p317
      %p319 = scmp.ne.s32.totalorder %s311, %s314
      %p320 = scmp.eq.s32.totalorder %s23, 0
      %p321 = por %p319, %p320
      %p322 = scmp.ne.s32.totalorder %s311, %s314
      %p323 = scmp.eq.s32.totalorder %s28, 1
      %p324 = por %p322, %p323
      %p325 = scmp.ne.s32.totalorder %s314, %s315
      %p326 = scmp.eq.s32.totalorder %s28, 0
      %p327 = por %p325, %p326
      %p328 = scmp.ne.s32.totalorder %s314, %s315
      %p329 = scmp.eq.s32.totalorder %s29, 1
      %p330 = por %p328, %p329
      %p332 = scmp.ne.s32.totalorder %s315, %s331
      %p333 = scmp.eq.s32.totalorder %s29, 0
      %p334 = por %p332, %p333
      %p335 = scmp.le.s32.totalorder 1, %s23
      %p336 = scmp.lt.s32.totalorder %s23, 3
      %p337 = pnand %p335, %p336
      %p338 = pneg %p337
      // Predicated region
      $region9: #{forward.1} parent=5 // pred_check
        _
      $region10: #{forward.1} parent=5 // pred_check_branch
        %340 = sbr.rel (%p337) target = $region12
      $region11: #{forward.1} parent=5 // pred_region
        %s341 = ssub.s32 %s23, 1
        // Predicated region
        $region13: #{forward.1} parent=11 // pred_check
          %p342 = pneg %p70
        $region14: #{forward.1} parent=11 // pred_check_branch
          %344 = sbr.rel (%p342) target = $region16
        $region15: #{forward.1} parent=11 // pred_region
          _
        $region16: #{forward.1} parent=11 // pred_fallthru
          _
        // Predicated region
        $region17: #{forward.1} parent=11 // pred_check
          %p345 = pneg %p91
        $region18: #{forward.1} parent=11 // pred_check_branch
          %347 = sbr.rel (%p345) target = $region20
        $region19: #{forward.1} parent=11 // pred_region
          %349 = vsyncadd [#allocation4], 0
          %s350 = sshll.u32 %s2, 4
          %s351 = int_to_ptr.hbm [resolvable:$true] %s350
          %s352 = sshll.u32 [#allocation3], 4
          %s353 = int_to_ptr.vmem [resolvable:$true] %s352
          %358 = dma.hbm_to_vmem [thread:$0]  %s351, 1024, %s353, [#allocation4], 128, 128, 8
        $region20: #{forward.1} parent=11 // pred_fallthru
          _
        // Predicated region
        $region21: #{forward.1} parent=11 // pred_check
          %p359 = pneg %p112
        $region22: #{forward.1} parent=11 // pred_check_branch
          %361 = sbr.rel (%p359) target = $region24
        $region23: #{forward.1} parent=11 // pred_region
          %363 = vsyncadd [#allocation6], 0
          %s364 = sshll.u32 %s3, 4
          %s365 = int_to_ptr.hbm [resolvable:$true] %s364
          %s366 = sshll.u32 [#allocation5], 4
          %s367 = int_to_ptr.vmem [resolvable:$true] %s366
          %372 = dma.hbm_to_vmem [thread:$0]  %s365, 6144, %s367, [#allocation6], 192, 192, 12
        $region24: #{forward.1} parent=11 // pred_fallthru
          _
        // Predicated region
        $region25: #{forward.1} parent=11 // pred_check
          %p373 = pneg %p133
        $region26: #{forward.1} parent=11 // pred_check_branch
          %375 = sbr.rel (%p373) target = $region28
        $region27: #{forward.1} parent=11 // pred_region
          _
        $region28: #{forward.1} parent=11 // pred_fallthru
          _
        // Predicated region
        $region29: #{forward.1} parent=11 // pred_check
          %p376 = pneg %p154
        $region30: #{forward.1} parent=11 // pred_check_branch
          %378 = sbr.rel (%p376) target = $region32
        $region31: #{forward.1} parent=11 // pred_region
          %380 = vsyncadd [#allocation6], 0
          %s381 = sshll.u32 %s5, 4
          %s382 = int_to_ptr.hbm [resolvable:$true] %s381
          %s383 = sshll.u32 [#allocation7], 4
          %s384 = int_to_ptr.vmem [resolvable:$true] %s383
          %389 = dma.hbm_to_vmem [thread:$0]  %s382, 4096, %s384, [#allocation6], 128, 128, 8
        $region32: #{forward.1} parent=11 // pred_fallthru
          _
        // Predicated region
        $region33: #{forward.1} parent=11 // pred_check
          %p390 = pneg %p175
        $region34: #{forward.1} parent=11 // pred_check_branch
          %392 = sbr.rel (%p390) target = $region36
        $region35: #{forward.1} parent=11 // pred_region
          %394 = vsyncadd [#allocation9], 0
          %s395 = sshll.u32 %s6, 4
          %s396 = int_to_ptr.hbm [resolvable:$true] %s395
          %s397 = sshll.u32 [#allocation8], 4
          %s398 = int_to_ptr.vmem [resolvable:$true] %s397
          %403 = dma.hbm_to_vmem [thread:$0]  %s396, 4096, %s398, [#allocation9], 64, 64, 4
        $region36: #{forward.1} parent=11 // pred_fallthru
          _
        // Predicated region
        $region37: #{forward.1} parent=11 // pred_check
          %p404 = pneg %p196
        $region38: #{forward.1} parent=11 // pred_check_branch
          %406 = sbr.rel (%p404) target = $region40
        $region39: #{forward.1} parent=11 // pred_region
          _
        $region40: #{forward.1} parent=11 // pred_fallthru
          _
        // Predicated region
        $region41: #{forward.1} parent=11 // pred_check
          %p407 = pneg %p217
        $region42: #{forward.1} parent=11 // pred_check_branch
          %409 = sbr.rel (%p407) target = $region44
        $region43: #{forward.1} parent=11 // pred_region
          _
        $region44: #{forward.1} parent=11 // pred_fallthru
          _
        // Predicated region
        $region45: #{forward.1} parent=11 // pred_check
          %p410 = pneg %p238
        $region46: #{forward.1} parent=11 // pred_check_branch
          %412 = sbr.rel (%p410) target = $region48
        $region47: #{forward.1} parent=11 // pred_region
          %414 = vsyncadd [#allocation9], 0
          %s415 = sshll.u32 %s9, 4
          %s416 = int_to_ptr.hbm [resolvable:$true] %s415
          %s417 = sshll.u32 [#allocation10], 4
          %s418 = int_to_ptr.vmem [resolvable:$true] %s417
          %423 = dma.hbm_to_vmem [thread:$0]  %s416, 4096, %s418, [#allocation9], 256, 256, 16
        $region48: #{forward.1} parent=11 // pred_fallthru
          _
        // Predicated region
        $region49: #{forward.1} parent=11 // pred_check
          %p424 = pneg %p259
        $region50: #{forward.1} parent=11 // pred_check_branch
          %426 = sbr.rel (%p424) target = $region52
        $region51: #{forward.1} parent=11 // pred_region
          _
        $region52: #{forward.1} parent=11 // pred_fallthru
          _
        // Predicated region
        $region53: #{forward.1} parent=11 // pred_check
          %p427 = pneg %p280
        $region54: #{forward.1} parent=11 // pred_check_branch
          %429 = sbr.rel (%p427) target = $region56
        $region55: #{forward.1} parent=11 // pred_region
          %431 = vsyncadd [#allocation12], 0
          %s432 = sshll.u32 %s11, 4
          %s433 = int_to_ptr.hbm [resolvable:$true] %s432
          %s434 = sshll.u32 [#allocation11], 4
          %s435 = int_to_ptr.vmem [resolvable:$true] %s434
          %440 = dma.hbm_to_vmem [thread:$0]  %s433, 4096, %s435, [#allocation12], 64, 64, 4
        $region56: #{forward.1} parent=11 // pred_fallthru
          _
        // Predicated region
        $region57: #{forward.1} parent=11 // pred_check
          %p441 = pneg %p301
        $region58: #{forward.1} parent=11 // pred_check_branch
          %443 = sbr.rel (%p441) target = $region60
        $region59: #{forward.1} parent=11 // pred_region
          _
        $region60: #{forward.1} parent=11 // pred_fallthru
          _
      $region12: #{forward.1} parent=5 // pred_fallthru
        _
      %p444 = scmp.lt.s32.totalorder %s23, 2
      // Predicated region
      $region61: #{forward.1} parent=5 // pred_check
        %p445 = pneg %p444
      $region62: #{forward.1} parent=5 // pred_check_branch
        %447 = sbr.rel (%p445) target = $region64
      $region63: #{forward.1} parent=5 // pred_region
        // Predicated region
        $region65: #{forward.1} parent=63 // pred_check
          %p448 = pneg %p43
        $region66: #{forward.1} parent=63 // pred_check_branch
          %450 = sbr.rel (%p448) target = $region68
        $region67: #{forward.1} parent=63 // pred_region
          %p451 = scmp.lt.s32.totalorder %s23, 1
          %s452 = scalar_select %p451, %s23, 1
          %s453 = smul.addr %s452, 8
          %s454 = smul.addr %s453, 8
          %s455 = scalar_lea.vmem %s0, %s454
        $region68: #{forward.1} parent=63 // pred_fallthru
          _
      $region64: #{forward.1} parent=5 // pred_fallthru
        _
      %p456 = scmp.le.s32.totalorder 1, %s23
      %p457 = scmp.lt.s32.totalorder %s23, 3
      %p458 = pnand %p456, %p457
      %p459 = pneg %p458
      // Predicated region
      $region69: #{forward.1} parent=5 // pred_check
        _
      $region70: #{forward.1} parent=5 // pred_check_branch
        %461 = sbr.rel (%p458) target = $region72
      $region71: #{forward.1} parent=5 // pred_region
        %s462 = ssub.s32 %s23, 1
        // Predicated region
        $region73: #{forward.1} parent=71 // pred_check
          %p463 = pneg %p91
        $region74: #{forward.1} parent=71 // pred_check_branch
          %465 = sbr.rel (%p463) target = $region76
        $region75: #{forward.1} parent=71 // pred_region
          %467 = dma.done [#allocation4], 1024
        $region76: #{forward.1} parent=71 // pred_fallthru
          _
        // Predicated region
        $region77: #{forward.1} parent=71 // pred_check
          %p468 = pneg %p112
        $region78: #{forward.1} parent=71 // pred_check_branch
          %470 = sbr.rel (%p468) target = $region80
        $region79: #{forward.1} parent=71 // pred_region
          %472 = dma.done [#allocation6], 6144
        $region80: #{forward.1} parent=71 // pred_fallthru
          _
        // Predicated region
        $region81: #{forward.1} parent=71 // pred_check
          %p473 = pneg %p154
        $region82: #{forward.1} parent=71 // pred_check_branch
          %475 = sbr.rel (%p473) target = $region84
        $region83: #{forward.1} parent=71 // pred_region
          %477 = dma.done [#allocation6], 4096
        $region84: #{forward.1} parent=71 // pred_fallthru
          _
        // Predicated region
        $region85: #{forward.1} parent=71 // pred_check
          %p478 = pneg %p175
        $region86: #{forward.1} parent=71 // pred_check_branch
          %480 = sbr.rel (%p478) target = $region88
        $region87: #{forward.1} parent=71 // pred_region
          %482 = dma.done [#allocation9], 4096
        $region88: #{forward.1} parent=71 // pred_fallthru
          _
        // Predicated region
        $region89: #{forward.1} parent=71 // pred_check
          %p483 = pneg %p238
        $region90: #{forward.1} parent=71 // pred_check_branch
          %485 = sbr.rel (%p483) target = $region92
        $region91: #{forward.1} parent=71 // pred_region
          %487 = dma.done [#allocation9], 4096
        $region92: #{forward.1} parent=71 // pred_fallthru
          _
        // Predicated region
        $region93: #{forward.1} parent=71 // pred_check
          %p488 = pneg %p280
        $region94: #{forward.1} parent=71 // pred_check_branch
          %490 = sbr.rel (%p488) target = $region96
        $region95: #{forward.1} parent=71 // pred_region
          %492 = dma.done [#allocation12], 4096
        $region96: #{forward.1} parent=71 // pred_fallthru
          _
        %p493 = scmp.lt.s32.totalorder %s28, 1
        %s494 = scalar_select %p493, %s28, 1
        %s495 = smul.addr %s494, 8
        %s496 = smul.addr %s495, 8
        %s497 = scalar_lea.vmem %s0, %s496
        %p498 = pneg %p49
        %p499 = pneg %p46
        %p500 = pneg %p70
        %p501 = pneg %p67
        %p502 = pneg %p91
        %p503 = pneg %p88
        %p504 = pneg %p112
        %p505 = pneg %p109
        %p506 = pneg %p133
        %p507 = pneg %p130
        %p508 = pneg %p154
        %p509 = pneg %p151
        %p510 = pneg %p175
        %p511 = pneg %p172
        %p512 = pneg %p196
        %p513 = pneg %p193
        %p514 = pneg %p217
        %p515 = pneg %p214
        %p516 = pneg %p238
        %p517 = pneg %p235
        %p518 = pneg %p259
        %p519 = pneg %p256
        %p520 = pneg %p280
        %p521 = pneg %p277
        %p522 = pneg %p301
        %p523 = pneg %p298
        %p524 = pneg %p327
        %p525 = pneg %p324
        %p526 = scmp.lt.s32.totalorder %s28, 1
        %s527 = scalar_select %p526, %s28, 1
        %s528 = smul.addr %s527, 8
        %s529 = scalar_lea.vmem %s13, %s528
        %p530 = scmp.lt.s32.totalorder %s28, 1
        %s531 = scalar_select %p530, %s28, 1
        %s532 = smul.addr %s531, 8
        %s533 = smul.addr %s532, 8
        %s534 = scalar_lea.vmem %s0, %s533
        %p535 = scmp.lt.s32.totalorder %s28, 1
        %s536 = scalar_select %p535, %s28, 1
        %s537 = smul.addr %s536, 8
        %s538 = scalar_lea.vmem %s13, %s537
        %v540 = vld [vmem:[%s534] sm:$0xff]
        %v541 = vld [vmem:[%s534 + $0x8] sm:$0xff]
        %v542 = vld [vmem:[%s534 + $0x10] sm:$0xff]
        %v543 = vld [vmem:[%s534 + $0x18] sm:$0xff]
        %v544 = vld [vmem:[%s534 + $0x20] sm:$0xff]
        %v545 = vld [vmem:[%s534 + $0x28] sm:$0xff]
        %v546 = vld [vmem:[%s534 + $0x30] sm:$0xff]
        %v547 = vld [vmem:[%s534 + $0x38] sm:$0xff]
        %v548 = vld [vmem:[%s1] sm:$0x7]
        %vm549 = vcmp.eq.s32.totalorder %v540, 1
        %vm550 = vcmp.eq.s32.totalorder %v541, 1
        %vm551 = vcmp.eq.s32.totalorder %v542, 1
        %vm552 = vcmp.eq.s32.totalorder %v543, 1
        %vm553 = vcmp.eq.s32.totalorder %v544, 1
        %vm554 = vcmp.eq.s32.totalorder %v545, 1
        %vm555 = vcmp.eq.s32.totalorder %v546, 1
        %vm556 = vcmp.eq.s32.totalorder %v547, 1
        %vm557 = vcmp.eq.s32.totalorder %v540, 2
        %vm558 = vcmp.eq.s32.totalorder %v541, 2
        %vm559 = vcmp.eq.s32.totalorder %v542, 2
        %vm560 = vcmp.eq.s32.totalorder %v543, 2
        %vm561 = vcmp.eq.s32.totalorder %v544, 2
        %vm562 = vcmp.eq.s32.totalorder %v545, 2
        %vm563 = vcmp.eq.s32.totalorder %v546, 2
        %vm564 = vcmp.eq.s32.totalorder %v547, 2
        %v565 = vsel %vm557, 1, 0
        %v566 = vsel %vm558, 1, 0
        %v567 = vsel %vm559, 1, 0
        %v568 = vsel %vm560, 1, 0
        %v569 = vsel %vm561, 1, 0
        %v570 = vsel %vm562, 1, 0
        %v571 = vsel %vm563, 1, 0
        %v572 = vsel %vm564, 1, 0
        %573 = vset.pattern.permute.xlu0 0
        %574 = vperm.xlu0 %573, %v565
        %v575 = vpop.permute.xlu0 %574
        %576 = vset.pattern.permute.xlu0 0
        %577 = vperm.xlu0 %576, %v566
        %v578 = vpop.permute.xlu0 %577
        %579 = vset.pattern.permute.xlu0 0
        %580 = vperm.xlu0 %579, %v567
        %v581 = vpop.permute.xlu0 %580
        %582 = vset.pattern.permute.xlu0 0
        %583 = vperm.xlu0 %582, %v568
        %v584 = vpop.permute.xlu0 %583
        %585 = vset.pattern.permute.xlu0 0
        %586 = vperm.xlu0 %585, %v569
        %v587 = vpop.permute.xlu0 %586
        %588 = vset.pattern.permute.xlu0 0
        %589 = vperm.xlu0 %588, %v570
        %v590 = vpop.permute.xlu0 %589
        %591 = vset.pattern.permute.xlu0 0
        %592 = vperm.xlu0 %591, %v571
        %v593 = vpop.permute.xlu0 %592
        %594 = vset.pattern.permute.xlu0 0
        %595 = vperm.xlu0 %594, %v572
        %v596 = vpop.permute.xlu0 %595
        %vm597 = vcmp.eq.s32.totalorder %v575, 1
        %vm598 = vcmp.eq.s32.totalorder %v578, 1
        %vm599 = vcmp.eq.s32.totalorder %v581, 1
        %vm600 = vcmp.eq.s32.totalorder %v584, 1
        %vm601 = vcmp.eq.s32.totalorder %v587, 1
        %vm602 = vcmp.eq.s32.totalorder %v590, 1
        %vm603 = vcmp.eq.s32.totalorder %v593, 1
        %vm604 = vcmp.eq.s32.totalorder %v596, 1
        %v605 = vperm.slane %v548, 2
        %v606 = vperm.slane %v548, 0
        %v607 = vsel %vm597, %v605, %v606
        %v608 = vsel %vm598, %v605, %v606
        %v609 = vsel %vm599, %v605, %v606
        %v610 = vsel %vm600, %v605, %v606
        %v611 = vsel %vm601, %v605, %v606
        %v612 = vsel %vm602, %v605, %v606
        %v613 = vsel %vm603, %v605, %v606
        %v614 = vsel %vm604, %v605, %v606
        %v615 = vsel %vm549, 1, 0
        %v616 = vsel %vm550, 1, 0
        %v617 = vsel %vm551, 1, 0
        %v618 = vsel %vm552, 1, 0
        %v619 = vsel %vm553, 1, 0
        %v620 = vsel %vm554, 1, 0
        %v621 = vsel %vm555, 1, 0
        %v622 = vsel %vm556, 1, 0
        %623 = vset.pattern.permute.xlu0 0
        %624 = vperm.xlu0 %623, %v615
        %v625 = vpop.permute.xlu0 %624
        %626 = vset.pattern.permute.xlu0 0
        %627 = vperm.xlu0 %626, %v616
        %v628 = vpop.permute.xlu0 %627
        %629 = vset.pattern.permute.xlu0 0
        %630 = vperm.xlu0 %629, %v617
        %v631 = vpop.permute.xlu0 %630
        %632 = vset.pattern.permute.xlu0 0
        %633 = vperm.xlu0 %632, %v618
        %v634 = vpop.permute.xlu0 %633
        %635 = vset.pattern.permute.xlu0 0
        %636 = vperm.xlu0 %635, %v619
        %v637 = vpop.permute.xlu0 %636
        %638 = vset.pattern.permute.xlu0 0
        %639 = vperm.xlu0 %638, %v620
        %v640 = vpop.permute.xlu0 %639
        %641 = vset.pattern.permute.xlu0 0
        %642 = vperm.xlu0 %641, %v621
        %v643 = vpop.permute.xlu0 %642
        %644 = vset.pattern.permute.xlu0 0
        %645 = vperm.xlu0 %644, %v622
        %v646 = vpop.permute.xlu0 %645
        %vm647 = vcmp.eq.s32.totalorder %v625, 1
        %vm648 = vcmp.eq.s32.totalorder %v628, 1
        %vm649 = vcmp.eq.s32.totalorder %v631, 1
        %vm650 = vcmp.eq.s32.totalorder %v634, 1
        %vm651 = vcmp.eq.s32.totalorder %v637, 1
        %vm652 = vcmp.eq.s32.totalorder %v640, 1
        %vm653 = vcmp.eq.s32.totalorder %v643, 1
        %vm654 = vcmp.eq.s32.totalorder %v646, 1
        %v655 = vperm.slane %v548, 1
        %v656 = vsel %vm647, %v655, %v607
        %v657 = vsel %vm648, %v655, %v608
        %v658 = vsel %vm649, %v655, %v609
        %v659 = vsel %vm650, %v655, %v610
        %v660 = vsel %vm651, %v655, %v611
        %v661 = vsel %vm652, %v655, %v612
        %v662 = vsel %vm653, %v655, %v613
        %v663 = vsel %vm654, %v655, %v614
        %v664 = vld [vmem:[#allocation3] sm:$0xff]
        %v665 = vld [vmem:[#allocation3 + $0x8] sm:$0xff]
        %v666 = vld [vmem:[#allocation3 + $0x10] sm:$0xff]
        %v667 = vld [vmem:[#allocation3 + $0x18] sm:$0xff]
        %v668 = vld [vmem:[#allocation3 + $0x20] sm:$0xff]
        %v669 = vld [vmem:[#allocation3 + $0x28] sm:$0xff]
        %v670 = vld [vmem:[#allocation3 + $0x30] sm:$0xff]
        %v671 = vld [vmem:[#allocation3 + $0x38] sm:$0xff]
        %v672 = vadd.f32 %v656, %v664
        %v673 = vadd.f32 %v657, %v665
        %v674 = vadd.f32 %v658, %v666
        %v675 = vadd.f32 %v659, %v667
        %v676 = vadd.f32 %v660, %v668
        %v677 = vadd.f32 %v661, %v669
        %v678 = vadd.f32 %v662, %v670
        %v679 = vadd.f32 %v663, %v671
        %v680 = vlaneseq
        %v681 = vand.u32 %v680, 127
        %vm682 = vcmp.lt.s32.totalorder %v681, 42
        %v683 = vsel %vm682, 0.0, -1e+30
        %v684 = vld [vmem:[%s7] sm:$0xff]
        %v685 = vld [vmem:[%s7 + $0x8] sm:$0x1]
        %v686 = vpack.c.bf16 %v673, %v672
        %v687 = vpack.c.bf16 %v675, %v674
        %v688 = vpack.c.bf16 %v677, %v676
        %v689 = vpack.c.bf16 %v679, %v678
        %v690 = vld [vmem:[#allocation5] sm:$0xff]
        %v691 = vld [vmem:[#allocation5 + $0x8] sm:$0xf]
        %v692 = vld [vmem:[#allocation5 + $0xc] sm:$0xff]
        %v693 = vld [vmem:[#allocation5 + $0x14] sm:$0xf]
        %v694 = vld [vmem:[#allocation5 + $0x18] sm:$0xff]
        %v695 = vld [vmem:[#allocation5 + $0x20] sm:$0xf]
        %v696 = vld [vmem:[#allocation5 + $0x24] sm:$0xff]
        %v697 = vld [vmem:[#allocation5 + $0x2c] sm:$0xf]
        %v698 = vld [vmem:[#allocation5 + $0x30] sm:$0xff]
        %v699 = vld [vmem:[#allocation5 + $0x38] sm:$0xf]
        %v700 = vld [vmem:[#allocation5 + $0x3c] sm:$0xff]
        %v701 = vld [vmem:[#allocation5 + $0x44] sm:$0xf]
        %v702 = vld [vmem:[#allocation5 + $0x48] sm:$0xff]
        %v703 = vld [vmem:[#allocation5 + $0x50] sm:$0xf]
        %v704 = vld [vmem:[#allocation5 + $0x54] sm:$0xff]
        %v705 = vld [vmem:[#allocation5 + $0x5c] sm:$0xf]
        %v706 = vld [vmem:[#allocation5 + $0x60] sm:$0xff]
        %v707 = vld [vmem:[#allocation5 + $0x68] sm:$0xf]
        %v708 = vld [vmem:[#allocation5 + $0x6c] sm:$0xff]
        %v709 = vld [vmem:[#allocation5 + $0x74] sm:$0xf]
        %v710 = vld [vmem:[#allocation5 + $0x78] sm:$0xff]
        %v711 = vld [vmem:[#allocation5 + $0x80] sm:$0xf]
        %v712 = vld [vmem:[#allocation5 + $0x84] sm:$0xff]
        %v713 = vld [vmem:[#allocation5 + $0x8c] sm:$0xf]
        %v714 = vld [vmem:[#allocation5 + $0x90] sm:$0xff]
        %v715 = vld [vmem:[#allocation5 + $0x98] sm:$0xf]
        %v716 = vld [vmem:[#allocation5 + $0x9c] sm:$0xff]
        %v717 = vld [vmem:[#allocation5 + $0xa4] sm:$0xf]
        %v718 = vld [vmem:[#allocation5 + $0xa8] sm:$0xff]
        %v719 = vld [vmem:[#allocation5 + $0xb0] sm:$0xf]
        %v720 = vld [vmem:[#allocation5 + $0xb4] sm:$0xff]
        %v721 = vld [vmem:[#allocation5 + $0xbc] sm:$0xf]
        %v754 = vunpack.c.l.b16 %v690
        %v755 = vunpack.c.h.b16 %v690
        %v756 = vunpack.c.l.b16 %v691
        %v757 = vunpack.c.l.b16 %v692
        %v758 = vunpack.c.h.b16 %v692
        %v759 = vunpack.c.l.b16 %v693
        %v760 = vunpack.c.l.b16 %v694
        %v761 = vunpack.c.h.b16 %v694
        %v762 = vunpack.c.l.b16 %v695
        %v763 = vunpack.c.l.b16 %v696
        %v764 = vunpack.c.h.b16 %v696
        %v765 = vunpack.c.l.b16 %v697
        %v766 = vunpack.c.l.b16 %v698
        %v767 = vunpack.c.h.b16 %v698
        %v768 = vunpack.c.l.b16 %v699
        %v769 = vunpack.c.l.b16 %v700
        %v770 = vunpack.c.h.b16 %v700
        %v771 = vunpack.c.l.b16 %v701
        %v772 = vunpack.c.l.b16 %v702
        %v773 = vunpack.c.h.b16 %v702
        %v774 = vunpack.c.l.b16 %v703
        %v775 = vunpack.c.l.b16 %v704
        %v776 = vunpack.c.h.b16 %v704
        %v777 = vunpack.c.l.b16 %v705
        %v778 = vunpack.c.l.b16 %v706
        %v779 = vunpack.c.h.b16 %v706
        %v780 = vunpack.c.l.b16 %v707
        %v781 = vunpack.c.l.b16 %v708
        %v782 = vunpack.c.h.b16 %v708
        %v783 = vunpack.c.l.b16 %v709
        %v784 = vunpack.c.l.b16 %v710
        %v785 = vunpack.c.h.b16 %v710
        %v786 = vunpack.c.l.b16 %v711
        %v787 = vunpack.c.l.b16 %v712
        %v788 = vunpack.c.h.b16 %v712
        %v789 = vunpack.c.l.b16 %v713
        %v790 = vunpack.c.l.b16 %v714
        %v791 = vunpack.c.h.b16 %v714
        %v792 = vunpack.c.l.b16 %v715
        %v793 = vunpack.c.l.b16 %v716
        %v794 = vunpack.c.h.b16 %v716
        %v795 = vunpack.c.l.b16 %v717
        %v796 = vunpack.c.l.b16 %v718
        %v797 = vunpack.c.h.b16 %v718
        %v798 = vunpack.c.l.b16 %v719
        %v799 = vunpack.c.l.b16 %v720
        %v800 = vunpack.c.h.b16 %v720
        %v801 = vunpack.c.l.b16 %v721
        %v802 = vpack.c.b16 %v757, %v754
        %v803 = vpack.c.b16 %v758, %v755
        %v804 = vpack.c.b16 %v759, %v756
        %v805 = vpack.c.b16 %v763, %v760
        %v806 = vpack.c.b16 %v764, %v761
        %v807 = vpack.c.b16 %v765, %v762
        %v808 = vpack.c.b16 %v769, %v766
        %v809 = vpack.c.b16 %v770, %v767
        %v810 = vpack.c.b16 %v771, %v768
        %v811 = vpack.c.b16 %v775, %v772
        %v812 = vpack.c.b16 %v776, %v773
        %v813 = vpack.c.b16 %v777, %v774
        %v814 = vpack.c.b16 %v781, %v778
        %v815 = vpack.c.b16 %v782, %v779
        %v816 = vpack.c.b16 %v783, %v780
        %v817 = vpack.c.b16 %v787, %v784
        %v818 = vpack.c.b16 %v788, %v785
        %v819 = vpack.c.b16 %v789, %v786
        %v820 = vpack.c.b16 %v793, %v790
        %v821 = vpack.c.b16 %v794, %v791
        %v822 = vpack.c.b16 %v795, %v792
        %v823 = vpack.c.b16 %v799, %v796
        %v824 = vpack.c.b16 %v800, %v797
        %v825 = vpack.c.b16 %v801, %v798
        %850 = vmatpush.bf16.msra.mxu0 %v823
        %851 = vmatpush.bf16.msra.mxu0 %v820
        %852 = vmatpush.bf16.msra.mxu0 %v817
        %853 = vmatpush.bf16.msra.mxu0 %v814
        %854 = vmatpush.bf16.msra.mxu0 %v811
        %855 = vmatpush.bf16.msra.mxu0 %v808
        %856 = vmatpush.bf16.msra.mxu0 %v805
        %857 = vmatpush.bf16.msra.mxu0 %v802
        %858 = vmatmul.bf16.gmra.mxu0 %v686
        %v859 = vpop.f32.mrf.mxu0
        %v860 = vadd.f32 0.0, %v859
        %v861 = vpop.f32.mrf.mxu0
        %v862 = vadd.f32 0.0, %v861
        %863 = vmatmul.bf16.gmra.mxu0 %v687
        %v864 = vpop.f32.mrf.mxu0
        %v865 = vadd.f32 0.0, %v864
        %v866 = vpop.f32.mrf.mxu0
        %v867 = vadd.f32 0.0, %v866
        %868 = vmatmul.bf16.gmra.mxu0 %v688
        %v869 = vpop.f32.mrf.mxu0
        %v870 = vadd.f32 0.0, %v869
        %v871 = vpop.f32.mrf.mxu0
        %v872 = vadd.f32 0.0, %v871
        %873 = vmatmul.bf16.gmra.mxu0 %v689
        %v874 = vpop.f32.mrf.mxu0
        %v875 = vadd.f32 0.0, %v874
        %v876 = vpop.f32.mrf.mxu0
        %v877 = vadd.f32 0.0, %v876
        %878 = vdwg.mxu0
        %879 = vmatpush.bf16.msra.mxu0 %v824
        %880 = vmatpush.bf16.msra.mxu0 %v821
        %881 = vmatpush.bf16.msra.mxu0 %v818
        %882 = vmatpush.bf16.msra.mxu0 %v815
        %883 = vmatpush.bf16.msra.mxu0 %v812
        %884 = vmatpush.bf16.msra.mxu0 %v809
        %885 = vmatpush.bf16.msra.mxu0 %v806
        %886 = vmatpush.bf16.msra.mxu0 %v803
        %887 = vmatmul.bf16.gmra.mxu0 %v686
        %v888 = vpop.f32.mrf.mxu0
        %v889 = vadd.f32 0.0, %v888
        %v890 = vpop.f32.mrf.mxu0
        %v891 = vadd.f32 0.0, %v890
        %892 = vmatmul.bf16.gmra.mxu0 %v687
        %v893 = vpop.f32.mrf.mxu0
        %v894 = vadd.f32 0.0, %v893
        %v895 = vpop.f32.mrf.mxu0
        %v896 = vadd.f32 0.0, %v895
        %897 = vmatmul.bf16.gmra.mxu0 %v688
        %v898 = vpop.f32.mrf.mxu0
        %v899 = vadd.f32 0.0, %v898
        %v900 = vpop.f32.mrf.mxu0
        %v901 = vadd.f32 0.0, %v900
        %902 = vmatmul.bf16.gmra.mxu0 %v689
        %v903 = vpop.f32.mrf.mxu0
        %v904 = vadd.f32 0.0, %v903
        %v905 = vpop.f32.mrf.mxu0
        %v906 = vadd.f32 0.0, %v905
        %907 = vdwg.mxu0
        %908 = vmatpush.bf16.msra.mxu0 %v825
        %909 = vmatpush.bf16.msra.mxu0 %v822
        %910 = vmatpush.bf16.msra.mxu0 %v819
        %911 = vmatpush.bf16.msra.mxu0 %v816
        %912 = vmatpush.bf16.msra.mxu0 %v813
        %913 = vmatpush.bf16.msra.mxu0 %v810
        %914 = vmatpush.bf16.msra.mxu0 %v807
        %915 = vmatpush.bf16.msra.mxu0 %v804
        %916 = vmatmul.bf16.gmra.mxu0 %v686
        %v917 = vpop.f32.mrf.mxu0
        %v918 = vadd.f32 0.0, %v917
        %v919 = vpop.f32.mrf.mxu0
        %v920 = vadd.f32 0.0, %v919
        %921 = vmatmul.bf16.gmra.mxu0 %v687
        %v922 = vpop.f32.mrf.mxu0
        %v923 = vadd.f32 0.0, %v922
        %v924 = vpop.f32.mrf.mxu0
        %v925 = vadd.f32 0.0, %v924
        %926 = vmatmul.bf16.gmra.mxu0 %v688
        %v927 = vpop.f32.mrf.mxu0
        %v928 = vadd.f32 0.0, %v927
        %v929 = vpop.f32.mrf.mxu0
        %v930 = vadd.f32 0.0, %v929
        %931 = vmatmul.bf16.gmra.mxu0 %v689
        %v932 = vpop.f32.mrf.mxu0
        %v933 = vadd.f32 0.0, %v932
        %v934 = vpop.f32.mrf.mxu0
        %v935 = vadd.f32 0.0, %v934
        %936 = vdwg.mxu0
        %v937 = vperm.slane %v684, 0
        %v938 = vadd.f32 %v860, %v937
        %v939 = vadd.f32 %v862, %v937
        %v940 = vadd.f32 %v865, %v937
        %v941 = vadd.f32 %v867, %v937
        %v942 = vadd.f32 %v870, %v937
        %v943 = vadd.f32 %v872, %v937
        %v944 = vadd.f32 %v875, %v937
        %v945 = vadd.f32 %v877, %v937
        %v946 = vpack.c.bf16 %v938, %v938
        %v947 = vpack.c.bf16 %v939, %v939
        %v948 = vpack.c.bf16 %v940, %v940
        %v949 = vpack.c.bf16 %v941, %v941
        %v950 = vpack.c.bf16 %v942, %v942
        %v951 = vpack.c.bf16 %v943, %v943
        %v952 = vpack.c.bf16 %v944, %v944
        %v953 = vpack.c.bf16 %v945, %v945
        %v954 = vperm.slane %v684, 1
        %v955 = vadd.f32 %v889, %v954
        %v956 = vadd.f32 %v891, %v954
        %v957 = vadd.f32 %v894, %v954
        %v958 = vadd.f32 %v896, %v954
        %v959 = vadd.f32 %v899, %v954
        %v960 = vadd.f32 %v901, %v954
        %v961 = vadd.f32 %v904, %v954
        %v962 = vadd.f32 %v906, %v954
        %v963 = vpack.c.bf16 %v955, %v955
        %v964 = vpack.c.bf16 %v956, %v956
        %v965 = vpack.c.bf16 %v957, %v957
        %v966 = vpack.c.bf16 %v958, %v958
        %v967 = vpack.c.bf16 %v959, %v959
        %v968 = vpack.c.bf16 %v960, %v960
        %v969 = vpack.c.bf16 %v961, %v961
        %v970 = vpack.c.bf16 %v962, %v962
        %v971 = vperm.slane %v684, 2
        %v972 = vadd.f32 %v918, %v971
        %v973 = vadd.f32 %v920, %v971
        %v974 = vadd.f32 %v923, %v971
        %v975 = vadd.f32 %v925, %v971
        %v976 = vadd.f32 %v928, %v971
        %v977 = vadd.f32 %v930, %v971
        %v978 = vadd.f32 %v933, %v971
        %v979 = vadd.f32 %v935, %v971
        %v980 = vpack.c.bf16 %v972, %v972
        %v981 = vpack.c.bf16 %v973, %v973
        %v982 = vpack.c.bf16 %v974, %v974
        %v983 = vpack.c.bf16 %v975, %v975
        %v984 = vpack.c.bf16 %v976, %v976
        %v985 = vpack.c.bf16 %v977, %v977
        %v986 = vpack.c.bf16 %v978, %v978
        %v987 = vpack.c.bf16 %v979, %v979
        %v996 = vunpack.c.l.b16 %v946
        %v997 = vunpack.c.l.b16 %v947
        %v998 = vunpack.c.l.b16 %v948
        %v999 = vunpack.c.l.b16 %v949
        %v1000 = vunpack.c.l.b16 %v950
        %v1001 = vunpack.c.l.b16 %v951
        %v1002 = vunpack.c.l.b16 %v952
        %v1003 = vunpack.c.l.b16 %v953
        %v1004 = vpack.c.b16 %v997, %v996
        %v1005 = vpack.c.b16 %v999, %v998
        %v1006 = vpack.c.b16 %v1001, %v1000
        %v1007 = vpack.c.b16 %v1003, %v1002
        %v1016 = vunpack.c.l.b16 %v963
        %v1017 = vunpack.c.l.b16 %v964
        %v1018 = vunpack.c.l.b16 %v965
        %v1019 = vunpack.c.l.b16 %v966
        %v1020 = vunpack.c.l.b16 %v967
        %v1021 = vunpack.c.l.b16 %v968
        %v1022 = vunpack.c.l.b16 %v969
        %v1023 = vunpack.c.l.b16 %v970
        %v1024 = vpack.c.b16 %v1017, %v1016
        %v1025 = vpack.c.b16 %v1019, %v1018
        %v1026 = vpack.c.b16 %v1021, %v1020
        %v1027 = vpack.c.b16 %v1023, %v1022
        %vm1028 = vcmask 261120
        %v1030 = vsel %vm1028, %v1004, 0
        %v1033 = vsel %vm1028, %v1005, 0
        %v1036 = vsel %vm1028, %v1006, 0
        %v1039 = vsel %vm1028, %v1007, 0
        %v1042 = vsel %vm1028, %v1024, 0
        %v1045 = vsel %vm1028, %v1025, 0
        %v1048 = vsel %vm1028, %v1026, 0
        %v1051 = vsel %vm1028, %v1027, 0
        %1053 = vmatpush.bf16.xpose.msra.mxu0 0
        %1054 = vmatpush.bf16.xpose.msra.mxu0 0
        %1055 = vmatpush.bf16.xpose.msra.mxu0 0
        %1056 = vmatpush.bf16.xpose.msra.mxu0 0
        %1057 = vmatpush.bf16.xpose.msra.mxu0 %v1051
        %1058 = vmatpush.bf16.xpose.msra.mxu0 %v1048
        %1059 = vmatpush.bf16.xpose.msra.mxu0 %v1045
        %1060 = vmatpush.bf16.xpose.msra.mxu0 %v1042
        %1061 = vmatmul.bf16.gmra.mxu0 %v1030
        %v1062 = vpop.f32.mrf.mxu0
        %v1063 = vadd.f32 %v683, %v1062
        %v1064 = vpop.f32.mrf.mxu0
        %v1065 = vadd.f32 %v683, %v1064
        %1066 = vmatmul.bf16.gmra.mxu0 %v1033
        %v1067 = vpop.f32.mrf.mxu0
        %v1068 = vadd.f32 %v683, %v1067
        %v1069 = vpop.f32.mrf.mxu0
        %v1070 = vadd.f32 %v683, %v1069
        %1071 = vmatmul.bf16.gmra.mxu0 %v1036
        %v1072 = vpop.f32.mrf.mxu0
        %v1073 = vadd.f32 %v683, %v1072
        %v1074 = vpop.f32.mrf.mxu0
        %v1075 = vadd.f32 %v683, %v1074
        %1076 = vmatmul.bf16.gmra.mxu0 %v1039
        %v1077 = vpop.f32.mrf.mxu0
        %v1078 = vadd.f32 %v683, %v1077
        %v1079 = vpop.f32.mrf.mxu0
        %v1080 = vadd.f32 %v683, %v1079
        %1081 = vdwg.mxu0
        %vm1082 = vcmask 523264
        %v1083 = vsel %vm1082, %v1063, -inf
        %1084 = vmax.xlane.f32.xlu0 %v1083
        %v1085 = vpop.xlane.xlu0 %1084
        %v1086 = vsel %vm1082, %v1065, -inf
        %1087 = vmax.xlane.f32.xlu0 %v1086
        %v1088 = vpop.xlane.xlu0 %1087
        %v1089 = vsel %vm1082, %v1068, -inf
        %1090 = vmax.xlane.f32.xlu0 %v1089
        %v1091 = vpop.xlane.xlu0 %1090
        %v1092 = vsel %vm1082, %v1070, -inf
        %1093 = vmax.xlane.f32.xlu0 %v1092
        %v1094 = vpop.xlane.xlu0 %1093
        %v1095 = vsel %vm1082, %v1073, -inf
        %1096 = vmax.xlane.f32.xlu0 %v1095
        %v1097 = vpop.xlane.xlu0 %1096
        %v1098 = vsel %vm1082, %v1075, -inf
        %1099 = vmax.xlane.f32.xlu0 %v1098
        %v1100 = vpop.xlane.xlu0 %1099
        %v1101 = vsel %vm1082, %v1078, -inf
        %1102 = vmax.xlane.f32.xlu0 %v1101
        %v1103 = vpop.xlane.xlu0 %1102
        %v1104 = vsel %vm1082, %v1080, -inf
        %1105 = vmax.xlane.f32.xlu0 %v1104
        %v1106 = vpop.xlane.xlu0 %1105
        %v1107 = vsub.f32 %v1063, %v1085
        %v1108 = vsub.f32 %v1065, %v1088
        %v1109 = vsub.f32 %v1068, %v1091
        %v1110 = vsub.f32 %v1070, %v1094
        %v1111 = vsub.f32 %v1073, %v1097
        %v1112 = vsub.f32 %v1075, %v1100
        %v1113 = vsub.f32 %v1078, %v1103
        %v1114 = vsub.f32 %v1080, %v1106
        %v1115 = vmul.f32 %v1107, 1.442695
        %v1116 = vpow.pop %v1115
        %v1117 = vmul.f32 %v1108, 1.442695
        %v1118 = vpow.pop %v1117
        %v1119 = vmul.f32 %v1109, 1.442695
        %v1120 = vpow.pop %v1119
        %v1121 = vmul.f32 %v1110, 1.442695
        %v1122 = vpow.pop %v1121
        %v1123 = vmul.f32 %v1111, 1.442695
        %v1124 = vpow.pop %v1123
        %v1125 = vmul.f32 %v1112, 1.442695
        %v1126 = vpow.pop %v1125
        %v1127 = vmul.f32 %v1113, 1.442695
        %v1128 = vpow.pop %v1127
        %v1129 = vmul.f32 %v1114, 1.442695
        %v1130 = vpow.pop %v1129
        %v1131 = vsel %vm1082, %v1116, 0.0
        %1132 = vadd.xlane.f32.xlu0 %v1131
        %v1133 = vpop.xlane.xlu0 %1132
        %v1134 = vsel %vm1082, %v1118, 0.0
        %1135 = vadd.xlane.f32.xlu0 %v1134
        %v1136 = vpop.xlane.xlu0 %1135
        %v1137 = vsel %vm1082, %v1120, 0.0
        %1138 = vadd.xlane.f32.xlu0 %v1137
        %v1139 = vpop.xlane.xlu0 %1138
        %v1140 = vsel %vm1082, %v1122, 0.0
        %1141 = vadd.xlane.f32.xlu0 %v1140
        %v1142 = vpop.xlane.xlu0 %1141
        %v1143 = vsel %vm1082, %v1124, 0.0
        %1144 = vadd.xlane.f32.xlu0 %v1143
        %v1145 = vpop.xlane.xlu0 %1144
        %v1146 = vsel %vm1082, %v1126, 0.0
        %1147 = vadd.xlane.f32.xlu0 %v1146
        %v1148 = vpop.xlane.xlu0 %1147
        %v1149 = vsel %vm1082, %v1128, 0.0
        %1150 = vadd.xlane.f32.xlu0 %v1149
        %v1151 = vpop.xlane.xlu0 %1150
        %v1152 = vsel %vm1082, %v1130, 0.0
        %1153 = vadd.xlane.f32.xlu0 %v1152
        %v1154 = vpop.xlane.xlu0 %1153
        %v1155 = vrcp.pop %v1133
        %v1156 = vrcp.pop %v1136
        %v1157 = vrcp.pop %v1139
        %v1158 = vrcp.pop %v1142
        %v1159 = vrcp.pop %v1145
        %v1160 = vrcp.pop %v1148
        %v1161 = vrcp.pop %v1151
        %v1162 = vrcp.pop %v1154
        %v1163 = vmul.f32 %v1116, %v1155
        %v1164 = vmul.f32 %v1118, %v1156
        %v1165 = vmul.f32 %v1120, %v1157
        %v1166 = vmul.f32 %v1122, %v1158
        %v1167 = vmul.f32 %v1124, %v1159
        %v1168 = vmul.f32 %v1126, %v1160
        %v1169 = vmul.f32 %v1128, %v1161
        %v1170 = vmul.f32 %v1130, %v1162
        %v1171 = vpack.c.bf16 %v1164, %v1163
        %v1172 = vpack.c.bf16 %v1166, %v1165
        %v1173 = vpack.c.bf16 %v1168, %v1167
        %v1174 = vpack.c.bf16 %v1170, %v1169
        %v1183 = vunpack.c.l.b16 %v980
        %v1184 = vunpack.c.l.b16 %v981
        %v1185 = vunpack.c.l.b16 %v982
        %v1186 = vunpack.c.l.b16 %v983
        %v1187 = vunpack.c.l.b16 %v984
        %v1188 = vunpack.c.l.b16 %v985
        %v1189 = vunpack.c.l.b16 %v986
        %v1190 = vunpack.c.l.b16 %v987
        %v1191 = vpack.c.b16 %v1184, %v1183
        %v1192 = vpack.c.b16 %v1186, %v1185
        %v1193 = vpack.c.b16 %v1188, %v1187
        %v1194 = vpack.c.b16 %v1190, %v1189
        %v1200 = vsel %vm1082, %v1171, 0
        %v1203 = vsel %vm1082, %v1172, 0
        %v1206 = vsel %vm1082, %v1173, 0
        %v1209 = vsel %vm1082, %v1174, 0
        %1211 = vmatpush.bf16.msra.mxu0 0
        %1212 = vmatpush.bf16.msra.mxu0 0
        %1213 = vmatpush.bf16.msra.mxu0 0
        %1214 = vmatpush.bf16.msra.mxu0 0
        %1215 = vmatpush.bf16.msra.mxu0 %v1194
        %1216 = vmatpush.bf16.msra.mxu0 %v1193
        %1217 = vmatpush.bf16.msra.mxu0 %v1192
        %1218 = vmatpush.bf16.msra.mxu0 %v1191
        %1219 = vmatmul.bf16.gmra.mxu0 %v1200
        %v1220 = vpop.f32.mrf.mxu0
        %v1221 = vadd.f32 0.0, %v1220
        %v1222 = vpop.f32.mrf.mxu0
        %v1223 = vadd.f32 0.0, %v1222
        %1224 = vmatmul.bf16.gmra.mxu0 %v1203
        %v1225 = vpop.f32.mrf.mxu0
        %v1226 = vadd.f32 0.0, %v1225
        %v1227 = vpop.f32.mrf.mxu0
        %v1228 = vadd.f32 0.0, %v1227
        %1229 = vmatmul.bf16.gmra.mxu0 %v1206
        %v1230 = vpop.f32.mrf.mxu0
        %v1231 = vadd.f32 0.0, %v1230
        %v1232 = vpop.f32.mrf.mxu0
        %v1233 = vadd.f32 0.0, %v1232
        %1234 = vmatmul.bf16.gmra.mxu0 %v1209
        %v1235 = vpop.f32.mrf.mxu0
        %v1236 = vadd.f32 0.0, %v1235
        %v1237 = vpop.f32.mrf.mxu0
        %v1238 = vadd.f32 0.0, %v1237
        %1239 = vdwg.mxu0
        %v1240 = vpack.c.bf16 %v1221, %v1221
        %v1241 = vpack.c.bf16 %v1223, %v1223
        %v1242 = vpack.c.bf16 %v1226, %v1226
        %v1243 = vpack.c.bf16 %v1228, %v1228
        %v1244 = vpack.c.bf16 %v1231, %v1231
        %v1245 = vpack.c.bf16 %v1233, %v1233
        %v1246 = vpack.c.bf16 %v1236, %v1236
        %v1247 = vpack.c.bf16 %v1238, %v1238
        %vm1248 = vcmask 257024
        %1249 = vst.msk [vmem:[#allocation2] sm:$0xf] %vm1248, %v1240
        %1250 = vst.msk [vmem:[#allocation2 + $0x4] sm:$0xf] %vm1248, %v1241
        %1251 = vst.msk [vmem:[#allocation2 + $0x8] sm:$0xf] %vm1248, %v1242
        %1252 = vst.msk [vmem:[#allocation2 + $0xc] sm:$0xf] %vm1248, %v1243
        %1253 = vst.msk [vmem:[#allocation2 + $0x10] sm:$0xf] %vm1248, %v1244
        %1254 = vst.msk [vmem:[#allocation2 + $0x14] sm:$0xf] %vm1248, %v1245
        %1255 = vst.msk [vmem:[#allocation2 + $0x18] sm:$0xf] %vm1248, %v1246
        %1256 = vst.msk [vmem:[#allocation2 + $0x1c] sm:$0xf] %vm1248, %v1247
        %1257 = vrot.lane.b32.xlu0 %v1004, 96
        %v1258 = vpop.permute.xlu0 %1257
        %1259 = vrot.lane.b32.xlu0 %v1005, 96
        %v1260 = vpop.permute.xlu0 %1259
        %1261 = vrot.lane.b32.xlu0 %v1006, 96
        %v1262 = vpop.permute.xlu0 %1261
        %1263 = vrot.lane.b32.xlu0 %v1007, 96
        %v1264 = vpop.permute.xlu0 %1263
        %1265 = vrot.lane.b32.xlu0 %v1024, 96
        %v1266 = vpop.permute.xlu0 %1265
        %1267 = vrot.lane.b32.xlu0 %v1025, 96
        %v1268 = vpop.permute.xlu0 %1267
        %1269 = vrot.lane.b32.xlu0 %v1026, 96
        %v1270 = vpop.permute.xlu0 %1269
        %1271 = vrot.lane.b32.xlu0 %v1027, 96
        %v1272 = vpop.permute.xlu0 %1271
        %v1274 = vsel %vm1028, %v1258, 0
        %v1277 = vsel %vm1028, %v1260, 0
        %v1280 = vsel %vm1028, %v1262, 0
        %v1283 = vsel %vm1028, %v1264, 0
        %v1286 = vsel %vm1028, %v1266, 0
        %v1289 = vsel %vm1028, %v1268, 0
        %v1292 = vsel %vm1028, %v1270, 0
        %v1295 = vsel %vm1028, %v1272, 0
        %1297 = vmatpush.bf16.xpose.msra.mxu0 0
        %1298 = vmatpush.bf16.xpose.msra.mxu0 0
        %1299 = vmatpush.bf16.xpose.msra.mxu0 0
        %1300 = vmatpush.bf16.xpose.msra.mxu0 0
        %1301 = vmatpush.bf16.xpose.msra.mxu0 %v1295
        %1302 = vmatpush.bf16.xpose.msra.mxu0 %v1292
        %1303 = vmatpush.bf16.xpose.msra.mxu0 %v1289
        %1304 = vmatpush.bf16.xpose.msra.mxu0 %v1286
        %1305 = vmatmul.bf16.gmra.mxu0 %v1274
        %v1306 = vpop.f32.mrf.mxu0
        %v1307 = vadd.f32 %v683, %v1306
        %v1308 = vpop.f32.mrf.mxu0
        %v1309 = vadd.f32 %v683, %v1308
        %1310 = vmatmul.bf16.gmra.mxu0 %v1277
        %v1311 = vpop.f32.mrf.mxu0
        %v1312 = vadd.f32 %v683, %v1311
        %v1313 = vpop.f32.mrf.mxu0
        %v1314 = vadd.f32 %v683, %v1313
        %1315 = vmatmul.bf16.gmra.mxu0 %v1280
        %v1316 = vpop.f32.mrf.mxu0
        %v1317 = vadd.f32 %v683, %v1316
        %v1318 = vpop.f32.mrf.mxu0
        %v1319 = vadd.f32 %v683, %v1318
        %1320 = vmatmul.bf16.gmra.mxu0 %v1283
        %v1321 = vpop.f32.mrf.mxu0
        %v1322 = vadd.f32 %v683, %v1321
        %v1323 = vpop.f32.mrf.mxu0
        %v1324 = vadd.f32 %v683, %v1323
        %1325 = vdwg.mxu0
        %v1326 = vsel %vm1082, %v1307, -inf
        %1327 = vmax.xlane.f32.xlu0 %v1326
        %v1328 = vpop.xlane.xlu0 %1327
        %v1329 = vsel %vm1082, %v1309, -inf
        %1330 = vmax.xlane.f32.xlu0 %v1329
        %v1331 = vpop.xlane.xlu0 %1330
        %v1332 = vsel %vm1082, %v1312, -inf
        %1333 = vmax.xlane.f32.xlu0 %v1332
        %v1334 = vpop.xlane.xlu0 %1333
        %v1335 = vsel %vm1082, %v1314, -inf
        %1336 = vmax.xlane.f32.xlu0 %v1335
        %v1337 = vpop.xlane.xlu0 %1336
        %v1338 = vsel %vm1082, %v1317, -inf
        %1339 = vmax.xlane.f32.xlu0 %v1338
        %v1340 = vpop.xlane.xlu0 %1339
        %v1341 = vsel %vm1082, %v1319, -inf
        %1342 = vmax.xlane.f32.xlu0 %v1341
        %v1343 = vpop.xlane.xlu0 %1342
        %v1344 = vsel %vm1082, %v1322, -inf
        %1345 = vmax.xlane.f32.xlu0 %v1344
        %v1346 = vpop.xlane.xlu0 %1345
        %v1347 = vsel %vm1082, %v1324, -inf
        %1348 = vmax.xlane.f32.xlu0 %v1347
        %v1349 = vpop.xlane.xlu0 %1348
        %v1350 = vsub.f32 %v1307, %v1328
        %v1351 = vsub.f32 %v1309, %v1331
        %v1352 = vsub.f32 %v1312, %v1334
        %v1353 = vsub.f32 %v1314, %v1337
        %v1354 = vsub.f32 %v1317, %v1340
        %v1355 = vsub.f32 %v1319, %v1343
        %v1356 = vsub.f32 %v1322, %v1346
        %v1357 = vsub.f32 %v1324, %v1349
        %v1358 = vmul.f32 %v1350, 1.442695
        %v1359 = vpow.pop %v1358
        %v1360 = vmul.f32 %v1351, 1.442695
        %v1361 = vpow.pop %v1360
        %v1362 = vmul.f32 %v1352, 1.442695
        %v1363 = vpow.pop %v1362
        %v1364 = vmul.f32 %v1353, 1.442695
        %v1365 = vpow.pop %v1364
        %v1366 = vmul.f32 %v1354, 1.442695
        %v1367 = vpow.pop %v1366
        %v1368 = vmul.f32 %v1355, 1.442695
        %v1369 = vpow.pop %v1368
        %v1370 = vmul.f32 %v1356, 1.442695
        %v1371 = vpow.pop %v1370
        %v1372 = vmul.f32 %v1357, 1.442695
        %v1373 = vpow.pop %v1372
        %v1374 = vsel %vm1082, %v1359, 0.0
        %1375 = vadd.xlane.f32.xlu0 %v1374
        %v1376 = vpop.xlane.xlu0 %1375
        %v1377 = vsel %vm1082, %v1361, 0.0
        %1378 = vadd.xlane.f32.xlu0 %v1377
        %v1379 = vpop.xlane.xlu0 %1378
        %v1380 = vsel %vm1082, %v1363, 0.0
        %1381 = vadd.xlane.f32.xlu0 %v1380
        %v1382 = vpop.xlane.xlu0 %1381
        %v1383 = vsel %vm1082, %v1365, 0.0
        %1384 = vadd.xlane.f32.xlu0 %v1383
        %v1385 = vpop.xlane.xlu0 %1384
        %v1386 = vsel %vm1082, %v1367, 0.0
        %1387 = vadd.xlane.f32.xlu0 %v1386
        %v1388 = vpop.xlane.xlu0 %1387
        %v1389 = vsel %vm1082, %v1369, 0.0
        %1390 = vadd.xlane.f32.xlu0 %v1389
        %v1391 = vpop.xlane.xlu0 %1390
        %v1392 = vsel %vm1082, %v1371, 0.0
        %1393 = vadd.xlane.f32.xlu0 %v1392
        %v1394 = vpop.xlane.xlu0 %1393
        %v1395 = vsel %vm1082, %v1373, 0.0
        %1396 = vadd.xlane.f32.xlu0 %v1395
        %v1397 = vpop.xlane.xlu0 %1396
        %v1398 = vrcp.pop %v1376
        %v1399 = vrcp.pop %v1379
        %v1400 = vrcp.pop %v1382
        %v1401 = vrcp.pop %v1385
        %v1402 = vrcp.pop %v1388
        %v1403 = vrcp.pop %v1391
        %v1404 = vrcp.pop %v1394
        %v1405 = vrcp.pop %v1397
        %v1406 = vmul.f32 %v1359, %v1398
        %v1407 = vmul.f32 %v1361, %v1399
        %v1408 = vmul.f32 %v1363, %v1400
        %v1409 = vmul.f32 %v1365, %v1401
        %v1410 = vmul.f32 %v1367, %v1402
        %v1411 = vmul.f32 %v1369, %v1403
        %v1412 = vmul.f32 %v1371, %v1404
        %v1413 = vmul.f32 %v1373, %v1405
        %v1414 = vpack.c.bf16 %v1407, %v1406
        %v1415 = vpack.c.bf16 %v1409, %v1408
        %v1416 = vpack.c.bf16 %v1411, %v1410
        %v1417 = vpack.c.bf16 %v1413, %v1412
        %1418 = vrot.lane.b32.xlu0 %v1191, 96
        %v1419 = vpop.permute.xlu0 %1418
        %1420 = vrot.lane.b32.xlu0 %v1192, 96
        %v1421 = vpop.permute.xlu0 %1420
        %1422 = vrot.lane.b32.xlu0 %v1193, 96
        %v1423 = vpop.permute.xlu0 %1422
        %1424 = vrot.lane.b32.xlu0 %v1194, 96
        %v1425 = vpop.permute.xlu0 %1424
        %v1431 = vsel %vm1082, %v1414, 0
        %v1434 = vsel %vm1082, %v1415, 0
        %v1437 = vsel %vm1082, %v1416, 0
        %v1440 = vsel %vm1082, %v1417, 0
        %1442 = vmatpush.bf16.msra.mxu0 0
        %1443 = vmatpush.bf16.msra.mxu0 0
        %1444 = vmatpush.bf16.msra.mxu0 0
        %1445 = vmatpush.bf16.msra.mxu0 0
        %1446 = vmatpush.bf16.msra.mxu0 %v1425
        %1447 = vmatpush.bf16.msra.mxu0 %v1423
        %1448 = vmatpush.bf16.msra.mxu0 %v1421
        %1449 = vmatpush.bf16.msra.mxu0 %v1419
        %1450 = vmatmul.bf16.gmra.mxu0 %v1431
        %v1451 = vpop.f32.mrf.mxu0
        %v1452 = vadd.f32 0.0, %v1451
        %v1453 = vpop.f32.mrf.mxu0
        %v1454 = vadd.f32 0.0, %v1453
        %1455 = vmatmul.bf16.gmra.mxu0 %v1434
        %v1456 = vpop.f32.mrf.mxu0
        %v1457 = vadd.f32 0.0, %v1456
        %v1458 = vpop.f32.mrf.mxu0
        %v1459 = vadd.f32 0.0, %v1458
        %1460 = vmatmul.bf16.gmra.mxu0 %v1437
        %v1461 = vpop.f32.mrf.mxu0
        %v1462 = vadd.f32 0.0, %v1461
        %v1463 = vpop.f32.mrf.mxu0
        %v1464 = vadd.f32 0.0, %v1463
        %1465 = vmatmul.bf16.gmra.mxu0 %v1440
        %v1466 = vpop.f32.mrf.mxu0
        %v1467 = vadd.f32 0.0, %v1466
        %v1468 = vpop.f32.mrf.mxu0
        %v1469 = vadd.f32 0.0, %v1468
        %1470 = vdwg.mxu0
        %v1471 = vpack.c.bf16 %v1452, %v1452
        %v1472 = vpack.c.bf16 %v1454, %v1454
        %v1473 = vpack.c.bf16 %v1457, %v1457
        %v1474 = vpack.c.bf16 %v1459, %v1459
        %v1475 = vpack.c.bf16 %v1462, %v1462
        %v1476 = vpack.c.bf16 %v1464, %v1464
        %v1477 = vpack.c.bf16 %v1467, %v1467
        %v1478 = vpack.c.bf16 %v1469, %v1469
        %1487 = vrot.lane.b32.xlu0 %v1471, 32
        %v1488 = vpop.permute.xlu0 %1487
        %1489 = vrot.lane.b32.xlu0 %v1472, 32
        %v1490 = vpop.permute.xlu0 %1489
        %1491 = vrot.lane.b32.xlu0 %v1473, 32
        %v1492 = vpop.permute.xlu0 %1491
        %1493 = vrot.lane.b32.xlu0 %v1474, 32
        %v1494 = vpop.permute.xlu0 %1493
        %1495 = vrot.lane.b32.xlu0 %v1475, 32
        %v1496 = vpop.permute.xlu0 %1495
        %1497 = vrot.lane.b32.xlu0 %v1476, 32
        %v1498 = vpop.permute.xlu0 %1497
        %1499 = vrot.lane.b32.xlu0 %v1477, 32
        %v1500 = vpop.permute.xlu0 %1499
        %1501 = vrot.lane.b32.xlu0 %v1478, 32
        %v1502 = vpop.permute.xlu0 %1501
        %vm1511 = vcmask 519424
        %1512 = vst.msk [vmem:[#allocation2] sm:$0xf] %vm1511, %v1488
        %1513 = vst.msk [vmem:[#allocation2 + $0x4] sm:$0xf] %vm1511, %v1490
        %1514 = vst.msk [vmem:[#allocation2 + $0x8] sm:$0xf] %vm1511, %v1492
        %1515 = vst.msk [vmem:[#allocation2 + $0xc] sm:$0xf] %vm1511, %v1494
        %1516 = vst.msk [vmem:[#allocation2 + $0x10] sm:$0xf] %vm1511, %v1496
        %1517 = vst.msk [vmem:[#allocation2 + $0x14] sm:$0xf] %vm1511, %v1498
        %1518 = vst.msk [vmem:[#allocation2 + $0x18] sm:$0xf] %vm1511, %v1500
        %1519 = vst.msk [vmem:[#allocation2 + $0x1c] sm:$0xf] %vm1511, %v1502
        %1520 = vrot.lane.b32.xlu0 %v1004, 64
        %v1521 = vpop.permute.xlu0 %1520
        %1522 = vrot.lane.b32.xlu0 %v1005, 64
        %v1523 = vpop.permute.xlu0 %1522
        %1524 = vrot.lane.b32.xlu0 %v1006, 64
        %v1525 = vpop.permute.xlu0 %1524
        %1526 = vrot.lane.b32.xlu0 %v1007, 64
        %v1527 = vpop.permute.xlu0 %1526
        %1528 = vrot.lane.b32.xlu0 %v1024, 64
        %v1529 = vpop.permute.xlu0 %1528
        %1530 = vrot.lane.b32.xlu0 %v1025, 64
        %v1531 = vpop.permute.xlu0 %1530
        %1532 = vrot.lane.b32.xlu0 %v1026, 64
        %v1533 = vpop.permute.xlu0 %1532
        %1534 = vrot.lane.b32.xlu0 %v1027, 64
        %v1535 = vpop.permute.xlu0 %1534
        %v1537 = vsel %vm1028, %v1521, 0
        %v1540 = vsel %vm1028, %v1523, 0
        %v1543 = vsel %vm1028, %v1525, 0
        %v1546 = vsel %vm1028, %v1527, 0
        %v1549 = vsel %vm1028, %v1529, 0
        %v1552 = vsel %vm1028, %v1531, 0
        %v1555 = vsel %vm1028, %v1533, 0
        %v1558 = vsel %vm1028, %v1535, 0
        %1560 = vmatpush.bf16.xpose.msra.mxu0 0
        %1561 = vmatpush.bf16.xpose.msra.mxu0 0
        %1562 = vmatpush.bf16.xpose.msra.mxu0 0
        %1563 = vmatpush.bf16.xpose.msra.mxu0 0
        %1564 = vmatpush.bf16.xpose.msra.mxu0 %v1558
        %1565 = vmatpush.bf16.xpose.msra.mxu0 %v1555
        %1566 = vmatpush.bf16.xpose.msra.mxu0 %v1552
        %1567 = vmatpush.bf16.xpose.msra.mxu0 %v1549
        %1568 = vmatmul.bf16.gmra.mxu0 %v1537
        %v1569 = vpop.f32.mrf.mxu0
        %v1570 = vadd.f32 %v683, %v1569
        %v1571 = vpop.f32.mrf.mxu0
        %v1572 = vadd.f32 %v683, %v1571
        %1573 = vmatmul.bf16.gmra.mxu0 %v1540
        %v1574 = vpop.f32.mrf.mxu0
        %v1575 = vadd.f32 %v683, %v1574
        %v1576 = vpop.f32.mrf.mxu0
        %v1577 = vadd.f32 %v683, %v1576
        %1578 = vmatmul.bf16.gmra.mxu0 %v1543
        %v1579 = vpop.f32.mrf.mxu0
        %v1580 = vadd.f32 %v683, %v1579
        %v1581 = vpop.f32.mrf.mxu0
        %v1582 = vadd.f32 %v683, %v1581
        %1583 = vmatmul.bf16.gmra.mxu0 %v1546
        %v1584 = vpop.f32.mrf.mxu0
        %v1585 = vadd.f32 %v683, %v1584
        %v1586 = vpop.f32.mrf.mxu0
        %v1587 = vadd.f32 %v683, %v1586
        %1588 = vdwg.mxu0
        %v1589 = vsel %vm1082, %v1570, -inf
        %1590 = vmax.xlane.f32.xlu0 %v1589
        %v1591 = vpop.xlane.xlu0 %1590
        %v1592 = vsel %vm1082, %v1572, -inf
        %1593 = vmax.xlane.f32.xlu0 %v1592
        %v1594 = vpop.xlane.xlu0 %1593
        %v1595 = vsel %vm1082, %v1575, -inf
        %1596 = vmax.xlane.f32.xlu0 %v1595
        %v1597 = vpop.xlane.xlu0 %1596
        %v1598 = vsel %vm1082, %v1577, -inf
        %1599 = vmax.xlane.f32.xlu0 %v1598
        %v1600 = vpop.xlane.xlu0 %1599
        %v1601 = vsel %vm1082, %v1580, -inf
        %1602 = vmax.xlane.f32.xlu0 %v1601
        %v1603 = vpop.xlane.xlu0 %1602
        %v1604 = vsel %vm1082, %v1582, -inf
        %1605 = vmax.xlane.f32.xlu0 %v1604
        %v1606 = vpop.xlane.xlu0 %1605
        %v1607 = vsel %vm1082, %v1585, -inf
        %1608 = vmax.xlane.f32.xlu0 %v1607
        %v1609 = vpop.xlane.xlu0 %1608
        %v1610 = vsel %vm1082, %v1587, -inf
        %1611 = vmax.xlane.f32.xlu0 %v1610
        %v1612 = vpop.xlane.xlu0 %1611
        %v1613 = vsub.f32 %v1570, %v1591
        %v1614 = vsub.f32 %v1572, %v1594
        %v1615 = vsub.f32 %v1575, %v1597
        %v1616 = vsub.f32 %v1577, %v1600
        %v1617 = vsub.f32 %v1580, %v1603
        %v1618 = vsub.f32 %v1582, %v1606
        %v1619 = vsub.f32 %v1585, %v1609
        %v1620 = vsub.f32 %v1587, %v1612
        %v1621 = vmul.f32 %v1613, 1.442695
        %v1622 = vpow.pop %v1621
        %v1623 = vmul.f32 %v1614, 1.442695
        %v1624 = vpow.pop %v1623
        %v1625 = vmul.f32 %v1615, 1.442695
        %v1626 = vpow.pop %v1625
        %v1627 = vmul.f32 %v1616, 1.442695
        %v1628 = vpow.pop %v1627
        %v1629 = vmul.f32 %v1617, 1.442695
        %v1630 = vpow.pop %v1629
        %v1631 = vmul.f32 %v1618, 1.442695
        %v1632 = vpow.pop %v1631
        %v1633 = vmul.f32 %v1619, 1.442695
        %v1634 = vpow.pop %v1633
        %v1635 = vmul.f32 %v1620, 1.442695
        %v1636 = vpow.pop %v1635
        %v1637 = vsel %vm1082, %v1622, 0.0
        %1638 = vadd.xlane.f32.xlu0 %v1637
        %v1639 = vpop.xlane.xlu0 %1638
        %v1640 = vsel %vm1082, %v1624, 0.0
        %1641 = vadd.xlane.f32.xlu0 %v1640
        %v1642 = vpop.xlane.xlu0 %1641
        %v1643 = vsel %vm1082, %v1626, 0.0
        %1644 = vadd.xlane.f32.xlu0 %v1643
        %v1645 = vpop.xlane.xlu0 %1644
        %v1646 = vsel %vm1082, %v1628, 0.0
        %1647 = vadd.xlane.f32.xlu0 %v1646
        %v1648 = vpop.xlane.xlu0 %1647
        %v1649 = vsel %vm1082, %v1630, 0.0
        %1650 = vadd.xlane.f32.xlu0 %v1649
        %v1651 = vpop.xlane.xlu0 %1650
        %v1652 = vsel %vm1082, %v1632, 0.0
        %1653 = vadd.xlane.f32.xlu0 %v1652
        %v1654 = vpop.xlane.xlu0 %1653
        %v1655 = vsel %vm1082, %v1634, 0.0
        %1656 = vadd.xlane.f32.xlu0 %v1655
        %v1657 = vpop.xlane.xlu0 %1656
        %v1658 = vsel %vm1082, %v1636, 0.0
        %1659 = vadd.xlane.f32.xlu0 %v1658
        %v1660 = vpop.xlane.xlu0 %1659
        %v1661 = vrcp.pop %v1639
        %v1662 = vrcp.pop %v1642
        %v1663 = vrcp.pop %v1645
        %v1664 = vrcp.pop %v1648
        %v1665 = vrcp.pop %v1651
        %v1666 = vrcp.pop %v1654
        %v1667 = vrcp.pop %v1657
        %v1668 = vrcp.pop %v1660
        %v1669 = vmul.f32 %v1622, %v1661
        %v1670 = vmul.f32 %v1624, %v1662
        %v1671 = vmul.f32 %v1626, %v1663
        %v1672 = vmul.f32 %v1628, %v1664
        %v1673 = vmul.f32 %v1630, %v1665
        %v1674 = vmul.f32 %v1632, %v1666
        %v1675 = vmul.f32 %v1634, %v1667
        %v1676 = vmul.f32 %v1636, %v1668
        %v1677 = vpack.c.bf16 %v1670, %v1669
        %v1678 = vpack.c.bf16 %v1672, %v1671
        %v1679 = vpack.c.bf16 %v1674, %v1673
        %v1680 = vpack.c.bf16 %v1676, %v1675
        %1681 = vrot.lane.b32.xlu0 %v1191, 64
        %v1682 = vpop.permute.xlu0 %1681
        %1683 = vrot.lane.b32.xlu0 %v1192, 64
        %v1684 = vpop.permute.xlu0 %1683
        %1685 = vrot.lane.b32.xlu0 %v1193, 64
        %v1686 = vpop.permute.xlu0 %1685
        %1687 = vrot.lane.b32.xlu0 %v1194, 64
        %v1688 = vpop.permute.xlu0 %1687
        %v1694 = vsel %vm1082, %v1677, 0
        %v1697 = vsel %vm1082, %v1678, 0
        %v1700 = vsel %vm1082, %v1679, 0
        %v1703 = vsel %vm1082, %v1680, 0
        %1705 = vmatpush.bf16.msra.mxu0 0
        %1706 = vmatpush.bf16.msra.mxu0 0
        %1707 = vmatpush.bf16.msra.mxu0 0
        %1708 = vmatpush.bf16.msra.mxu0 0
        %1709 = vmatpush.bf16.msra.mxu0 %v1688
        %1710 = vmatpush.bf16.msra.mxu0 %v1686
        %1711 = vmatpush.bf16.msra.mxu0 %v1684
        %1712 = vmatpush.bf16.msra.mxu0 %v1682
        %1713 = vmatmul.bf16.gmra.mxu0 %v1694
        %v1714 = vpop.f32.mrf.mxu0
        %v1715 = vadd.f32 0.0, %v1714
        %v1716 = vpop.f32.mrf.mxu0
        %v1717 = vadd.f32 0.0, %v1716
        %1718 = vmatmul.bf16.gmra.mxu0 %v1697
        %v1719 = vpop.f32.mrf.mxu0
        %v1720 = vadd.f32 0.0, %v1719
        %v1721 = vpop.f32.mrf.mxu0
        %v1722 = vadd.f32 0.0, %v1721
        %1723 = vmatmul.bf16.gmra.mxu0 %v1700
        %v1724 = vpop.f32.mrf.mxu0
        %v1725 = vadd.f32 0.0, %v1724
        %v1726 = vpop.f32.mrf.mxu0
        %v1727 = vadd.f32 0.0, %v1726
        %1728 = vmatmul.bf16.gmra.mxu0 %v1703
        %v1729 = vpop.f32.mrf.mxu0
        %v1730 = vadd.f32 0.0, %v1729
        %v1731 = vpop.f32.mrf.mxu0
        %v1732 = vadd.f32 0.0, %v1731
        %1733 = vdwg.mxu0
        %v1734 = vpack.c.bf16 %v1715, %v1715
        %v1735 = vpack.c.bf16 %v1717, %v1717
        %v1736 = vpack.c.bf16 %v1720, %v1720
        %v1737 = vpack.c.bf16 %v1722, %v1722
        %v1738 = vpack.c.bf16 %v1725, %v1725
        %v1739 = vpack.c.bf16 %v1727, %v1727
        %v1740 = vpack.c.bf16 %v1730, %v1730
        %v1741 = vpack.c.bf16 %v1732, %v1732
        %1750 = vrot.lane.b32.xlu0 %v1734, 64
        %v1751 = vpop.permute.xlu0 %1750
        %1752 = vrot.lane.b32.xlu0 %v1735, 64
        %v1753 = vpop.permute.xlu0 %1752
        %1754 = vrot.lane.b32.xlu0 %v1736, 64
        %v1755 = vpop.permute.xlu0 %1754
        %1756 = vrot.lane.b32.xlu0 %v1737, 64
        %v1757 = vpop.permute.xlu0 %1756
        %1758 = vrot.lane.b32.xlu0 %v1738, 64
        %v1759 = vpop.permute.xlu0 %1758
        %1760 = vrot.lane.b32.xlu0 %v1739, 64
        %v1761 = vpop.permute.xlu0 %1760
        %1762 = vrot.lane.b32.xlu0 %v1740, 64
        %v1763 = vpop.permute.xlu0 %1762
        %1764 = vrot.lane.b32.xlu0 %v1741, 64
        %v1765 = vpop.permute.xlu0 %1764
        %vm1774 = vcmask 781824
        %1775 = vst.msk [vmem:[#allocation2] sm:$0xf] %vm1774, %v1751
        %1776 = vst.msk [vmem:[#allocation2 + $0x4] sm:$0xf] %vm1774, %v1753
        %1777 = vst.msk [vmem:[#allocation2 + $0x8] sm:$0xf] %vm1774, %v1755
        %1778 = vst.msk [vmem:[#allocation2 + $0xc] sm:$0xf] %vm1774, %v1757
        %1779 = vst.msk [vmem:[#allocation2 + $0x10] sm:$0xf] %vm1774, %v1759
        %1780 = vst.msk [vmem:[#allocation2 + $0x14] sm:$0xf] %vm1774, %v1761
        %1781 = vst.msk [vmem:[#allocation2 + $0x18] sm:$0xf] %vm1774, %v1763
        %1782 = vst.msk [vmem:[#allocation2 + $0x1c] sm:$0xf] %vm1774, %v1765
        %1783 = vrot.lane.b32.xlu0 %v1004, 32
        %v1784 = vpop.permute.xlu0 %1783
        %1785 = vrot.lane.b32.xlu0 %v1005, 32
        %v1786 = vpop.permute.xlu0 %1785
        %1787 = vrot.lane.b32.xlu0 %v1006, 32
        %v1788 = vpop.permute.xlu0 %1787
        %1789 = vrot.lane.b32.xlu0 %v1007, 32
        %v1790 = vpop.permute.xlu0 %1789
        %1791 = vrot.lane.b32.xlu0 %v1024, 32
        %v1792 = vpop.permute.xlu0 %1791
        %1793 = vrot.lane.b32.xlu0 %v1025, 32
        %v1794 = vpop.permute.xlu0 %1793
        %1795 = vrot.lane.b32.xlu0 %v1026, 32
        %v1796 = vpop.permute.xlu0 %1795
        %1797 = vrot.lane.b32.xlu0 %v1027, 32
        %v1798 = vpop.permute.xlu0 %1797
        %v1800 = vsel %vm1028, %v1784, 0
        %v1803 = vsel %vm1028, %v1786, 0
        %v1806 = vsel %vm1028, %v1788, 0
        %v1809 = vsel %vm1028, %v1790, 0
        %v1812 = vsel %vm1028, %v1792, 0
        %v1815 = vsel %vm1028, %v1794, 0
        %v1818 = vsel %vm1028, %v1796, 0
        %v1821 = vsel %vm1028, %v1798, 0
        %1823 = vmatpush.bf16.xpose.msra.mxu0 0
        %1824 = vmatpush.bf16.xpose.msra.mxu0 0
        %1825 = vmatpush.bf16.xpose.msra.mxu0 0
        %1826 = vmatpush.bf16.xpose.msra.mxu0 0
        %1827 = vmatpush.bf16.xpose.msra.mxu0 %v1821
        %1828 = vmatpush.bf16.xpose.msra.mxu0 %v1818
        %1829 = vmatpush.bf16.xpose.msra.mxu0 %v1815
        %1830 = vmatpush.bf16.xpose.msra.mxu0 %v1812
        %1831 = vmatmul.bf16.gmra.mxu0 %v1800
        %v1832 = vpop.f32.mrf.mxu0
        %v1833 = vadd.f32 %v683, %v1832
        %v1834 = vpop.f32.mrf.mxu0
        %v1835 = vadd.f32 %v683, %v1834
        %1836 = vmatmul.bf16.gmra.mxu0 %v1803
        %v1837 = vpop.f32.mrf.mxu0
        %v1838 = vadd.f32 %v683, %v1837
        %v1839 = vpop.f32.mrf.mxu0
        %v1840 = vadd.f32 %v683, %v1839
        %1841 = vmatmul.bf16.gmra.mxu0 %v1806
        %v1842 = vpop.f32.mrf.mxu0
        %v1843 = vadd.f32 %v683, %v1842
        %v1844 = vpop.f32.mrf.mxu0
        %v1845 = vadd.f32 %v683, %v1844
        %1846 = vmatmul.bf16.gmra.mxu0 %v1809
        %v1847 = vpop.f32.mrf.mxu0
        %v1848 = vadd.f32 %v683, %v1847
        %v1849 = vpop.f32.mrf.mxu0
        %v1850 = vadd.f32 %v683, %v1849
        %1851 = vdwg.mxu0
        %v1852 = vsel %vm1082, %v1833, -inf
        %1853 = vmax.xlane.f32.xlu0 %v1852
        %v1854 = vpop.xlane.xlu0 %1853
        %v1855 = vsel %vm1082, %v1835, -inf
        %1856 = vmax.xlane.f32.xlu0 %v1855
        %v1857 = vpop.xlane.xlu0 %1856
        %v1858 = vsel %vm1082, %v1838, -inf
        %1859 = vmax.xlane.f32.xlu0 %v1858
        %v1860 = vpop.xlane.xlu0 %1859
        %v1861 = vsel %vm1082, %v1840, -inf
        %1862 = vmax.xlane.f32.xlu0 %v1861
        %v1863 = vpop.xlane.xlu0 %1862
        %v1864 = vsel %vm1082, %v1843, -inf
        %1865 = vmax.xlane.f32.xlu0 %v1864
        %v1866 = vpop.xlane.xlu0 %1865
        %v1867 = vsel %vm1082, %v1845, -inf
        %1868 = vmax.xlane.f32.xlu0 %v1867
        %v1869 = vpop.xlane.xlu0 %1868
        %v1870 = vsel %vm1082, %v1848, -inf
        %1871 = vmax.xlane.f32.xlu0 %v1870
        %v1872 = vpop.xlane.xlu0 %1871
        %v1873 = vsel %vm1082, %v1850, -inf
        %1874 = vmax.xlane.f32.xlu0 %v1873
        %v1875 = vpop.xlane.xlu0 %1874
        %v1876 = vsub.f32 %v1833, %v1854
        %v1877 = vsub.f32 %v1835, %v1857
        %v1878 = vsub.f32 %v1838, %v1860
        %v1879 = vsub.f32 %v1840, %v1863
        %v1880 = vsub.f32 %v1843, %v1866
        %v1881 = vsub.f32 %v1845, %v1869
        %v1882 = vsub.f32 %v1848, %v1872
        %v1883 = vsub.f32 %v1850, %v1875
        %v1884 = vmul.f32 %v1876, 1.442695
        %v1885 = vpow.pop %v1884
        %v1886 = vmul.f32 %v1877, 1.442695
        %v1887 = vpow.pop %v1886
        %v1888 = vmul.f32 %v1878, 1.442695
        %v1889 = vpow.pop %v1888
        %v1890 = vmul.f32 %v1879, 1.442695
        %v1891 = vpow.pop %v1890
        %v1892 = vmul.f32 %v1880, 1.442695
        %v1893 = vpow.pop %v1892
        %v1894 = vmul.f32 %v1881, 1.442695
        %v1895 = vpow.pop %v1894
        %v1896 = vmul.f32 %v1882, 1.442695
        %v1897 = vpow.pop %v1896
        %v1898 = vmul.f32 %v1883, 1.442695
        %v1899 = vpow.pop %v1898
        %v1900 = vsel %vm1082, %v1885, 0.0
        %1901 = vadd.xlane.f32.xlu0 %v1900
        %v1902 = vpop.xlane.xlu0 %1901
        %v1903 = vsel %vm1082, %v1887, 0.0
        %1904 = vadd.xlane.f32.xlu0 %v1903
        %v1905 = vpop.xlane.xlu0 %1904
        %v1906 = vsel %vm1082, %v1889, 0.0
        %1907 = vadd.xlane.f32.xlu0 %v1906
        %v1908 = vpop.xlane.xlu0 %1907
        %v1909 = vsel %vm1082, %v1891, 0.0
        %1910 = vadd.xlane.f32.xlu0 %v1909
        %v1911 = vpop.xlane.xlu0 %1910
        %v1912 = vsel %vm1082, %v1893, 0.0
        %1913 = vadd.xlane.f32.xlu0 %v1912
        %v1914 = vpop.xlane.xlu0 %1913
        %v1915 = vsel %vm1082, %v1895, 0.0
        %1916 = vadd.xlane.f32.xlu0 %v1915
        %v1917 = vpop.xlane.xlu0 %1916
        %v1918 = vsel %vm1082, %v1897, 0.0
        %1919 = vadd.xlane.f32.xlu0 %v1918
        %v1920 = vpop.xlane.xlu0 %1919
        %v1921 = vsel %vm1082, %v1899, 0.0
        %1922 = vadd.xlane.f32.xlu0 %v1921
        %v1923 = vpop.xlane.xlu0 %1922
        %v1924 = vrcp.pop %v1902
        %v1925 = vrcp.pop %v1905
        %v1926 = vrcp.pop %v1908
        %v1927 = vrcp.pop %v1911
        %v1928 = vrcp.pop %v1914
        %v1929 = vrcp.pop %v1917
        %v1930 = vrcp.pop %v1920
        %v1931 = vrcp.pop %v1923
        %v1932 = vmul.f32 %v1885, %v1924
        %v1933 = vmul.f32 %v1887, %v1925
        %v1934 = vmul.f32 %v1889, %v1926
        %v1935 = vmul.f32 %v1891, %v1927
        %v1936 = vmul.f32 %v1893, %v1928
        %v1937 = vmul.f32 %v1895, %v1929
        %v1938 = vmul.f32 %v1897, %v1930
        %v1939 = vmul.f32 %v1899, %v1931
        %v1940 = vpack.c.bf16 %v1933, %v1932
        %v1941 = vpack.c.bf16 %v1935, %v1934
        %v1942 = vpack.c.bf16 %v1937, %v1936
        %v1943 = vpack.c.bf16 %v1939, %v1938
        %1944 = vrot.lane.b32.xlu0 %v1191, 32
        %v1945 = vpop.permute.xlu0 %1944
        %1946 = vrot.lane.b32.xlu0 %v1192, 32
        %v1947 = vpop.permute.xlu0 %1946
        %1948 = vrot.lane.b32.xlu0 %v1193, 32
        %v1949 = vpop.permute.xlu0 %1948
        %1950 = vrot.lane.b32.xlu0 %v1194, 32
        %v1951 = vpop.permute.xlu0 %1950
        %v1957 = vsel %vm1082, %v1940, 0
        %v1960 = vsel %vm1082, %v1941, 0
        %v1963 = vsel %vm1082, %v1942, 0
        %v1966 = vsel %vm1082, %v1943, 0
        %1968 = vmatpush.bf16.msra.mxu0 0
        %1969 = vmatpush.bf16.msra.mxu0 0
        %1970 = vmatpush.bf16.msra.mxu0 0
        %1971 = vmatpush.bf16.msra.mxu0 0
        %1972 = vmatpush.bf16.msra.mxu0 %v1951
        %1973 = vmatpush.bf16.msra.mxu0 %v1949
        %1974 = vmatpush.bf16.msra.mxu0 %v1947
        %1975 = vmatpush.bf16.msra.mxu0 %v1945
        %1976 = vmatmul.bf16.gmra.mxu0 %v1957
        %v1977 = vpop.f32.mrf.mxu0
        %v1978 = vadd.f32 0.0, %v1977
        %v1979 = vpop.f32.mrf.mxu0
        %v1980 = vadd.f32 0.0, %v1979
        %1981 = vmatmul.bf16.gmra.mxu0 %v1960
        %v1982 = vpop.f32.mrf.mxu0
        %v1983 = vadd.f32 0.0, %v1982
        %v1984 = vpop.f32.mrf.mxu0
        %v1985 = vadd.f32 0.0, %v1984
        %1986 = vmatmul.bf16.gmra.mxu0 %v1963
        %v1987 = vpop.f32.mrf.mxu0
        %v1988 = vadd.f32 0.0, %v1987
        %v1989 = vpop.f32.mrf.mxu0
        %v1990 = vadd.f32 0.0, %v1989
        %1991 = vmatmul.bf16.gmra.mxu0 %v1966
        %v1992 = vpop.f32.mrf.mxu0
        %v1993 = vadd.f32 0.0, %v1992
        %v1994 = vpop.f32.mrf.mxu0
        %v1995 = vadd.f32 0.0, %v1994
        %1996 = vdwg.mxu0
        %v1997 = vpack.c.bf16 %v1978, %v1978
        %v1998 = vpack.c.bf16 %v1980, %v1980
        %v1999 = vpack.c.bf16 %v1983, %v1983
        %v2000 = vpack.c.bf16 %v1985, %v1985
        %v2001 = vpack.c.bf16 %v1988, %v1988
        %v2002 = vpack.c.bf16 %v1990, %v1990
        %v2003 = vpack.c.bf16 %v1993, %v1993
        %v2004 = vpack.c.bf16 %v1995, %v1995
        %2013 = vrot.lane.b32.xlu0 %v1997, 96
        %v2014 = vpop.permute.xlu0 %2013
        %2015 = vrot.lane.b32.xlu0 %v1998, 96
        %v2016 = vpop.permute.xlu0 %2015
        %2017 = vrot.lane.b32.xlu0 %v1999, 96
        %v2018 = vpop.permute.xlu0 %2017
        %2019 = vrot.lane.b32.xlu0 %v2000, 96
        %v2020 = vpop.permute.xlu0 %2019
        %2021 = vrot.lane.b32.xlu0 %v2001, 96
        %v2022 = vpop.permute.xlu0 %2021
        %2023 = vrot.lane.b32.xlu0 %v2002, 96
        %v2024 = vpop.permute.xlu0 %2023
        %2025 = vrot.lane.b32.xlu0 %v2003, 96
        %v2026 = vpop.permute.xlu0 %2025
        %2027 = vrot.lane.b32.xlu0 %v2004, 96
        %v2028 = vpop.permute.xlu0 %2027
        %vm2037 = vcmask 1044224
        %2038 = vst.msk [vmem:[#allocation2] sm:$0xf] %vm2037, %v2014
        %2039 = vst.msk [vmem:[#allocation2 + $0x4] sm:$0xf] %vm2037, %v2016
        %2040 = vst.msk [vmem:[#allocation2 + $0x8] sm:$0xf] %vm2037, %v2018
        %2041 = vst.msk [vmem:[#allocation2 + $0xc] sm:$0xf] %vm2037, %v2020
        %2042 = vst.msk [vmem:[#allocation2 + $0x10] sm:$0xf] %vm2037, %v2022
        %2043 = vst.msk [vmem:[#allocation2 + $0x14] sm:$0xf] %vm2037, %v2024
        %2044 = vst.msk [vmem:[#allocation2 + $0x18] sm:$0xf] %vm2037, %v2026
        %2045 = vst.msk [vmem:[#allocation2 + $0x1c] sm:$0xf] %vm2037, %v2028
        %v2046 = vld [vmem:[#allocation2] sm:$0xf]
        %v2047 = vld [vmem:[#allocation2 + $0x4] sm:$0xf]
        %v2048 = vld [vmem:[#allocation2 + $0x8] sm:$0xf]
        %v2049 = vld [vmem:[#allocation2 + $0xc] sm:$0xf]
        %v2050 = vld [vmem:[#allocation2 + $0x10] sm:$0xf]
        %v2051 = vld [vmem:[#allocation2 + $0x14] sm:$0xf]
        %v2052 = vld [vmem:[#allocation2 + $0x18] sm:$0xf]
        %v2053 = vld [vmem:[#allocation2 + $0x1c] sm:$0xf]
        %v2054 = vld [vmem:[%s4] sm:$0xf]
        %v2055 = vld [vmem:[%s4 + $0x4] sm:$0xf]
        %v2056 = vld [vmem:[%s4 + $0x8] sm:$0xf]
        %v2057 = vld [vmem:[%s4 + $0xc] sm:$0xf]
        %v2058 = vld [vmem:[%s4 + $0x10] sm:$0xf]
        %v2059 = vld [vmem:[%s4 + $0x14] sm:$0xf]
        %v2060 = vld [vmem:[%s4 + $0x18] sm:$0xf]
        %v2061 = vld [vmem:[%s4 + $0x1c] sm:$0xf]
        %v2062 = vld [vmem:[%s4 + $0x20] sm:$0xf]
        %v2063 = vld [vmem:[%s4 + $0x24] sm:$0xf]
        %v2064 = vld [vmem:[%s4 + $0x28] sm:$0xf]
        %v2065 = vld [vmem:[%s4 + $0x2c] sm:$0xf]
        %v2066 = vld [vmem:[%s4 + $0x30] sm:$0xf]
        %v2067 = vld [vmem:[%s4 + $0x34] sm:$0xf]
        %v2068 = vld [vmem:[%s4 + $0x38] sm:$0xf]
        %v2069 = vld [vmem:[%s4 + $0x3c] sm:$0xf]
        %v2070 = vperm.slane %v684, 3
        %v2079 = vunpack.c.l.b16 %v2046
        %v2080 = vunpack.c.l.b16 %v2047
        %v2081 = vunpack.c.l.b16 %v2048
        %v2082 = vunpack.c.l.b16 %v2049
        %v2083 = vunpack.c.l.b16 %v2050
        %v2084 = vunpack.c.l.b16 %v2051
        %v2085 = vunpack.c.l.b16 %v2052
        %v2086 = vunpack.c.l.b16 %v2053
        %v2087 = vpack.c.b16 %v2080, %v2079
        %v2088 = vpack.c.b16 %v2082, %v2081
        %v2089 = vpack.c.b16 %v2084, %v2083
        %v2090 = vpack.c.b16 %v2086, %v2085
        %v2111 = vunpack.c.l.b16 %v2054
        %v2112 = vunpack.c.l.b16 %v2055
        %v2113 = vunpack.c.l.b16 %v2056
        %v2114 = vunpack.c.l.b16 %v2057
        %v2115 = vunpack.c.l.b16 %v2058
        %v2116 = vunpack.c.l.b16 %v2059
        %v2117 = vunpack.c.l.b16 %v2060
        %v2118 = vunpack.c.l.b16 %v2061
        %v2119 = vunpack.c.l.b16 %v2062
        %v2120 = vunpack.c.l.b16 %v2063
        %v2121 = vunpack.c.l.b16 %v2064
        %v2122 = vunpack.c.l.b16 %v2065
        %v2123 = vunpack.c.l.b16 %v2066
        %v2124 = vunpack.c.l.b16 %v2067
        %v2125 = vunpack.c.l.b16 %v2068
        %v2126 = vunpack.c.l.b16 %v2069
        %v2127 = vpack.c.b16 %v2112, %v2111
        %v2128 = vpack.c.b16 %v2114, %v2113
        %v2129 = vpack.c.b16 %v2116, %v2115
        %v2130 = vpack.c.b16 %v2118, %v2117
        %v2131 = vpack.c.b16 %v2120, %v2119
        %v2132 = vpack.c.b16 %v2122, %v2121
        %v2133 = vpack.c.b16 %v2124, %v2123
        %v2134 = vpack.c.b16 %v2126, %v2125
        %2143 = vmatpush.bf16.msra.mxu0 %v2134
        %2144 = vmatpush.bf16.msra.mxu0 %v2133
        %2145 = vmatpush.bf16.msra.mxu0 %v2132
        %2146 = vmatpush.bf16.msra.mxu0 %v2131
        %2147 = vmatpush.bf16.msra.mxu0 %v2130
        %2148 = vmatpush.bf16.msra.mxu0 %v2129
        %2149 = vmatpush.bf16.msra.mxu0 %v2128
        %2150 = vmatpush.bf16.msra.mxu0 %v2127
        %2151 = vmatmul.bf16.gmra.mxu0 %v2087
        %v2152 = vpop.f32.mrf.mxu0
        %v2153 = vadd.f32 %v2070, %v2152
        %v2154 = vpop.f32.mrf.mxu0
        %v2155 = vadd.f32 %v2070, %v2154
        %2156 = vmatmul.bf16.gmra.mxu0 %v2088
        %v2157 = vpop.f32.mrf.mxu0
        %v2158 = vadd.f32 %v2070, %v2157
        %v2159 = vpop.f32.mrf.mxu0
        %v2160 = vadd.f32 %v2070, %v2159
        %2161 = vmatmul.bf16.gmra.mxu0 %v2089
        %v2162 = vpop.f32.mrf.mxu0
        %v2163 = vadd.f32 %v2070, %v2162
        %v2164 = vpop.f32.mrf.mxu0
        %v2165 = vadd.f32 %v2070, %v2164
        %2166 = vmatmul.bf16.gmra.mxu0 %v2090
        %v2167 = vpop.f32.mrf.mxu0
        %v2168 = vadd.f32 %v2070, %v2167
        %v2169 = vpop.f32.mrf.mxu0
        %v2170 = vadd.f32 %v2070, %v2169
        %2171 = vdwg.mxu0
        %v2172 = vadd.f32 %v672, %v2153
        %v2173 = vadd.f32 %v673, %v2155
        %v2174 = vadd.f32 %v674, %v2158
        %v2175 = vadd.f32 %v675, %v2160
        %v2176 = vadd.f32 %v676, %v2163
        %v2177 = vadd.f32 %v677, %v2165
        %v2178 = vadd.f32 %v678, %v2168
        %v2179 = vadd.f32 %v679, %v2170
        %2180 = vadd.xlane.f32.xlu0 %v2172
        %v2181 = vpop.xlane.xlu0 %2180
        %2182 = vadd.xlane.f32.xlu0 %v2173
        %v2183 = vpop.xlane.xlu0 %2182
        %2184 = vadd.xlane.f32.xlu0 %v2174
        %v2185 = vpop.xlane.xlu0 %2184
        %2186 = vadd.xlane.f32.xlu0 %v2175
        %v2187 = vpop.xlane.xlu0 %2186
        %2188 = vadd.xlane.f32.xlu0 %v2176
        %v2189 = vpop.xlane.xlu0 %2188
        %2190 = vadd.xlane.f32.xlu0 %v2177
        %v2191 = vpop.xlane.xlu0 %2190
        %2192 = vadd.xlane.f32.xlu0 %v2178
        %v2193 = vpop.xlane.xlu0 %2192
        %2194 = vadd.xlane.f32.xlu0 %v2179
        %v2195 = vpop.xlane.xlu0 %2194
        %v2196 = vrcp.pop 128.0
        %v2197 = vmul.f32 128.0, %v2196
        %v2198 = vsub.f32 1.0, %v2197
        %v2199 = vmul.f32 %v2196, %v2198
        %v2200 = vadd.f32 %v2196, %v2199
        %vm2201 = vweird.f32 %v2196
        %v2202 = vsel %vm2201, %v2196, %v2200
        %v2203 = vmul.f32 %v2181, %v2202
        %v2204 = vmul.f32 %v2183, %v2202
        %v2205 = vmul.f32 %v2185, %v2202
        %v2206 = vmul.f32 %v2187, %v2202
        %v2207 = vmul.f32 %v2189, %v2202
        %v2208 = vmul.f32 %v2191, %v2202
        %v2209 = vmul.f32 %v2193, %v2202
        %v2210 = vmul.f32 %v2195, %v2202
        %v2211 = vsub.f32 %v2172, %v2203
        %v2212 = vsub.f32 %v2173, %v2204
        %v2213 = vsub.f32 %v2174, %v2205
        %v2214 = vsub.f32 %v2175, %v2206
        %v2215 = vsub.f32 %v2176, %v2207
        %v2216 = vsub.f32 %v2177, %v2208
        %v2217 = vsub.f32 %v2178, %v2209
        %v2218 = vsub.f32 %v2179, %v2210
        %v2219 = vmul.f32 %v2211, %v2211
        %v2220 = vmul.f32 %v2212, %v2212
        %v2221 = vmul.f32 %v2213, %v2213
        %v2222 = vmul.f32 %v2214, %v2214
        %v2223 = vmul.f32 %v2215, %v2215
        %v2224 = vmul.f32 %v2216, %v2216
        %v2225 = vmul.f32 %v2217, %v2217
        %v2226 = vmul.f32 %v2218, %v2218
        %2227 = vadd.xlane.f32.xlu0 %v2219
        %v2228 = vpop.xlane.xlu0 %2227
        %2229 = vadd.xlane.f32.xlu0 %v2220
        %v2230 = vpop.xlane.xlu0 %2229
        %2231 = vadd.xlane.f32.xlu0 %v2221
        %v2232 = vpop.xlane.xlu0 %2231
        %2233 = vadd.xlane.f32.xlu0 %v2222
        %v2234 = vpop.xlane.xlu0 %2233
        %2235 = vadd.xlane.f32.xlu0 %v2223
        %v2236 = vpop.xlane.xlu0 %2235
        %2237 = vadd.xlane.f32.xlu0 %v2224
        %v2238 = vpop.xlane.xlu0 %2237
        %2239 = vadd.xlane.f32.xlu0 %v2225
        %v2240 = vpop.xlane.xlu0 %2239
        %2241 = vadd.xlane.f32.xlu0 %v2226
        %v2242 = vpop.xlane.xlu0 %2241
        %v2243 = vmul.f32 %v2228, %v2202
        %v2244 = vmul.f32 %v2230, %v2202
        %v2245 = vmul.f32 %v2232, %v2202
        %v2246 = vmul.f32 %v2234, %v2202
        %v2247 = vmul.f32 %v2236, %v2202
        %v2248 = vmul.f32 %v2238, %v2202
        %v2249 = vmul.f32 %v2240, %v2202
        %v2250 = vmul.f32 %v2242, %v2202
        %v2251 = vadd.f32 %v2243, 1e-05
        %v2252 = vadd.f32 %v2244, 1e-05
        %v2253 = vadd.f32 %v2245, 1e-05
        %v2254 = vadd.f32 %v2246, 1e-05
        %v2255 = vadd.f32 %v2247, 1e-05
        %v2256 = vadd.f32 %v2248, 1e-05
        %v2257 = vadd.f32 %v2249, 1e-05
        %v2258 = vadd.f32 %v2250, 1e-05
        %v2259 = vrsqrt.pop %v2251
        %v2260 = vmul.f32 %v2259, %v2251
        %v2261 = vmul.f32 %v2260, %v2259
        %v2262 = vmul.f32 0.5, %v2261
        %v2263 = vsub.f32 1.5, %v2262
        %v2264 = vmul.f32 %v2259, %v2263
        %vm2265 = vweird.f32 %v2251
        %vm2266 = vweird.f32 %v2259
        %vm2267 = vmor %vm2265, %vm2266
        %v2268 = vsel %vm2267, %v2259, %v2264
        %v2269 = vrsqrt.pop %v2252
        %v2270 = vmul.f32 %v2269, %v2252
        %v2271 = vmul.f32 %v2270, %v2269
        %v2272 = vmul.f32 0.5, %v2271
        %v2273 = vsub.f32 1.5, %v2272
        %v2274 = vmul.f32 %v2269, %v2273
        %vm2275 = vweird.f32 %v2252
        %vm2276 = vweird.f32 %v2269
        %vm2277 = vmor %vm2275, %vm2276
        %v2278 = vsel %vm2277, %v2269, %v2274
        %v2279 = vrsqrt.pop %v2253
        %v2280 = vmul.f32 %v2279, %v2253
        %v2281 = vmul.f32 %v2280, %v2279
        %v2282 = vmul.f32 0.5, %v2281
        %v2283 = vsub.f32 1.5, %v2282
        %v2284 = vmul.f32 %v2279, %v2283
        %vm2285 = vweird.f32 %v2253
        %vm2286 = vweird.f32 %v2279
        %vm2287 = vmor %vm2285, %vm2286
        %v2288 = vsel %vm2287, %v2279, %v2284
        %v2289 = vrsqrt.pop %v2254
        %v2290 = vmul.f32 %v2289, %v2254
        %v2291 = vmul.f32 %v2290, %v2289
        %v2292 = vmul.f32 0.5, %v2291
        %v2293 = vsub.f32 1.5, %v2292
        %v2294 = vmul.f32 %v2289, %v2293
        %vm2295 = vweird.f32 %v2254
        %vm2296 = vweird.f32 %v2289
        %vm2297 = vmor %vm2295, %vm2296
        %v2298 = vsel %vm2297, %v2289, %v2294
        %v2299 = vrsqrt.pop %v2255
        %v2300 = vmul.f32 %v2299, %v2255
        %v2301 = vmul.f32 %v2300, %v2299
        %v2302 = vmul.f32 0.5, %v2301
        %v2303 = vsub.f32 1.5, %v2302
        %v2304 = vmul.f32 %v2299, %v2303
        %vm2305 = vweird.f32 %v2255
        %vm2306 = vweird.f32 %v2299
        %vm2307 = vmor %vm2305, %vm2306
        %v2308 = vsel %vm2307, %v2299, %v2304
        %v2309 = vrsqrt.pop %v2256
        %v2310 = vmul.f32 %v2309, %v2256
        %v2311 = vmul.f32 %v2310, %v2309
        %v2312 = vmul.f32 0.5, %v2311
        %v2313 = vsub.f32 1.5, %v2312
        %v2314 = vmul.f32 %v2309, %v2313
        %vm2315 = vweird.f32 %v2256
        %vm2316 = vweird.f32 %v2309
        %vm2317 = vmor %vm2315, %vm2316
        %v2318 = vsel %vm2317, %v2309, %v2314
        %v2319 = vrsqrt.pop %v2257
        %v2320 = vmul.f32 %v2319, %v2257
        %v2321 = vmul.f32 %v2320, %v2319
        %v2322 = vmul.f32 0.5, %v2321
        %v2323 = vsub.f32 1.5, %v2322
        %v2324 = vmul.f32 %v2319, %v2323
        %vm2325 = vweird.f32 %v2257
        %vm2326 = vweird.f32 %v2319
        %vm2327 = vmor %vm2325, %vm2326
        %v2328 = vsel %vm2327, %v2319, %v2324
        %v2329 = vrsqrt.pop %v2258
        %v2330 = vmul.f32 %v2329, %v2258
        %v2331 = vmul.f32 %v2330, %v2329
        %v2332 = vmul.f32 0.5, %v2331
        %v2333 = vsub.f32 1.5, %v2332
        %v2334 = vmul.f32 %v2329, %v2333
        %vm2335 = vweird.f32 %v2258
        %vm2336 = vweird.f32 %v2329
        %vm2337 = vmor %vm2335, %vm2336
        %v2338 = vsel %vm2337, %v2329, %v2334
        %v2339 = vmul.f32 %v2211, %v2268
        %v2340 = vmul.f32 %v2212, %v2278
        %v2341 = vmul.f32 %v2213, %v2288
        %v2342 = vmul.f32 %v2214, %v2298
        %v2343 = vmul.f32 %v2215, %v2308
        %v2344 = vmul.f32 %v2216, %v2318
        %v2345 = vmul.f32 %v2217, %v2328
        %v2346 = vmul.f32 %v2218, %v2338
        %v2347 = vperm.slane %v684, 4
        %v2348 = vmul.f32 %v2339, %v2347
        %v2349 = vmul.f32 %v2340, %v2347
        %v2350 = vmul.f32 %v2341, %v2347
        %v2351 = vmul.f32 %v2342, %v2347
        %v2352 = vmul.f32 %v2343, %v2347
        %v2353 = vmul.f32 %v2344, %v2347
        %v2354 = vmul.f32 %v2345, %v2347
        %v2355 = vmul.f32 %v2346, %v2347
        %v2356 = vperm.slane %v684, 5
        %v2357 = vadd.f32 %v2348, %v2356
        %v2358 = vadd.f32 %v2349, %v2356
        %v2359 = vadd.f32 %v2350, %v2356
        %v2360 = vadd.f32 %v2351, %v2356
        %v2361 = vadd.f32 %v2352, %v2356
        %v2362 = vadd.f32 %v2353, %v2356
        %v2363 = vadd.f32 %v2354, %v2356
        %v2364 = vadd.f32 %v2355, %v2356
        %v2365 = vpack.c.bf16 %v2358, %v2357
        %v2366 = vpack.c.bf16 %v2360, %v2359
        %v2367 = vpack.c.bf16 %v2362, %v2361
        %v2368 = vpack.c.bf16 %v2364, %v2363
        %v2369 = vld [vmem:[#allocation7] sm:$0xff]
        %v2370 = vld [vmem:[#allocation7 + $0x8] sm:$0xff]
        %v2371 = vld [vmem:[#allocation7 + $0x10] sm:$0xff]
        %v2372 = vld [vmem:[#allocation7 + $0x18] sm:$0xff]
        %v2373 = vld [vmem:[#allocation7 + $0x20] sm:$0xff]
        %v2374 = vld [vmem:[#allocation7 + $0x28] sm:$0xff]
        %v2375 = vld [vmem:[#allocation7 + $0x30] sm:$0xff]
        %v2376 = vld [vmem:[#allocation7 + $0x38] sm:$0xff]
        %v2377 = vld [vmem:[#allocation7 + $0x40] sm:$0xff]
        %v2378 = vld [vmem:[#allocation7 + $0x48] sm:$0xff]
        %v2379 = vld [vmem:[#allocation7 + $0x50] sm:$0xff]
        %v2380 = vld [vmem:[#allocation7 + $0x58] sm:$0xff]
        %v2381 = vld [vmem:[#allocation7 + $0x60] sm:$0xff]
        %v2382 = vld [vmem:[#allocation7 + $0x68] sm:$0xff]
        %v2383 = vld [vmem:[#allocation7 + $0x70] sm:$0xff]
        %v2384 = vld [vmem:[#allocation7 + $0x78] sm:$0xff]
        %v2385 = vld [vmem:[%s8] sm:$0x3]
        %v2387 = vperm.slane %v2385, 0
        %v2388 = vperm.slane %v2385, 1
        %v2407 = vunpack.c.l.b16 %v2369
        %v2408 = vunpack.c.h.b16 %v2369
        %v2409 = vunpack.c.l.b16 %v2370
        %v2410 = vunpack.c.h.b16 %v2370
        %v2411 = vunpack.c.l.b16 %v2371
        %v2412 = vunpack.c.h.b16 %v2371
        %v2413 = vunpack.c.l.b16 %v2372
        %v2414 = vunpack.c.h.b16 %v2372
        %v2415 = vunpack.c.l.b16 %v2373
        %v2416 = vunpack.c.h.b16 %v2373
        %v2417 = vunpack.c.l.b16 %v2374
        %v2418 = vunpack.c.h.b16 %v2374
        %v2419 = vunpack.c.l.b16 %v2375
        %v2420 = vunpack.c.h.b16 %v2375
        %v2421 = vunpack.c.l.b16 %v2376
        %v2422 = vunpack.c.h.b16 %v2376
        %v2423 = vunpack.c.l.b16 %v2377
        %v2424 = vunpack.c.h.b16 %v2377
        %v2425 = vunpack.c.l.b16 %v2378
        %v2426 = vunpack.c.h.b16 %v2378
        %v2427 = vunpack.c.l.b16 %v2379
        %v2428 = vunpack.c.h.b16 %v2379
        %v2429 = vunpack.c.l.b16 %v2380
        %v2430 = vunpack.c.h.b16 %v2380
        %v2431 = vunpack.c.l.b16 %v2381
        %v2432 = vunpack.c.h.b16 %v2381
        %v2433 = vunpack.c.l.b16 %v2382
        %v2434 = vunpack.c.h.b16 %v2382
        %v2435 = vunpack.c.l.b16 %v2383
        %v2436 = vunpack.c.h.b16 %v2383
        %v2437 = vunpack.c.l.b16 %v2384
        %v2438 = vunpack.c.h.b16 %v2384
        %v2439 = vpack.c.b16 %v2409, %v2407
        %v2440 = vpack.c.b16 %v2410, %v2408
        %v2441 = vpack.c.b16 %v2413, %v2411
        %v2442 = vpack.c.b16 %v2414, %v2412
        %v2443 = vpack.c.b16 %v2417, %v2415
        %v2444 = vpack.c.b16 %v2418, %v2416
        %v2445 = vpack.c.b16 %v2421, %v2419
        %v2446 = vpack.c.b16 %v2422, %v2420
        %v2447 = vpack.c.b16 %v2425, %v2423
        %v2448 = vpack.c.b16 %v2426, %v2424
        %v2449 = vpack.c.b16 %v2429, %v2427
        %v2450 = vpack.c.b16 %v2430, %v2428
        %v2451 = vpack.c.b16 %v2433, %v2431
        %v2452 = vpack.c.b16 %v2434, %v2432
        %v2453 = vpack.c.b16 %v2437, %v2435
        %v2454 = vpack.c.b16 %v2438, %v2436
        %2471 = vmatpush.bf16.msra.mxu0 %v2453
        %2472 = vmatpush.bf16.msra.mxu0 %v2451
        %2473 = vmatpush.bf16.msra.mxu0 %v2449
        %2474 = vmatpush.bf16.msra.mxu0 %v2447
        %2475 = vmatpush.bf16.msra.mxu0 %v2445
        %2476 = vmatpush.bf16.msra.mxu0 %v2443
        %2477 = vmatpush.bf16.msra.mxu0 %v2441
        %2478 = vmatpush.bf16.msra.mxu0 %v2439
        %2479 = vmatmul.bf16.gmra.mxu0 %v2365
        %v2480 = vpop.f32.mrf.mxu0
        %v2481 = vadd.f32 %v2387, %v2480
        %v2482 = vpop.f32.mrf.mxu0
        %v2483 = vadd.f32 %v2387, %v2482
        %2484 = vmatmul.bf16.gmra.mxu0 %v2366
        %v2485 = vpop.f32.mrf.mxu0
        %v2486 = vadd.f32 %v2387, %v2485
        %v2487 = vpop.f32.mrf.mxu0
        %v2488 = vadd.f32 %v2387, %v2487
        %2489 = vmatmul.bf16.gmra.mxu0 %v2367
        %v2490 = vpop.f32.mrf.mxu0
        %v2491 = vadd.f32 %v2387, %v2490
        %v2492 = vpop.f32.mrf.mxu0
        %v2493 = vadd.f32 %v2387, %v2492
        %2494 = vmatmul.bf16.gmra.mxu0 %v2368
        %v2495 = vpop.f32.mrf.mxu0
        %v2496 = vadd.f32 %v2387, %v2495
        %v2497 = vpop.f32.mrf.mxu0
        %v2498 = vadd.f32 %v2387, %v2497
        %2499 = vdwg.mxu0
        %2500 = vmatpush.bf16.msra.mxu0 %v2454
        %2501 = vmatpush.bf16.msra.mxu0 %v2452
        %2502 = vmatpush.bf16.msra.mxu0 %v2450
        %2503 = vmatpush.bf16.msra.mxu0 %v2448
        %2504 = vmatpush.bf16.msra.mxu0 %v2446
        %2505 = vmatpush.bf16.msra.mxu0 %v2444
        %2506 = vmatpush.bf16.msra.mxu0 %v2442
        %2507 = vmatpush.bf16.msra.mxu0 %v2440
        %2508 = vmatmul.bf16.gmra.mxu0 %v2365
        %v2509 = vpop.f32.mrf.mxu0
        %v2510 = vadd.f32 %v2388, %v2509
        %v2511 = vpop.f32.mrf.mxu0
        %v2512 = vadd.f32 %v2388, %v2511
        %2513 = vmatmul.bf16.gmra.mxu0 %v2366
        %v2514 = vpop.f32.mrf.mxu0
        %v2515 = vadd.f32 %v2388, %v2514
        %v2516 = vpop.f32.mrf.mxu0
        %v2517 = vadd.f32 %v2388, %v2516
        %2518 = vmatmul.bf16.gmra.mxu0 %v2367
        %v2519 = vpop.f32.mrf.mxu0
        %v2520 = vadd.f32 %v2388, %v2519
        %v2521 = vpop.f32.mrf.mxu0
        %v2522 = vadd.f32 %v2388, %v2521
        %2523 = vmatmul.bf16.gmra.mxu0 %v2368
        %v2524 = vpop.f32.mrf.mxu0
        %v2525 = vadd.f32 %v2388, %v2524
        %v2526 = vpop.f32.mrf.mxu0
        %v2527 = vadd.f32 %v2388, %v2526
        %2528 = vdwg.mxu0
        %v2529 = vmul.f32 %v2481, 0.5
        %v2530 = vmul.f32 %v2510, 0.5
        %v2531 = vmul.f32 %v2483, 0.5
        %v2532 = vmul.f32 %v2512, 0.5
        %v2533 = vmul.f32 %v2486, 0.5
        %v2534 = vmul.f32 %v2515, 0.5
        %v2535 = vmul.f32 %v2488, 0.5
        %v2536 = vmul.f32 %v2517, 0.5
        %v2537 = vmul.f32 %v2491, 0.5
        %v2538 = vmul.f32 %v2520, 0.5
        %v2539 = vmul.f32 %v2493, 0.5
        %v2540 = vmul.f32 %v2522, 0.5
        %v2541 = vmul.f32 %v2496, 0.5
        %v2542 = vmul.f32 %v2525, 0.5
        %v2543 = vmul.f32 %v2498, 0.5
        %v2544 = vmul.f32 %v2527, 0.5
        %v2545 = vmul.f32 %v2481, 0.044715
        %v2546 = vmul.f32 %v2510, 0.044715
        %v2547 = vmul.f32 %v2483, 0.044715
        %v2548 = vmul.f32 %v2512, 0.044715
        %v2549 = vmul.f32 %v2486, 0.044715
        %v2550 = vmul.f32 %v2515, 0.044715
        %v2551 = vmul.f32 %v2488, 0.044715
        %v2552 = vmul.f32 %v2517, 0.044715
        %v2553 = vmul.f32 %v2491, 0.044715
        %v2554 = vmul.f32 %v2520, 0.044715
        %v2555 = vmul.f32 %v2493, 0.044715
        %v2556 = vmul.f32 %v2522, 0.044715
        %v2557 = vmul.f32 %v2496, 0.044715
        %v2558 = vmul.f32 %v2525, 0.044715
        %v2559 = vmul.f32 %v2498, 0.044715
        %v2560 = vmul.f32 %v2527, 0.044715
        %v2561 = vmul.f32 %v2545, %v2481
        %v2562 = vmul.f32 %v2546, %v2510
        %v2563 = vmul.f32 %v2547, %v2483
        %v2564 = vmul.f32 %v2548, %v2512
        %v2565 = vmul.f32 %v2549, %v2486
        %v2566 = vmul.f32 %v2550, %v2515
        %v2567 = vmul.f32 %v2551, %v2488
        %v2568 = vmul.f32 %v2552, %v2517
        %v2569 = vmul.f32 %v2553, %v2491
        %v2570 = vmul.f32 %v2554, %v2520
        %v2571 = vmul.f32 %v2555, %v2493
        %v2572 = vmul.f32 %v2556, %v2522
        %v2573 = vmul.f32 %v2557, %v2496
        %v2574 = vmul.f32 %v2558, %v2525
        %v2575 = vmul.f32 %v2559, %v2498
        %v2576 = vmul.f32 %v2560, %v2527
        %v2577 = vmul.f32 %v2561, %v2481
        %v2578 = vmul.f32 %v2562, %v2510
        %v2579 = vmul.f32 %v2563, %v2483
        %v2580 = vmul.f32 %v2564, %v2512
        %v2581 = vmul.f32 %v2565, %v2486
        %v2582 = vmul.f32 %v2566, %v2515
        %v2583 = vmul.f32 %v2567, %v2488
        %v2584 = vmul.f32 %v2568, %v2517
        %v2585 = vmul.f32 %v2569, %v2491
        %v2586 = vmul.f32 %v2570, %v2520
        %v2587 = vmul.f32 %v2571, %v2493
        %v2588 = vmul.f32 %v2572, %v2522
        %v2589 = vmul.f32 %v2573, %v2496
        %v2590 = vmul.f32 %v2574, %v2525
        %v2591 = vmul.f32 %v2575, %v2498
        %v2592 = vmul.f32 %v2576, %v2527
        %v2593 = vadd.f32 %v2481, %v2577
        %v2594 = vadd.f32 %v2510, %v2578
        %v2595 = vadd.f32 %v2483, %v2579
        %v2596 = vadd.f32 %v2512, %v2580
        %v2597 = vadd.f32 %v2486, %v2581
        %v2598 = vadd.f32 %v2515, %v2582
        %v2599 = vadd.f32 %v2488, %v2583
        %v2600 = vadd.f32 %v2517, %v2584
        %v2601 = vadd.f32 %v2491, %v2585
        %v2602 = vadd.f32 %v2520, %v2586
        %v2603 = vadd.f32 %v2493, %v2587
        %v2604 = vadd.f32 %v2522, %v2588
        %v2605 = vadd.f32 %v2496, %v2589
        %v2606 = vadd.f32 %v2525, %v2590
        %v2607 = vadd.f32 %v2498, %v2591
        %v2608 = vadd.f32 %v2527, %v2592
        %v2609 = vmul.f32 %v2593, 0.7978846
        %v2610 = vmul.f32 %v2594, 0.7978846
        %v2611 = vmul.f32 %v2595, 0.7978846
        %v2612 = vmul.f32 %v2596, 0.7978846
        %v2613 = vmul.f32 %v2597, 0.7978846
        %v2614 = vmul.f32 %v2598, 0.7978846
        %v2615 = vmul.f32 %v2599, 0.7978846
        %v2616 = vmul.f32 %v2600, 0.7978846
        %v2617 = vmul.f32 %v2601, 0.7978846
        %v2618 = vmul.f32 %v2602, 0.7978846
        %v2619 = vmul.f32 %v2603, 0.7978846
        %v2620 = vmul.f32 %v2604, 0.7978846
        %v2621 = vmul.f32 %v2605, 0.7978846
        %v2622 = vmul.f32 %v2606, 0.7978846
        %v2623 = vmul.f32 %v2607, 0.7978846
        %v2624 = vmul.f32 %v2608, 0.7978846
        %v2625 = vtanh.pop %v2609
        %v2626 = vtanh.pop %v2610
        %v2627 = vtanh.pop %v2611
        %v2628 = vtanh.pop %v2612
        %v2629 = vtanh.pop %v2613
        %v2630 = vtanh.pop %v2614
        %v2631 = vtanh.pop %v2615
        %v2632 = vtanh.pop %v2616
        %v2633 = vtanh.pop %v2617
        %v2634 = vtanh.pop %v2618
        %v2635 = vtanh.pop %v2619
        %v2636 = vtanh.pop %v2620
        %v2637 = vtanh.pop %v2621
        %v2638 = vtanh.pop %v2622
        %v2639 = vtanh.pop %v2623
        %v2640 = vtanh.pop %v2624
        %v2641 = vadd.f32 %v2625, 1.0
        %v2642 = vadd.f32 %v2626, 1.0
        %v2643 = vadd.f32 %v2627, 1.0
        %v2644 = vadd.f32 %v2628, 1.0
        %v2645 = vadd.f32 %v2629, 1.0
        %v2646 = vadd.f32 %v2630, 1.0
        %v2647 = vadd.f32 %v2631, 1.0
        %v2648 = vadd.f32 %v2632, 1.0
        %v2649 = vadd.f32 %v2633, 1.0
        %v2650 = vadd.f32 %v2634, 1.0
        %v2651 = vadd.f32 %v2635, 1.0
        %v2652 = vadd.f32 %v2636, 1.0
        %v2653 = vadd.f32 %v2637, 1.0
        %v2654 = vadd.f32 %v2638, 1.0
        %v2655 = vadd.f32 %v2639, 1.0
        %v2656 = vadd.f32 %v2640, 1.0
        %v2657 = vmul.f32 %v2529, %v2641
        %v2658 = vmul.f32 %v2530, %v2642
        %v2659 = vmul.f32 %v2531, %v2643
        %v2660 = vmul.f32 %v2532, %v2644
        %v2661 = vmul.f32 %v2533, %v2645
        %v2662 = vmul.f32 %v2534, %v2646
        %v2663 = vmul.f32 %v2535, %v2647
        %v2664 = vmul.f32 %v2536, %v2648
        %v2665 = vmul.f32 %v2537, %v2649
        %v2666 = vmul.f32 %v2538, %v2650
        %v2667 = vmul.f32 %v2539, %v2651
        %v2668 = vmul.f32 %v2540, %v2652
        %v2669 = vmul.f32 %v2541, %v2653
        %v2670 = vmul.f32 %v2542, %v2654
        %v2671 = vmul.f32 %v2543, %v2655
        %v2672 = vmul.f32 %v2544, %v2656
        %v2673 = vpack.c.bf16 %v2659, %v2657
        %v2674 = vpack.c.bf16 %v2660, %v2658
        %v2675 = vpack.c.bf16 %v2663, %v2661
        %v2676 = vpack.c.bf16 %v2664, %v2662
        %v2677 = vpack.c.bf16 %v2667, %v2665
        %v2678 = vpack.c.bf16 %v2668, %v2666
        %v2679 = vpack.c.bf16 %v2671, %v2669
        %v2680 = vpack.c.bf16 %v2672, %v2670
        %v2681 = vld [vmem:[#allocation8] sm:$0xf]
        %v2682 = vld [vmem:[#allocation8 + $0x4] sm:$0xf]
        %v2683 = vld [vmem:[#allocation8 + $0x8] sm:$0xf]
        %v2684 = vld [vmem:[#allocation8 + $0xc] sm:$0xf]
        %v2685 = vld [vmem:[#allocation8 + $0x10] sm:$0xf]
        %v2686 = vld [vmem:[#allocation8 + $0x14] sm:$0xf]
        %v2687 = vld [vmem:[#allocation8 + $0x18] sm:$0xf]
        %v2688 = vld [vmem:[#allocation8 + $0x1c] sm:$0xf]
        %v2689 = vld [vmem:[#allocation8 + $0x20] sm:$0xf]
        %v2690 = vld [vmem:[#allocation8 + $0x24] sm:$0xf]
        %v2691 = vld [vmem:[#allocation8 + $0x28] sm:$0xf]
        %v2692 = vld [vmem:[#allocation8 + $0x2c] sm:$0xf]
        %v2693 = vld [vmem:[#allocation8 + $0x30] sm:$0xf]
        %v2694 = vld [vmem:[#allocation8 + $0x34] sm:$0xf]
        %v2695 = vld [vmem:[#allocation8 + $0x38] sm:$0xf]
        %v2696 = vld [vmem:[#allocation8 + $0x3c] sm:$0xf]
        %v2697 = vld [vmem:[#allocation8 + $0x40] sm:$0xf]
        %v2698 = vld [vmem:[#allocation8 + $0x44] sm:$0xf]
        %v2699 = vld [vmem:[#allocation8 + $0x48] sm:$0xf]
        %v2700 = vld [vmem:[#allocation8 + $0x4c] sm:$0xf]
        %v2701 = vld [vmem:[#allocation8 + $0x50] sm:$0xf]
        %v2702 = vld [vmem:[#allocation8 + $0x54] sm:$0xf]
        %v2703 = vld [vmem:[#allocation8 + $0x58] sm:$0xf]
        %v2704 = vld [vmem:[#allocation8 + $0x5c] sm:$0xf]
        %v2705 = vld [vmem:[#allocation8 + $0x60] sm:$0xf]
        %v2706 = vld [vmem:[#allocation8 + $0x64] sm:$0xf]
        %v2707 = vld [vmem:[#allocation8 + $0x68] sm:$0xf]
        %v2708 = vld [vmem:[#allocation8 + $0x6c] sm:$0xf]
        %v2709 = vld [vmem:[#allocation8 + $0x70] sm:$0xf]
        %v2710 = vld [vmem:[#allocation8 + $0x74] sm:$0xf]
        %v2711 = vld [vmem:[#allocation8 + $0x78] sm:$0xf]
        %v2712 = vld [vmem:[#allocation8 + $0x7c] sm:$0xf]
        %v2713 = vperm.slane %v684, 6
        %v2746 = vunpack.c.l.b16 %v2681
        %v2747 = vunpack.c.l.b16 %v2682
        %v2748 = vunpack.c.l.b16 %v2683
        %v2749 = vunpack.c.l.b16 %v2684
        %v2750 = vunpack.c.l.b16 %v2685
        %v2751 = vunpack.c.l.b16 %v2686
        %v2752 = vunpack.c.l.b16 %v2687
        %v2753 = vunpack.c.l.b16 %v2688
        %v2754 = vunpack.c.l.b16 %v2689
        %v2755 = vunpack.c.l.b16 %v2690
        %v2756 = vunpack.c.l.b16 %v2691
        %v2757 = vunpack.c.l.b16 %v2692
        %v2758 = vunpack.c.l.b16 %v2693
        %v2759 = vunpack.c.l.b16 %v2694
        %v2760 = vunpack.c.l.b16 %v2695
        %v2761 = vunpack.c.l.b16 %v2696
        %v2762 = vunpack.c.l.b16 %v2697
        %v2763 = vunpack.c.l.b16 %v2698
        %v2764 = vunpack.c.l.b16 %v2699
        %v2765 = vunpack.c.l.b16 %v2700
        %v2766 = vunpack.c.l.b16 %v2701
        %v2767 = vunpack.c.l.b16 %v2702
        %v2768 = vunpack.c.l.b16 %v2703
        %v2769 = vunpack.c.l.b16 %v2704
        %v2770 = vunpack.c.l.b16 %v2705
        %v2771 = vunpack.c.l.b16 %v2706
        %v2772 = vunpack.c.l.b16 %v2707
        %v2773 = vunpack.c.l.b16 %v2708
        %v2774 = vunpack.c.l.b16 %v2709
        %v2775 = vunpack.c.l.b16 %v2710
        %v2776 = vunpack.c.l.b16 %v2711
        %v2777 = vunpack.c.l.b16 %v2712
        %v2778 = vpack.c.b16 %v2747, %v2746
        %v2779 = vpack.c.b16 %v2749, %v2748
        %v2780 = vpack.c.b16 %v2751, %v2750
        %v2781 = vpack.c.b16 %v2753, %v2752
        %v2782 = vpack.c.b16 %v2755, %v2754
        %v2783 = vpack.c.b16 %v2757, %v2756
        %v2784 = vpack.c.b16 %v2759, %v2758
        %v2785 = vpack.c.b16 %v2761, %v2760
        %v2786 = vpack.c.b16 %v2763, %v2762
        %v2787 = vpack.c.b16 %v2765, %v2764
        %v2788 = vpack.c.b16 %v2767, %v2766
        %v2789 = vpack.c.b16 %v2769, %v2768
        %v2790 = vpack.c.b16 %v2771, %v2770
        %v2791 = vpack.c.b16 %v2773, %v2772
        %v2792 = vpack.c.b16 %v2775, %v2774
        %v2793 = vpack.c.b16 %v2777, %v2776
        %2810 = vmatpush.bf16.msra.mxu0 %v2785
        %2811 = vmatpush.bf16.msra.mxu0 %v2784
        %2812 = vmatpush.bf16.msra.mxu0 %v2783
        %2813 = vmatpush.bf16.msra.mxu0 %v2782
        %2814 = vmatpush.bf16.msra.mxu0 %v2781
        %2815 = vmatpush.bf16.msra.mxu0 %v2780
        %2816 = vmatpush.bf16.msra.mxu0 %v2779
        %2817 = vmatpush.bf16.msra.mxu0 %v2778
        %2818 = vmatmul.bf16.gmra.mxu0 %v2673
        %v2819 = vpop.f32.mrf.mxu0
        %v2820 = vadd.f32 %v2713, %v2819
        %v2821 = vpop.f32.mrf.mxu0
        %v2822 = vadd.f32 %v2713, %v2821
        %2823 = vmatmul.bf16.gmra.mxu0 %v2675
        %v2824 = vpop.f32.mrf.mxu0
        %v2825 = vadd.f32 %v2713, %v2824
        %v2826 = vpop.f32.mrf.mxu0
        %v2827 = vadd.f32 %v2713, %v2826
        %2828 = vmatmul.bf16.gmra.mxu0 %v2677
        %v2829 = vpop.f32.mrf.mxu0
        %v2830 = vadd.f32 %v2713, %v2829
        %v2831 = vpop.f32.mrf.mxu0
        %v2832 = vadd.f32 %v2713, %v2831
        %2833 = vmatmul.bf16.gmra.mxu0 %v2679
        %v2834 = vpop.f32.mrf.mxu0
        %v2835 = vadd.f32 %v2713, %v2834
        %v2836 = vpop.f32.mrf.mxu0
        %v2837 = vadd.f32 %v2713, %v2836
        %2838 = vdwg.mxu0
        %2839 = vmatpush.bf16.msra.mxu0 %v2793
        %2840 = vmatpush.bf16.msra.mxu0 %v2792
        %2841 = vmatpush.bf16.msra.mxu0 %v2791
        %2842 = vmatpush.bf16.msra.mxu0 %v2790
        %2843 = vmatpush.bf16.msra.mxu0 %v2789
        %2844 = vmatpush.bf16.msra.mxu0 %v2788
        %2845 = vmatpush.bf16.msra.mxu0 %v2787
        %2846 = vmatpush.bf16.msra.mxu0 %v2786
        %2847 = vmatmul.bf16.gmra.mxu0 %v2674
        %v2848 = vpop.f32.mrf.mxu0
        %v2849 = vadd.f32 %v2820, %v2848
        %v2850 = vpop.f32.mrf.mxu0
        %v2851 = vadd.f32 %v2822, %v2850
        %2852 = vmatmul.bf16.gmra.mxu0 %v2676
        %v2853 = vpop.f32.mrf.mxu0
        %v2854 = vadd.f32 %v2825, %v2853
        %v2855 = vpop.f32.mrf.mxu0
        %v2856 = vadd.f32 %v2827, %v2855
        %2857 = vmatmul.bf16.gmra.mxu0 %v2678
        %v2858 = vpop.f32.mrf.mxu0
        %v2859 = vadd.f32 %v2830, %v2858
        %v2860 = vpop.f32.mrf.mxu0
        %v2861 = vadd.f32 %v2832, %v2860
        %2862 = vmatmul.bf16.gmra.mxu0 %v2680
        %v2863 = vpop.f32.mrf.mxu0
        %v2864 = vadd.f32 %v2835, %v2863
        %v2865 = vpop.f32.mrf.mxu0
        %v2866 = vadd.f32 %v2837, %v2865
        %2867 = vdwg.mxu0
        %v2868 = vadd.f32 %v2357, %v2849
        %v2869 = vadd.f32 %v2358, %v2851
        %v2870 = vadd.f32 %v2359, %v2854
        %v2871 = vadd.f32 %v2360, %v2856
        %v2872 = vadd.f32 %v2361, %v2859
        %v2873 = vadd.f32 %v2362, %v2861
        %v2874 = vadd.f32 %v2363, %v2864
        %v2875 = vadd.f32 %v2364, %v2866
        %2876 = vadd.xlane.f32.xlu0 %v2868
        %v2877 = vpop.xlane.xlu0 %2876
        %2878 = vadd.xlane.f32.xlu0 %v2869
        %v2879 = vpop.xlane.xlu0 %2878
        %2880 = vadd.xlane.f32.xlu0 %v2870
        %v2881 = vpop.xlane.xlu0 %2880
        %2882 = vadd.xlane.f32.xlu0 %v2871
        %v2883 = vpop.xlane.xlu0 %2882
        %2884 = vadd.xlane.f32.xlu0 %v2872
        %v2885 = vpop.xlane.xlu0 %2884
        %2886 = vadd.xlane.f32.xlu0 %v2873
        %v2887 = vpop.xlane.xlu0 %2886
        %2888 = vadd.xlane.f32.xlu0 %v2874
        %v2889 = vpop.xlane.xlu0 %2888
        %2890 = vadd.xlane.f32.xlu0 %v2875
        %v2891 = vpop.xlane.xlu0 %2890
        %v2892 = vmul.f32 %v2877, %v2202
        %v2893 = vmul.f32 %v2879, %v2202
        %v2894 = vmul.f32 %v2881, %v2202
        %v2895 = vmul.f32 %v2883, %v2202
        %v2896 = vmul.f32 %v2885, %v2202
        %v2897 = vmul.f32 %v2887, %v2202
        %v2898 = vmul.f32 %v2889, %v2202
        %v2899 = vmul.f32 %v2891, %v2202
        %v2900 = vsub.f32 %v2868, %v2892
        %v2901 = vsub.f32 %v2869, %v2893
        %v2902 = vsub.f32 %v2870, %v2894
        %v2903 = vsub.f32 %v2871, %v2895
        %v2904 = vsub.f32 %v2872, %v2896
        %v2905 = vsub.f32 %v2873, %v2897
        %v2906 = vsub.f32 %v2874, %v2898
        %v2907 = vsub.f32 %v2875, %v2899
        %v2908 = vmul.f32 %v2900, %v2900
        %v2909 = vmul.f32 %v2901, %v2901
        %v2910 = vmul.f32 %v2902, %v2902
        %v2911 = vmul.f32 %v2903, %v2903
        %v2912 = vmul.f32 %v2904, %v2904
        %v2913 = vmul.f32 %v2905, %v2905
        %v2914 = vmul.f32 %v2906, %v2906
        %v2915 = vmul.f32 %v2907, %v2907
        %2916 = vadd.xlane.f32.xlu0 %v2908
        %v2917 = vpop.xlane.xlu0 %2916
        %2918 = vadd.xlane.f32.xlu0 %v2909
        %v2919 = vpop.xlane.xlu0 %2918
        %2920 = vadd.xlane.f32.xlu0 %v2910
        %v2921 = vpop.xlane.xlu0 %2920
        %2922 = vadd.xlane.f32.xlu0 %v2911
        %v2923 = vpop.xlane.xlu0 %2922
        %2924 = vadd.xlane.f32.xlu0 %v2912
        %v2925 = vpop.xlane.xlu0 %2924
        %2926 = vadd.xlane.f32.xlu0 %v2913
        %v2927 = vpop.xlane.xlu0 %2926
        %2928 = vadd.xlane.f32.xlu0 %v2914
        %v2929 = vpop.xlane.xlu0 %2928
        %2930 = vadd.xlane.f32.xlu0 %v2915
        %v2931 = vpop.xlane.xlu0 %2930
        %v2932 = vmul.f32 %v2917, %v2202
        %v2933 = vmul.f32 %v2919, %v2202
        %v2934 = vmul.f32 %v2921, %v2202
        %v2935 = vmul.f32 %v2923, %v2202
        %v2936 = vmul.f32 %v2925, %v2202
        %v2937 = vmul.f32 %v2927, %v2202
        %v2938 = vmul.f32 %v2929, %v2202
        %v2939 = vmul.f32 %v2931, %v2202
        %v2940 = vadd.f32 %v2932, 1e-05
        %v2941 = vadd.f32 %v2933, 1e-05
        %v2942 = vadd.f32 %v2934, 1e-05
        %v2943 = vadd.f32 %v2935, 1e-05
        %v2944 = vadd.f32 %v2936, 1e-05
        %v2945 = vadd.f32 %v2937, 1e-05
        %v2946 = vadd.f32 %v2938, 1e-05
        %v2947 = vadd.f32 %v2939, 1e-05
        %v2948 = vrsqrt.pop %v2940
        %v2949 = vmul.f32 %v2948, %v2940
        %v2950 = vmul.f32 %v2949, %v2948
        %v2951 = vmul.f32 0.5, %v2950
        %v2952 = vsub.f32 1.5, %v2951
        %v2953 = vmul.f32 %v2948, %v2952
        %vm2954 = vweird.f32 %v2940
        %vm2955 = vweird.f32 %v2948
        %vm2956 = vmor %vm2954, %vm2955
        %v2957 = vsel %vm2956, %v2948, %v2953
        %v2958 = vrsqrt.pop %v2941
        %v2959 = vmul.f32 %v2958, %v2941
        %v2960 = vmul.f32 %v2959, %v2958
        %v2961 = vmul.f32 0.5, %v2960
        %v2962 = vsub.f32 1.5, %v2961
        %v2963 = vmul.f32 %v2958, %v2962
        %vm2964 = vweird.f32 %v2941
        %vm2965 = vweird.f32 %v2958
        %vm2966 = vmor %vm2964, %vm2965
        %v2967 = vsel %vm2966, %v2958, %v2963
        %v2968 = vrsqrt.pop %v2942
        %v2969 = vmul.f32 %v2968, %v2942
        %v2970 = vmul.f32 %v2969, %v2968
        %v2971 = vmul.f32 0.5, %v2970
        %v2972 = vsub.f32 1.5, %v2971
        %v2973 = vmul.f32 %v2968, %v2972
        %vm2974 = vweird.f32 %v2942
        %vm2975 = vweird.f32 %v2968
        %vm2976 = vmor %vm2974, %vm2975
        %v2977 = vsel %vm2976, %v2968, %v2973
        %v2978 = vrsqrt.pop %v2943
        %v2979 = vmul.f32 %v2978, %v2943
        %v2980 = vmul.f32 %v2979, %v2978
        %v2981 = vmul.f32 0.5, %v2980
        %v2982 = vsub.f32 1.5, %v2981
        %v2983 = vmul.f32 %v2978, %v2982
        %vm2984 = vweird.f32 %v2943
        %vm2985 = vweird.f32 %v2978
        %vm2986 = vmor %vm2984, %vm2985
        %v2987 = vsel %vm2986, %v2978, %v2983
        %v2988 = vrsqrt.pop %v2944
        %v2989 = vmul.f32 %v2988, %v2944
        %v2990 = vmul.f32 %v2989, %v2988
        %v2991 = vmul.f32 0.5, %v2990
        %v2992 = vsub.f32 1.5, %v2991
        %v2993 = vmul.f32 %v2988, %v2992
        %vm2994 = vweird.f32 %v2944
        %vm2995 = vweird.f32 %v2988
        %vm2996 = vmor %vm2994, %vm2995
        %v2997 = vsel %vm2996, %v2988, %v2993
        %v2998 = vrsqrt.pop %v2945
        %v2999 = vmul.f32 %v2998, %v2945
        %v3000 = vmul.f32 %v2999, %v2998
        %v3001 = vmul.f32 0.5, %v3000
        %v3002 = vsub.f32 1.5, %v3001
        %v3003 = vmul.f32 %v2998, %v3002
        %vm3004 = vweird.f32 %v2945
        %vm3005 = vweird.f32 %v2998
        %vm3006 = vmor %vm3004, %vm3005
        %v3007 = vsel %vm3006, %v2998, %v3003
        %v3008 = vrsqrt.pop %v2946
        %v3009 = vmul.f32 %v3008, %v2946
        %v3010 = vmul.f32 %v3009, %v3008
        %v3011 = vmul.f32 0.5, %v3010
        %v3012 = vsub.f32 1.5, %v3011
        %v3013 = vmul.f32 %v3008, %v3012
        %vm3014 = vweird.f32 %v2946
        %vm3015 = vweird.f32 %v3008
        %vm3016 = vmor %vm3014, %vm3015
        %v3017 = vsel %vm3016, %v3008, %v3013
        %v3018 = vrsqrt.pop %v2947
        %v3019 = vmul.f32 %v3018, %v2947
        %v3020 = vmul.f32 %v3019, %v3018
        %v3021 = vmul.f32 0.5, %v3020
        %v3022 = vsub.f32 1.5, %v3021
        %v3023 = vmul.f32 %v3018, %v3022
        %vm3024 = vweird.f32 %v2947
        %vm3025 = vweird.f32 %v3018
        %vm3026 = vmor %vm3024, %vm3025
        %v3027 = vsel %vm3026, %v3018, %v3023
        %v3028 = vmul.f32 %v2900, %v2957
        %v3029 = vmul.f32 %v2901, %v2967
        %v3030 = vmul.f32 %v2902, %v2977
        %v3031 = vmul.f32 %v2903, %v2987
        %v3032 = vmul.f32 %v2904, %v2997
        %v3033 = vmul.f32 %v2905, %v3007
        %v3034 = vmul.f32 %v2906, %v3017
        %v3035 = vmul.f32 %v2907, %v3027
        %v3036 = vperm.slane %v684, 7
        %v3037 = vmul.f32 %v3028, %v3036
        %v3038 = vmul.f32 %v3029, %v3036
        %v3039 = vmul.f32 %v3030, %v3036
        %v3040 = vmul.f32 %v3031, %v3036
        %v3041 = vmul.f32 %v3032, %v3036
        %v3042 = vmul.f32 %v3033, %v3036
        %v3043 = vmul.f32 %v3034, %v3036
        %v3044 = vmul.f32 %v3035, %v3036
        %v3045 = vperm.slane %v685, 0
        %v3046 = vadd.f32 %v3037, %v3045
        %v3047 = vadd.f32 %v3038, %v3045
        %v3048 = vadd.f32 %v3039, %v3045
        %v3049 = vadd.f32 %v3040, %v3045
        %v3050 = vadd.f32 %v3041, %v3045
        %v3051 = vadd.f32 %v3042, %v3045
        %v3052 = vadd.f32 %v3043, %v3045
        %v3053 = vadd.f32 %v3044, %v3045
        %s3054 = scalar_lea.vmem %s7, 16
        %v3055 = vld [vmem:[%s3054] sm:$0xff]
        %v3056 = vld [vmem:[%s3054 + $0x8] sm:$0x1]
        %v3057 = vpack.c.bf16 %v3047, %v3046
        %v3058 = vpack.c.bf16 %v3049, %v3048
        %v3059 = vpack.c.bf16 %v3051, %v3050
        %v3060 = vpack.c.bf16 %v3053, %v3052
        %s3061 = scalar_lea.vmem [#allocation5], 192
        %v3062 = vld [vmem:[%s3061] sm:$0xff]
        %v3063 = vld [vmem:[%s3061 + $0x8] sm:$0xf]
        %v3064 = vld [vmem:[%s3061 + $0xc] sm:$0xff]
        %v3065 = vld [vmem:[%s3061 + $0x14] sm:$0xf]
        %v3066 = vld [vmem:[%s3061 + $0x18] sm:$0xff]
        %v3067 = vld [vmem:[%s3061 + $0x20] sm:$0xf]
        %v3068 = vld [vmem:[%s3061 + $0x24] sm:$0xff]
        %v3069 = vld [vmem:[%s3061 + $0x2c] sm:$0xf]
        %v3070 = vld [vmem:[%s3061 + $0x30] sm:$0xff]
        %v3071 = vld [vmem:[%s3061 + $0x38] sm:$0xf]
        %v3072 = vld [vmem:[%s3061 + $0x3c] sm:$0xff]
        %v3073 = vld [vmem:[%s3061 + $0x44] sm:$0xf]
        %v3074 = vld [vmem:[%s3061 + $0x48] sm:$0xff]
        %v3075 = vld [vmem:[%s3061 + $0x50] sm:$0xf]
        %v3076 = vld [vmem:[%s3061 + $0x54] sm:$0xff]
        %v3077 = vld [vmem:[%s3061 + $0x5c] sm:$0xf]
        %v3078 = vld [vmem:[%s3061 + $0x60] sm:$0xff]
        %v3079 = vld [vmem:[%s3061 + $0x68] sm:$0xf]
        %v3080 = vld [vmem:[%s3061 + $0x6c] sm:$0xff]
        %v3081 = vld [vmem:[%s3061 + $0x74] sm:$0xf]
        %v3082 = vld [vmem:[%s3061 + $0x78] sm:$0xff]
        %v3083 = vld [vmem:[%s3061 + $0x80] sm:$0xf]
        %v3084 = vld [vmem:[%s3061 + $0x84] sm:$0xff]
        %v3085 = vld [vmem:[%s3061 + $0x8c] sm:$0xf]
        %v3086 = vld [vmem:[%s3061 + $0x90] sm:$0xff]
        %v3087 = vld [vmem:[%s3061 + $0x98] sm:$0xf]
        %v3088 = vld [vmem:[%s3061 + $0x9c] sm:$0xff]
        %v3089 = vld [vmem:[%s3061 + $0xa4] sm:$0xf]
        %v3090 = vld [vmem:[%s3061 + $0xa8] sm:$0xff]
        %v3091 = vld [vmem:[%s3061 + $0xb0] sm:$0xf]
        %v3092 = vld [vmem:[%s3061 + $0xb4] sm:$0xff]
        %v3093 = vld [vmem:[%s3061 + $0xbc] sm:$0xf]
        %v3126 = vunpack.c.l.b16 %v3062
        %v3127 = vunpack.c.h.b16 %v3062
        %v3128 = vunpack.c.l.b16 %v3063
        %v3129 = vunpack.c.l.b16 %v3064
        %v3130 = vunpack.c.h.b16 %v3064
        %v3131 = vunpack.c.l.b16 %v3065
        %v3132 = vunpack.c.l.b16 %v3066
        %v3133 = vunpack.c.h.b16 %v3066
        %v3134 = vunpack.c.l.b16 %v3067
        %v3135 = vunpack.c.l.b16 %v3068
        %v3136 = vunpack.c.h.b16 %v3068
        %v3137 = vunpack.c.l.b16 %v3069
        %v3138 = vunpack.c.l.b16 %v3070
        %v3139 = vunpack.c.h.b16 %v3070
        %v3140 = vunpack.c.l.b16 %v3071
        %v3141 = vunpack.c.l.b16 %v3072
        %v3142 = vunpack.c.h.b16 %v3072
        %v3143 = vunpack.c.l.b16 %v3073
        %v3144 = vunpack.c.l.b16 %v3074
        %v3145 = vunpack.c.h.b16 %v3074
        %v3146 = vunpack.c.l.b16 %v3075
        %v3147 = vunpack.c.l.b16 %v3076
        %v3148 = vunpack.c.h.b16 %v3076
        %v3149 = vunpack.c.l.b16 %v3077
        %v3150 = vunpack.c.l.b16 %v3078
        %v3151 = vunpack.c.h.b16 %v3078
        %v3152 = vunpack.c.l.b16 %v3079
        %v3153 = vunpack.c.l.b16 %v3080
        %v3154 = vunpack.c.h.b16 %v3080
        %v3155 = vunpack.c.l.b16 %v3081
        %v3156 = vunpack.c.l.b16 %v3082
        %v3157 = vunpack.c.h.b16 %v3082
        %v3158 = vunpack.c.l.b16 %v3083
        %v3159 = vunpack.c.l.b16 %v3084
        %v3160 = vunpack.c.h.b16 %v3084
        %v3161 = vunpack.c.l.b16 %v3085
        %v3162 = vunpack.c.l.b16 %v3086
        %v3163 = vunpack.c.h.b16 %v3086
        %v3164 = vunpack.c.l.b16 %v3087
        %v3165 = vunpack.c.l.b16 %v3088
        %v3166 = vunpack.c.h.b16 %v3088
        %v3167 = vunpack.c.l.b16 %v3089
        %v3168 = vunpack.c.l.b16 %v3090
        %v3169 = vunpack.c.h.b16 %v3090
        %v3170 = vunpack.c.l.b16 %v3091
        %v3171 = vunpack.c.l.b16 %v3092
        %v3172 = vunpack.c.h.b16 %v3092
        %v3173 = vunpack.c.l.b16 %v3093
        %v3174 = vpack.c.b16 %v3129, %v3126
        %v3175 = vpack.c.b16 %v3130, %v3127
        %v3176 = vpack.c.b16 %v3131, %v3128
        %v3177 = vpack.c.b16 %v3135, %v3132
        %v3178 = vpack.c.b16 %v3136, %v3133
        %v3179 = vpack.c.b16 %v3137, %v3134
        %v3180 = vpack.c.b16 %v3141, %v3138
        %v3181 = vpack.c.b16 %v3142, %v3139
        %v3182 = vpack.c.b16 %v3143, %v3140
        %v3183 = vpack.c.b16 %v3147, %v3144
        %v3184 = vpack.c.b16 %v3148, %v3145
        %v3185 = vpack.c.b16 %v3149, %v3146
        %v3186 = vpack.c.b16 %v3153, %v3150
        %v3187 = vpack.c.b16 %v3154, %v3151
        %v3188 = vpack.c.b16 %v3155, %v3152
        %v3189 = vpack.c.b16 %v3159, %v3156
        %v3190 = vpack.c.b16 %v3160, %v3157
        %v3191 = vpack.c.b16 %v3161, %v3158
        %v3192 = vpack.c.b16 %v3165, %v3162
        %v3193 = vpack.c.b16 %v3166, %v3163
        %v3194 = vpack.c.b16 %v3167, %v3164
        %v3195 = vpack.c.b16 %v3171, %v3168
        %v3196 = vpack.c.b16 %v3172, %v3169
        %v3197 = vpack.c.b16 %v3173, %v3170
        %3222 = vmatpush.bf16.msra.mxu0 %v3195
        %3223 = vmatpush.bf16.msra.mxu0 %v3192
        %3224 = vmatpush.bf16.msra.mxu0 %v3189
        %3225 = vmatpush.bf16.msra.mxu0 %v3186
        %3226 = vmatpush.bf16.msra.mxu0 %v3183
        %3227 = vmatpush.bf16.msra.mxu0 %v3180
        %3228 = vmatpush.bf16.msra.mxu0 %v3177
        %3229 = vmatpush.bf16.msra.mxu0 %v3174
        %3230 = vmatmul.bf16.gmra.mxu0 %v3057
        %v3231 = vpop.f32.mrf.mxu0
        %v3232 = vadd.f32 0.0, %v3231
        %v3233 = vpop.f32.mrf.mxu0
        %v3234 = vadd.f32 0.0, %v3233
        %3235 = vmatmul.bf16.gmra.mxu0 %v3058
        %v3236 = vpop.f32.mrf.mxu0
        %v3237 = vadd.f32 0.0, %v3236
        %v3238 = vpop.f32.mrf.mxu0
        %v3239 = vadd.f32 0.0, %v3238
        %3240 = vmatmul.bf16.gmra.mxu0 %v3059
        %v3241 = vpop.f32.mrf.mxu0
        %v3242 = vadd.f32 0.0, %v3241
        %v3243 = vpop.f32.mrf.mxu0
        %v3244 = vadd.f32 0.0, %v3243
        %3245 = vmatmul.bf16.gmra.mxu0 %v3060
        %v3246 = vpop.f32.mrf.mxu0
        %v3247 = vadd.f32 0.0, %v3246
        %v3248 = vpop.f32.mrf.mxu0
        %v3249 = vadd.f32 0.0, %v3248
        %3250 = vdwg.mxu0
        %3251 = vmatpush.bf16.msra.mxu0 %v3196
        %3252 = vmatpush.bf16.msra.mxu0 %v3193
        %3253 = vmatpush.bf16.msra.mxu0 %v3190
        %3254 = vmatpush.bf16.msra.mxu0 %v3187
        %3255 = vmatpush.bf16.msra.mxu0 %v3184
        %3256 = vmatpush.bf16.msra.mxu0 %v3181
        %3257 = vmatpush.bf16.msra.mxu0 %v3178
        %3258 = vmatpush.bf16.msra.mxu0 %v3175
        %3259 = vmatmul.bf16.gmra.mxu0 %v3057
        %v3260 = vpop.f32.mrf.mxu0
        %v3261 = vadd.f32 0.0, %v3260
        %v3262 = vpop.f32.mrf.mxu0
        %v3263 = vadd.f32 0.0, %v3262
        %3264 = vmatmul.bf16.gmra.mxu0 %v3058
        %v3265 = vpop.f32.mrf.mxu0
        %v3266 = vadd.f32 0.0, %v3265
        %v3267 = vpop.f32.mrf.mxu0
        %v3268 = vadd.f32 0.0, %v3267
        %3269 = vmatmul.bf16.gmra.mxu0 %v3059
        %v3270 = vpop.f32.mrf.mxu0
        %v3271 = vadd.f32 0.0, %v3270
        %v3272 = vpop.f32.mrf.mxu0
        %v3273 = vadd.f32 0.0, %v3272
        %3274 = vmatmul.bf16.gmra.mxu0 %v3060
        %v3275 = vpop.f32.mrf.mxu0
        %v3276 = vadd.f32 0.0, %v3275
        %v3277 = vpop.f32.mrf.mxu0
        %v3278 = vadd.f32 0.0, %v3277
        %3279 = vdwg.mxu0
        %3280 = vmatpush.bf16.msra.mxu0 %v3197
        %3281 = vmatpush.bf16.msra.mxu0 %v3194
        %3282 = vmatpush.bf16.msra.mxu0 %v3191
        %3283 = vmatpush.bf16.msra.mxu0 %v3188
        %3284 = vmatpush.bf16.msra.mxu0 %v3185
        %3285 = vmatpush.bf16.msra.mxu0 %v3182
        %3286 = vmatpush.bf16.msra.mxu0 %v3179
        %3287 = vmatpush.bf16.msra.mxu0 %v3176
        %3288 = vmatmul.bf16.gmra.mxu0 %v3057
        %v3289 = vpop.f32.mrf.mxu0
        %v3290 = vadd.f32 0.0, %v3289
        %v3291 = vpop.f32.mrf.mxu0
        %v3292 = vadd.f32 0.0, %v3291
        %3293 = vmatmul.bf16.gmra.mxu0 %v3058
        %v3294 = vpop.f32.mrf.mxu0
        %v3295 = vadd.f32 0.0, %v3294
        %v3296 = vpop.f32.mrf.mxu0
        %v3297 = vadd.f32 0.0, %v3296
        %3298 = vmatmul.bf16.gmra.mxu0 %v3059
        %v3299 = vpop.f32.mrf.mxu0
        %v3300 = vadd.f32 0.0, %v3299
        %v3301 = vpop.f32.mrf.mxu0
        %v3302 = vadd.f32 0.0, %v3301
        %3303 = vmatmul.bf16.gmra.mxu0 %v3060
        %v3304 = vpop.f32.mrf.mxu0
        %v3305 = vadd.f32 0.0, %v3304
        %v3306 = vpop.f32.mrf.mxu0
        %v3307 = vadd.f32 0.0, %v3306
        %3308 = vdwg.mxu0
        %v3309 = vperm.slane %v3055, 0
        %v3310 = vadd.f32 %v3232, %v3309
        %v3311 = vadd.f32 %v3234, %v3309
        %v3312 = vadd.f32 %v3237, %v3309
        %v3313 = vadd.f32 %v3239, %v3309
        %v3314 = vadd.f32 %v3242, %v3309
        %v3315 = vadd.f32 %v3244, %v3309
        %v3316 = vadd.f32 %v3247, %v3309
        %v3317 = vadd.f32 %v3249, %v3309
        %v3318 = vpack.c.bf16 %v3310, %v3310
        %v3319 = vpack.c.bf16 %v3311, %v3311
        %v3320 = vpack.c.bf16 %v3312, %v3312
        %v3321 = vpack.c.bf16 %v3313, %v3313
        %v3322 = vpack.c.bf16 %v3314, %v3314
        %v3323 = vpack.c.bf16 %v3315, %v3315
        %v3324 = vpack.c.bf16 %v3316, %v3316
        %v3325 = vpack.c.bf16 %v3317, %v3317
        %v3326 = vperm.slane %v3055, 1
        %v3327 = vadd.f32 %v3261, %v3326
        %v3328 = vadd.f32 %v3263, %v3326
        %v3329 = vadd.f32 %v3266, %v3326
        %v3330 = vadd.f32 %v3268, %v3326
        %v3331 = vadd.f32 %v3271, %v3326
        %v3332 = vadd.f32 %v3273, %v3326
        %v3333 = vadd.f32 %v3276, %v3326
        %v3334 = vadd.f32 %v3278, %v3326
        %v3335 = vpack.c.bf16 %v3327, %v3327
        %v3336 = vpack.c.bf16 %v3328, %v3328
        %v3337 = vpack.c.bf16 %v3329, %v3329
        %v3338 = vpack.c.bf16 %v3330, %v3330
        %v3339 = vpack.c.bf16 %v3331, %v3331
        %v3340 = vpack.c.bf16 %v3332, %v3332
        %v3341 = vpack.c.bf16 %v3333, %v3333
        %v3342 = vpack.c.bf16 %v3334, %v3334
        %v3343 = vperm.slane %v3055, 2
        %v3344 = vadd.f32 %v3290, %v3343
        %v3345 = vadd.f32 %v3292, %v3343
        %v3346 = vadd.f32 %v3295, %v3343
        %v3347 = vadd.f32 %v3297, %v3343
        %v3348 = vadd.f32 %v3300, %v3343
        %v3349 = vadd.f32 %v3302, %v3343
        %v3350 = vadd.f32 %v3305, %v3343
        %v3351 = vadd.f32 %v3307, %v3343
        %v3352 = vpack.c.bf16 %v3344, %v3344
        %v3353 = vpack.c.bf16 %v3345, %v3345
        %v3354 = vpack.c.bf16 %v3346, %v3346
        %v3355 = vpack.c.bf16 %v3347, %v3347
        %v3356 = vpack.c.bf16 %v3348, %v3348
        %v3357 = vpack.c.bf16 %v3349, %v3349
        %v3358 = vpack.c.bf16 %v3350, %v3350
        %v3359 = vpack.c.bf16 %v3351, %v3351
        %v3368 = vunpack.c.l.b16 %v3318
        %v3369 = vunpack.c.l.b16 %v3319
        %v3370 = vunpack.c.l.b16 %v3320
        %v3371 = vunpack.c.l.b16 %v3321
        %v3372 = vunpack.c.l.b16 %v3322
        %v3373 = vunpack.c.l.b16 %v3323
        %v3374 = vunpack.c.l.b16 %v3324
        %v3375 = vunpack.c.l.b16 %v3325
        %v3376 = vpack.c.b16 %v3369, %v3368
        %v3377 = vpack.c.b16 %v3371, %v3370
        %v3378 = vpack.c.b16 %v3373, %v3372
        %v3379 = vpack.c.b16 %v3375, %v3374
        %v3388 = vunpack.c.l.b16 %v3335
        %v3389 = vunpack.c.l.b16 %v3336
        %v3390 = vunpack.c.l.b16 %v3337
        %v3391 = vunpack.c.l.b16 %v3338
        %v3392 = vunpack.c.l.b16 %v3339
        %v3393 = vunpack.c.l.b16 %v3340
        %v3394 = vunpack.c.l.b16 %v3341
        %v3395 = vunpack.c.l.b16 %v3342
        %v3396 = vpack.c.b16 %v3389, %v3388
        %v3397 = vpack.c.b16 %v3391, %v3390
        %v3398 = vpack.c.b16 %v3393, %v3392
        %v3399 = vpack.c.b16 %v3395, %v3394
        %v3401 = vsel %vm1028, %v3376, 0
        %v3404 = vsel %vm1028, %v3377, 0
        %v3407 = vsel %vm1028, %v3378, 0
        %v3410 = vsel %vm1028, %v3379, 0
        %v3413 = vsel %vm1028, %v3396, 0
        %v3416 = vsel %vm1028, %v3397, 0
        %v3419 = vsel %vm1028, %v3398, 0
        %v3422 = vsel %vm1028, %v3399, 0
        %3424 = vmatpush.bf16.xpose.msra.mxu0 0
        %3425 = vmatpush.bf16.xpose.msra.mxu0 0
        %3426 = vmatpush.bf16.xpose.msra.mxu0 0
        %3427 = vmatpush.bf16.xpose.msra.mxu0 0
        %3428 = vmatpush.bf16.xpose.msra.mxu0 %v3422
        %3429 = vmatpush.bf16.xpose.msra.mxu0 %v3419
        %3430 = vmatpush.bf16.xpose.msra.mxu0 %v3416
        %3431 = vmatpush.bf16.xpose.msra.mxu0 %v3413
        %3432 = vmatmul.bf16.gmra.mxu0 %v3401
        %v3433 = vpop.f32.mrf.mxu0
        %v3434 = vadd.f32 %v683, %v3433
        %v3435 = vpop.f32.mrf.mxu0
        %v3436 = vadd.f32 %v683, %v3435
        %3437 = vmatmul.bf16.gmra.mxu0 %v3404
        %v3438 = vpop.f32.mrf.mxu0
        %v3439 = vadd.f32 %v683, %v3438
        %v3440 = vpop.f32.mrf.mxu0
        %v3441 = vadd.f32 %v683, %v3440
        %3442 = vmatmul.bf16.gmra.mxu0 %v3407
        %v3443 = vpop.f32.mrf.mxu0
        %v3444 = vadd.f32 %v683, %v3443
        %v3445 = vpop.f32.mrf.mxu0
        %v3446 = vadd.f32 %v683, %v3445
        %3447 = vmatmul.bf16.gmra.mxu0 %v3410
        %v3448 = vpop.f32.mrf.mxu0
        %v3449 = vadd.f32 %v683, %v3448
        %v3450 = vpop.f32.mrf.mxu0
        %v3451 = vadd.f32 %v683, %v3450
        %3452 = vdwg.mxu0
        %v3453 = vsel %vm1082, %v3434, -inf
        %3454 = vmax.xlane.f32.xlu0 %v3453
        %v3455 = vpop.xlane.xlu0 %3454
        %v3456 = vsel %vm1082, %v3436, -inf
        %3457 = vmax.xlane.f32.xlu0 %v3456
        %v3458 = vpop.xlane.xlu0 %3457
        %v3459 = vsel %vm1082, %v3439, -inf
        %3460 = vmax.xlane.f32.xlu0 %v3459
        %v3461 = vpop.xlane.xlu0 %3460
        %v3462 = vsel %vm1082, %v3441, -inf
        %3463 = vmax.xlane.f32.xlu0 %v3462
        %v3464 = vpop.xlane.xlu0 %3463
        %v3465 = vsel %vm1082, %v3444, -inf
        %3466 = vmax.xlane.f32.xlu0 %v3465
        %v3467 = vpop.xlane.xlu0 %3466
        %v3468 = vsel %vm1082, %v3446, -inf
        %3469 = vmax.xlane.f32.xlu0 %v3468
        %v3470 = vpop.xlane.xlu0 %3469
        %v3471 = vsel %vm1082, %v3449, -inf
        %3472 = vmax.xlane.f32.xlu0 %v3471
        %v3473 = vpop.xlane.xlu0 %3472
        %v3474 = vsel %vm1082, %v3451, -inf
        %3475 = vmax.xlane.f32.xlu0 %v3474
        %v3476 = vpop.xlane.xlu0 %3475
        %v3477 = vsub.f32 %v3434, %v3455
        %v3478 = vsub.f32 %v3436, %v3458
        %v3479 = vsub.f32 %v3439, %v3461
        %v3480 = vsub.f32 %v3441, %v3464
        %v3481 = vsub.f32 %v3444, %v3467
        %v3482 = vsub.f32 %v3446, %v3470
        %v3483 = vsub.f32 %v3449, %v3473
        %v3484 = vsub.f32 %v3451, %v3476
        %v3485 = vmul.f32 %v3477, 1.442695
        %v3486 = vpow.pop %v3485
        %v3487 = vmul.f32 %v3478, 1.442695
        %v3488 = vpow.pop %v3487
        %v3489 = vmul.f32 %v3479, 1.442695
        %v3490 = vpow.pop %v3489
        %v3491 = vmul.f32 %v3480, 1.442695
        %v3492 = vpow.pop %v3491
        %v3493 = vmul.f32 %v3481, 1.442695
        %v3494 = vpow.pop %v3493
        %v3495 = vmul.f32 %v3482, 1.442695
        %v3496 = vpow.pop %v3495
        %v3497 = vmul.f32 %v3483, 1.442695
        %v3498 = vpow.pop %v3497
        %v3499 = vmul.f32 %v3484, 1.442695
        %v3500 = vpow.pop %v3499
        %v3501 = vsel %vm1082, %v3486, 0.0
        %3502 = vadd.xlane.f32.xlu0 %v3501
        %v3503 = vpop.xlane.xlu0 %3502
        %v3504 = vsel %vm1082, %v3488, 0.0
        %3505 = vadd.xlane.f32.xlu0 %v3504
        %v3506 = vpop.xlane.xlu0 %3505
        %v3507 = vsel %vm1082, %v3490, 0.0
        %3508 = vadd.xlane.f32.xlu0 %v3507
        %v3509 = vpop.xlane.xlu0 %3508
        %v3510 = vsel %vm1082, %v3492, 0.0
        %3511 = vadd.xlane.f32.xlu0 %v3510
        %v3512 = vpop.xlane.xlu0 %3511
        %v3513 = vsel %vm1082, %v3494, 0.0
        %3514 = vadd.xlane.f32.xlu0 %v3513
        %v3515 = vpop.xlane.xlu0 %3514
        %v3516 = vsel %vm1082, %v3496, 0.0
        %3517 = vadd.xlane.f32.xlu0 %v3516
        %v3518 = vpop.xlane.xlu0 %3517
        %v3519 = vsel %vm1082, %v3498, 0.0
        %3520 = vadd.xlane.f32.xlu0 %v3519
        %v3521 = vpop.xlane.xlu0 %3520
        %v3522 = vsel %vm1082, %v3500, 0.0
        %3523 = vadd.xlane.f32.xlu0 %v3522
        %v3524 = vpop.xlane.xlu0 %3523
        %v3525 = vrcp.pop %v3503
        %v3526 = vrcp.pop %v3506
        %v3527 = vrcp.pop %v3509
        %v3528 = vrcp.pop %v3512
        %v3529 = vrcp.pop %v3515
        %v3530 = vrcp.pop %v3518
        %v3531 = vrcp.pop %v3521
        %v3532 = vrcp.pop %v3524
        %v3533 = vmul.f32 %v3486, %v3525
        %v3534 = vmul.f32 %v3488, %v3526
        %v3535 = vmul.f32 %v3490, %v3527
        %v3536 = vmul.f32 %v3492, %v3528
        %v3537 = vmul.f32 %v3494, %v3529
        %v3538 = vmul.f32 %v3496, %v3530
        %v3539 = vmul.f32 %v3498, %v3531
        %v3540 = vmul.f32 %v3500, %v3532
        %v3541 = vpack.c.bf16 %v3534, %v3533
        %v3542 = vpack.c.bf16 %v3536, %v3535
        %v3543 = vpack.c.bf16 %v3538, %v3537
        %v3544 = vpack.c.bf16 %v3540, %v3539
        %v3553 = vunpack.c.l.b16 %v3352
        %v3554 = vunpack.c.l.b16 %v3353
        %v3555 = vunpack.c.l.b16 %v3354
        %v3556 = vunpack.c.l.b16 %v3355
        %v3557 = vunpack.c.l.b16 %v3356
        %v3558 = vunpack.c.l.b16 %v3357
        %v3559 = vunpack.c.l.b16 %v3358
        %v3560 = vunpack.c.l.b16 %v3359
        %v3561 = vpack.c.b16 %v3554, %v3553
        %v3562 = vpack.c.b16 %v3556, %v3555
        %v3563 = vpack.c.b16 %v3558, %v3557
        %v3564 = vpack.c.b16 %v3560, %v3559
        %v3570 = vsel %vm1082, %v3541, 0
        %v3573 = vsel %vm1082, %v3542, 0
        %v3576 = vsel %vm1082, %v3543, 0
        %v3579 = vsel %vm1082, %v3544, 0
        %3581 = vmatpush.bf16.msra.mxu0 0
        %3582 = vmatpush.bf16.msra.mxu0 0
        %3583 = vmatpush.bf16.msra.mxu0 0
        %3584 = vmatpush.bf16.msra.mxu0 0
        %3585 = vmatpush.bf16.msra.mxu0 %v3564
        %3586 = vmatpush.bf16.msra.mxu0 %v3563
        %3587 = vmatpush.bf16.msra.mxu0 %v3562
        %3588 = vmatpush.bf16.msra.mxu0 %v3561
        %3589 = vmatmul.bf16.gmra.mxu0 %v3570
        %v3590 = vpop.f32.mrf.mxu0
        %v3591 = vadd.f32 0.0, %v3590
        %v3592 = vpop.f32.mrf.mxu0
        %v3593 = vadd.f32 0.0, %v3592
        %3594 = vmatmul.bf16.gmra.mxu0 %v3573
        %v3595 = vpop.f32.mrf.mxu0
        %v3596 = vadd.f32 0.0, %v3595
        %v3597 = vpop.f32.mrf.mxu0
        %v3598 = vadd.f32 0.0, %v3597
        %3599 = vmatmul.bf16.gmra.mxu0 %v3576
        %v3600 = vpop.f32.mrf.mxu0
        %v3601 = vadd.f32 0.0, %v3600
        %v3602 = vpop.f32.mrf.mxu0
        %v3603 = vadd.f32 0.0, %v3602
        %3604 = vmatmul.bf16.gmra.mxu0 %v3579
        %v3605 = vpop.f32.mrf.mxu0
        %v3606 = vadd.f32 0.0, %v3605
        %v3607 = vpop.f32.mrf.mxu0
        %v3608 = vadd.f32 0.0, %v3607
        %3609 = vdwg.mxu0
        %v3610 = vpack.c.bf16 %v3591, %v3591
        %v3611 = vpack.c.bf16 %v3593, %v3593
        %v3612 = vpack.c.bf16 %v3596, %v3596
        %v3613 = vpack.c.bf16 %v3598, %v3598
        %v3614 = vpack.c.bf16 %v3601, %v3601
        %v3615 = vpack.c.bf16 %v3603, %v3603
        %v3616 = vpack.c.bf16 %v3606, %v3606
        %v3617 = vpack.c.bf16 %v3608, %v3608
        %3618 = vst.msk [vmem:[#allocation2] sm:$0xf] %vm1248, %v3610
        %3619 = vst.msk [vmem:[#allocation2 + $0x4] sm:$0xf] %vm1248, %v3611
        %3620 = vst.msk [vmem:[#allocation2 + $0x8] sm:$0xf] %vm1248, %v3612
        %3621 = vst.msk [vmem:[#allocation2 + $0xc] sm:$0xf] %vm1248, %v3613
        %3622 = vst.msk [vmem:[#allocation2 + $0x10] sm:$0xf] %vm1248, %v3614
        %3623 = vst.msk [vmem:[#allocation2 + $0x14] sm:$0xf] %vm1248, %v3615
        %3624 = vst.msk [vmem:[#allocation2 + $0x18] sm:$0xf] %vm1248, %v3616
        %3625 = vst.msk [vmem:[#allocation2 + $0x1c] sm:$0xf] %vm1248, %v3617
        %3626 = vrot.lane.b32.xlu0 %v3376, 96
        %v3627 = vpop.permute.xlu0 %3626
        %3628 = vrot.lane.b32.xlu0 %v3377, 96
        %v3629 = vpop.permute.xlu0 %3628
        %3630 = vrot.lane.b32.xlu0 %v3378, 96
        %v3631 = vpop.permute.xlu0 %3630
        %3632 = vrot.lane.b32.xlu0 %v3379, 96
        %v3633 = vpop.permute.xlu0 %3632
        %3634 = vrot.lane.b32.xlu0 %v3396, 96
        %v3635 = vpop.permute.xlu0 %3634
        %3636 = vrot.lane.b32.xlu0 %v3397, 96
        %v3637 = vpop.permute.xlu0 %3636
        %3638 = vrot.lane.b32.xlu0 %v3398, 96
        %v3639 = vpop.permute.xlu0 %3638
        %3640 = vrot.lane.b32.xlu0 %v3399, 96
        %v3641 = vpop.permute.xlu0 %3640
        %v3643 = vsel %vm1028, %v3627, 0
        %v3646 = vsel %vm1028, %v3629, 0
        %v3649 = vsel %vm1028, %v3631, 0
        %v3652 = vsel %vm1028, %v3633, 0
        %v3655 = vsel %vm1028, %v3635, 0
        %v3658 = vsel %vm1028, %v3637, 0
        %v3661 = vsel %vm1028, %v3639, 0
        %v3664 = vsel %vm1028, %v3641, 0
        %3666 = vmatpush.bf16.xpose.msra.mxu0 0
        %3667 = vmatpush.bf16.xpose.msra.mxu0 0
        %3668 = vmatpush.bf16.xpose.msra.mxu0 0
        %3669 = vmatpush.bf16.xpose.msra.mxu0 0
        %3670 = vmatpush.bf16.xpose.msra.mxu0 %v3664
        %3671 = vmatpush.bf16.xpose.msra.mxu0 %v3661
        %3672 = vmatpush.bf16.xpose.msra.mxu0 %v3658
        %3673 = vmatpush.bf16.xpose.msra.mxu0 %v3655
        %3674 = vmatmul.bf16.gmra.mxu0 %v3643
        %v3675 = vpop.f32.mrf.mxu0
        %v3676 = vadd.f32 %v683, %v3675
        %v3677 = vpop.f32.mrf.mxu0
        %v3678 = vadd.f32 %v683, %v3677
        %3679 = vmatmul.bf16.gmra.mxu0 %v3646
        %v3680 = vpop.f32.mrf.mxu0
        %v3681 = vadd.f32 %v683, %v3680
        %v3682 = vpop.f32.mrf.mxu0
        %v3683 = vadd.f32 %v683, %v3682
        %3684 = vmatmul.bf16.gmra.mxu0 %v3649
        %v3685 = vpop.f32.mrf.mxu0
        %v3686 = vadd.f32 %v683, %v3685
        %v3687 = vpop.f32.mrf.mxu0
        %v3688 = vadd.f32 %v683, %v3687
        %3689 = vmatmul.bf16.gmra.mxu0 %v3652
        %v3690 = vpop.f32.mrf.mxu0
        %v3691 = vadd.f32 %v683, %v3690
        %v3692 = vpop.f32.mrf.mxu0
        %v3693 = vadd.f32 %v683, %v3692
        %3694 = vdwg.mxu0
        %v3695 = vsel %vm1082, %v3676, -inf
        %3696 = vmax.xlane.f32.xlu0 %v3695
        %v3697 = vpop.xlane.xlu0 %3696
        %v3698 = vsel %vm1082, %v3678, -inf
        %3699 = vmax.xlane.f32.xlu0 %v3698
        %v3700 = vpop.xlane.xlu0 %3699
        %v3701 = vsel %vm1082, %v3681, -inf
        %3702 = vmax.xlane.f32.xlu0 %v3701
        %v3703 = vpop.xlane.xlu0 %3702
        %v3704 = vsel %vm1082, %v3683, -inf
        %3705 = vmax.xlane.f32.xlu0 %v3704
        %v3706 = vpop.xlane.xlu0 %3705
        %v3707 = vsel %vm1082, %v3686, -inf
        %3708 = vmax.xlane.f32.xlu0 %v3707
        %v3709 = vpop.xlane.xlu0 %3708
        %v3710 = vsel %vm1082, %v3688, -inf
        %3711 = vmax.xlane.f32.xlu0 %v3710
        %v3712 = vpop.xlane.xlu0 %3711
        %v3713 = vsel %vm1082, %v3691, -inf
        %3714 = vmax.xlane.f32.xlu0 %v3713
        %v3715 = vpop.xlane.xlu0 %3714
        %v3716 = vsel %vm1082, %v3693, -inf
        %3717 = vmax.xlane.f32.xlu0 %v3716
        %v3718 = vpop.xlane.xlu0 %3717
        %v3719 = vsub.f32 %v3676, %v3697
        %v3720 = vsub.f32 %v3678, %v3700
        %v3721 = vsub.f32 %v3681, %v3703
        %v3722 = vsub.f32 %v3683, %v3706
        %v3723 = vsub.f32 %v3686, %v3709
        %v3724 = vsub.f32 %v3688, %v3712
        %v3725 = vsub.f32 %v3691, %v3715
        %v3726 = vsub.f32 %v3693, %v3718
        %v3727 = vmul.f32 %v3719, 1.442695
        %v3728 = vpow.pop %v3727
        %v3729 = vmul.f32 %v3720, 1.442695
        %v3730 = vpow.pop %v3729
        %v3731 = vmul.f32 %v3721, 1.442695
        %v3732 = vpow.pop %v3731
        %v3733 = vmul.f32 %v3722, 1.442695
        %v3734 = vpow.pop %v3733
        %v3735 = vmul.f32 %v3723, 1.442695
        %v3736 = vpow.pop %v3735
        %v3737 = vmul.f32 %v3724, 1.442695
        %v3738 = vpow.pop %v3737
        %v3739 = vmul.f32 %v3725, 1.442695
        %v3740 = vpow.pop %v3739
        %v3741 = vmul.f32 %v3726, 1.442695
        %v3742 = vpow.pop %v3741
        %v3743 = vsel %vm1082, %v3728, 0.0
        %3744 = vadd.xlane.f32.xlu0 %v3743
        %v3745 = vpop.xlane.xlu0 %3744
        %v3746 = vsel %vm1082, %v3730, 0.0
        %3747 = vadd.xlane.f32.xlu0 %v3746
        %v3748 = vpop.xlane.xlu0 %3747
        %v3749 = vsel %vm1082, %v3732, 0.0
        %3750 = vadd.xlane.f32.xlu0 %v3749
        %v3751 = vpop.xlane.xlu0 %3750
        %v3752 = vsel %vm1082, %v3734, 0.0
        %3753 = vadd.xlane.f32.xlu0 %v3752
        %v3754 = vpop.xlane.xlu0 %3753
        %v3755 = vsel %vm1082, %v3736, 0.0
        %3756 = vadd.xlane.f32.xlu0 %v3755
        %v3757 = vpop.xlane.xlu0 %3756
        %v3758 = vsel %vm1082, %v3738, 0.0
        %3759 = vadd.xlane.f32.xlu0 %v3758
        %v3760 = vpop.xlane.xlu0 %3759
        %v3761 = vsel %vm1082, %v3740, 0.0
        %3762 = vadd.xlane.f32.xlu0 %v3761
        %v3763 = vpop.xlane.xlu0 %3762
        %v3764 = vsel %vm1082, %v3742, 0.0
        %3765 = vadd.xlane.f32.xlu0 %v3764
        %v3766 = vpop.xlane.xlu0 %3765
        %v3767 = vrcp.pop %v3745
        %v3768 = vrcp.pop %v3748
        %v3769 = vrcp.pop %v3751
        %v3770 = vrcp.pop %v3754
        %v3771 = vrcp.pop %v3757
        %v3772 = vrcp.pop %v3760
        %v3773 = vrcp.pop %v3763
        %v3774 = vrcp.pop %v3766
        %v3775 = vmul.f32 %v3728, %v3767
        %v3776 = vmul.f32 %v3730, %v3768
        %v3777 = vmul.f32 %v3732, %v3769
        %v3778 = vmul.f32 %v3734, %v3770
        %v3779 = vmul.f32 %v3736, %v3771
        %v3780 = vmul.f32 %v3738, %v3772
        %v3781 = vmul.f32 %v3740, %v3773
        %v3782 = vmul.f32 %v3742, %v3774
        %v3783 = vpack.c.bf16 %v3776, %v3775
        %v3784 = vpack.c.bf16 %v3778, %v3777
        %v3785 = vpack.c.bf16 %v3780, %v3779
        %v3786 = vpack.c.bf16 %v3782, %v3781
        %3787 = vrot.lane.b32.xlu0 %v3561, 96
        %v3788 = vpop.permute.xlu0 %3787
        %3789 = vrot.lane.b32.xlu0 %v3562, 96
        %v3790 = vpop.permute.xlu0 %3789
        %3791 = vrot.lane.b32.xlu0 %v3563, 96
        %v3792 = vpop.permute.xlu0 %3791
        %3793 = vrot.lane.b32.xlu0 %v3564, 96
        %v3794 = vpop.permute.xlu0 %3793
        %v3800 = vsel %vm1082, %v3783, 0
        %v3803 = vsel %vm1082, %v3784, 0
        %v3806 = vsel %vm1082, %v3785, 0
        %v3809 = vsel %vm1082, %v3786, 0
        %3811 = vmatpush.bf16.msra.mxu0 0
        %3812 = vmatpush.bf16.msra.mxu0 0
        %3813 = vmatpush.bf16.msra.mxu0 0
        %3814 = vmatpush.bf16.msra.mxu0 0
        %3815 = vmatpush.bf16.msra.mxu0 %v3794
        %3816 = vmatpush.bf16.msra.mxu0 %v3792
        %3817 = vmatpush.bf16.msra.mxu0 %v3790
        %3818 = vmatpush.bf16.msra.mxu0 %v3788
        %3819 = vmatmul.bf16.gmra.mxu0 %v3800
        %v3820 = vpop.f32.mrf.mxu0
        %v3821 = vadd.f32 0.0, %v3820
        %v3822 = vpop.f32.mrf.mxu0
        %v3823 = vadd.f32 0.0, %v3822
        %3824 = vmatmul.bf16.gmra.mxu0 %v3803
        %v3825 = vpop.f32.mrf.mxu0
        %v3826 = vadd.f32 0.0, %v3825
        %v3827 = vpop.f32.mrf.mxu0
        %v3828 = vadd.f32 0.0, %v3827
        %3829 = vmatmul.bf16.gmra.mxu0 %v3806
        %v3830 = vpop.f32.mrf.mxu0
        %v3831 = vadd.f32 0.0, %v3830
        %v3832 = vpop.f32.mrf.mxu0
        %v3833 = vadd.f32 0.0, %v3832
        %3834 = vmatmul.bf16.gmra.mxu0 %v3809
        %v3835 = vpop.f32.mrf.mxu0
        %v3836 = vadd.f32 0.0, %v3835
        %v3837 = vpop.f32.mrf.mxu0
        %v3838 = vadd.f32 0.0, %v3837
        %3839 = vdwg.mxu0
        %v3840 = vpack.c.bf16 %v3821, %v3821
        %v3841 = vpack.c.bf16 %v3823, %v3823
        %v3842 = vpack.c.bf16 %v3826, %v3826
        %v3843 = vpack.c.bf16 %v3828, %v3828
        %v3844 = vpack.c.bf16 %v3831, %v3831
        %v3845 = vpack.c.bf16 %v3833, %v3833
        %v3846 = vpack.c.bf16 %v3836, %v3836
        %v3847 = vpack.c.bf16 %v3838, %v3838
        %3856 = vrot.lane.b32.xlu0 %v3840, 32
        %v3857 = vpop.permute.xlu0 %3856
        %3858 = vrot.lane.b32.xlu0 %v3841, 32
        %v3859 = vpop.permute.xlu0 %3858
        %3860 = vrot.lane.b32.xlu0 %v3842, 32
        %v3861 = vpop.permute.xlu0 %3860
        %3862 = vrot.lane.b32.xlu0 %v3843, 32
        %v3863 = vpop.permute.xlu0 %3862
        %3864 = vrot.lane.b32.xlu0 %v3844, 32
        %v3865 = vpop.permute.xlu0 %3864
        %3866 = vrot.lane.b32.xlu0 %v3845, 32
        %v3867 = vpop.permute.xlu0 %3866
        %3868 = vrot.lane.b32.xlu0 %v3846, 32
        %v3869 = vpop.permute.xlu0 %3868
        %3870 = vrot.lane.b32.xlu0 %v3847, 32
        %v3871 = vpop.permute.xlu0 %3870
        %3880 = vst.msk [vmem:[#allocation2] sm:$0xf] %vm1511, %v3857
        %3881 = vst.msk [vmem:[#allocation2 + $0x4] sm:$0xf] %vm1511, %v3859
        %3882 = vst.msk [vmem:[#allocation2 + $0x8] sm:$0xf] %vm1511, %v3861
        %3883 = vst.msk [vmem:[#allocation2 + $0xc] sm:$0xf] %vm1511, %v3863
        %3884 = vst.msk [vmem:[#allocation2 + $0x10] sm:$0xf] %vm1511, %v3865
        %3885 = vst.msk [vmem:[#allocation2 + $0x14] sm:$0xf] %vm1511, %v3867
        %3886 = vst.msk [vmem:[#allocation2 + $0x18] sm:$0xf] %vm1511, %v3869
        %3887 = vst.msk [vmem:[#allocation2 + $0x1c] sm:$0xf] %vm1511, %v3871
        %3888 = vrot.lane.b32.xlu0 %v3376, 64
        %v3889 = vpop.permute.xlu0 %3888
        %3890 = vrot.lane.b32.xlu0 %v3377, 64
        %v3891 = vpop.permute.xlu0 %3890
        %3892 = vrot.lane.b32.xlu0 %v3378, 64
        %v3893 = vpop.permute.xlu0 %3892
        %3894 = vrot.lane.b32.xlu0 %v3379, 64
        %v3895 = vpop.permute.xlu0 %3894
        %3896 = vrot.lane.b32.xlu0 %v3396, 64
        %v3897 = vpop.permute.xlu0 %3896
        %3898 = vrot.lane.b32.xlu0 %v3397, 64
        %v3899 = vpop.permute.xlu0 %3898
        %3900 = vrot.lane.b32.xlu0 %v3398, 64
        %v3901 = vpop.permute.xlu0 %3900
        %3902 = vrot.lane.b32.xlu0 %v3399, 64
        %v3903 = vpop.permute.xlu0 %3902
        %v3905 = vsel %vm1028, %v3889, 0
        %v3908 = vsel %vm1028, %v3891, 0
        %v3911 = vsel %vm1028, %v3893, 0
        %v3914 = vsel %vm1028, %v3895, 0
        %v3917 = vsel %vm1028, %v3897, 0
        %v3920 = vsel %vm1028, %v3899, 0
        %v3923 = vsel %vm1028, %v3901, 0
        %v3926 = vsel %vm1028, %v3903, 0
        %3928 = vmatpush.bf16.xpose.msra.mxu0 0
        %3929 = vmatpush.bf16.xpose.msra.mxu0 0
        %3930 = vmatpush.bf16.xpose.msra.mxu0 0
        %3931 = vmatpush.bf16.xpose.msra.mxu0 0
        %3932 = vmatpush.bf16.xpose.msra.mxu0 %v3926
        %3933 = vmatpush.bf16.xpose.msra.mxu0 %v3923
        %3934 = vmatpush.bf16.xpose.msra.mxu0 %v3920
        %3935 = vmatpush.bf16.xpose.msra.mxu0 %v3917
        %3936 = vmatmul.bf16.gmra.mxu0 %v3905
        %v3937 = vpop.f32.mrf.mxu0
        %v3938 = vadd.f32 %v683, %v3937
        %v3939 = vpop.f32.mrf.mxu0
        %v3940 = vadd.f32 %v683, %v3939
        %3941 = vmatmul.bf16.gmra.mxu0 %v3908
        %v3942 = vpop.f32.mrf.mxu0
        %v3943 = vadd.f32 %v683, %v3942
        %v3944 = vpop.f32.mrf.mxu0
        %v3945 = vadd.f32 %v683, %v3944
        %3946 = vmatmul.bf16.gmra.mxu0 %v3911
        %v3947 = vpop.f32.mrf.mxu0
        %v3948 = vadd.f32 %v683, %v3947
        %v3949 = vpop.f32.mrf.mxu0
        %v3950 = vadd.f32 %v683, %v3949
        %3951 = vmatmul.bf16.gmra.mxu0 %v3914
        %v3952 = vpop.f32.mrf.mxu0
        %v3953 = vadd.f32 %v683, %v3952
        %v3954 = vpop.f32.mrf.mxu0
        %v3955 = vadd.f32 %v683, %v3954
        %3956 = vdwg.mxu0
        %v3957 = vsel %vm1082, %v3938, -inf
        %3958 = vmax.xlane.f32.xlu0 %v3957
        %v3959 = vpop.xlane.xlu0 %3958
        %v3960 = vsel %vm1082, %v3940, -inf
        %3961 = vmax.xlane.f32.xlu0 %v3960
        %v3962 = vpop.xlane.xlu0 %3961
        %v3963 = vsel %vm1082, %v3943, -inf
        %3964 = vmax.xlane.f32.xlu0 %v3963
        %v3965 = vpop.xlane.xlu0 %3964
        %v3966 = vsel %vm1082, %v3945, -inf
        %3967 = vmax.xlane.f32.xlu0 %v3966
        %v3968 = vpop.xlane.xlu0 %3967
        %v3969 = vsel %vm1082, %v3948, -inf
        %3970 = vmax.xlane.f32.xlu0 %v3969
        %v3971 = vpop.xlane.xlu0 %3970
        %v3972 = vsel %vm1082, %v3950, -inf
        %3973 = vmax.xlane.f32.xlu0 %v3972
        %v3974 = vpop.xlane.xlu0 %3973
        %v3975 = vsel %vm1082, %v3953, -inf
        %3976 = vmax.xlane.f32.xlu0 %v3975
        %v3977 = vpop.xlane.xlu0 %3976
        %v3978 = vsel %vm1082, %v3955, -inf
        %3979 = vmax.xlane.f32.xlu0 %v3978
        %v3980 = vpop.xlane.xlu0 %3979
        %v3981 = vsub.f32 %v3938, %v3959
        %v3982 = vsub.f32 %v3940, %v3962
        %v3983 = vsub.f32 %v3943, %v3965
        %v3984 = vsub.f32 %v3945, %v3968
        %v3985 = vsub.f32 %v3948, %v3971
        %v3986 = vsub.f32 %v3950, %v3974
        %v3987 = vsub.f32 %v3953, %v3977
        %v3988 = vsub.f32 %v3955, %v3980
        %v3989 = vmul.f32 %v3981, 1.442695
        %v3990 = vpow.pop %v3989
        %v3991 = vmul.f32 %v3982, 1.442695
        %v3992 = vpow.pop %v3991
        %v3993 = vmul.f32 %v3983, 1.442695
        %v3994 = vpow.pop %v3993
        %v3995 = vmul.f32 %v3984, 1.442695
        %v3996 = vpow.pop %v3995
        %v3997 = vmul.f32 %v3985, 1.442695
        %v3998 = vpow.pop %v3997
        %v3999 = vmul.f32 %v3986, 1.442695
        %v4000 = vpow.pop %v3999
        %v4001 = vmul.f32 %v3987, 1.442695
        %v4002 = vpow.pop %v4001
        %v4003 = vmul.f32 %v3988, 1.442695
        %v4004 = vpow.pop %v4003
        %v4005 = vsel %vm1082, %v3990, 0.0
        %4006 = vadd.xlane.f32.xlu0 %v4005
        %v4007 = vpop.xlane.xlu0 %4006
        %v4008 = vsel %vm1082, %v3992, 0.0
        %4009 = vadd.xlane.f32.xlu0 %v4008
        %v4010 = vpop.xlane.xlu0 %4009
        %v4011 = vsel %vm1082, %v3994, 0.0
        %4012 = vadd.xlane.f32.xlu0 %v4011
        %v4013 = vpop.xlane.xlu0 %4012
        %v4014 = vsel %vm1082, %v3996, 0.0
        %4015 = vadd.xlane.f32.xlu0 %v4014
        %v4016 = vpop.xlane.xlu0 %4015
        %v4017 = vsel %vm1082, %v3998, 0.0
        %4018 = vadd.xlane.f32.xlu0 %v4017
        %v4019 = vpop.xlane.xlu0 %4018
        %v4020 = vsel %vm1082, %v4000, 0.0
        %4021 = vadd.xlane.f32.xlu0 %v4020
        %v4022 = vpop.xlane.xlu0 %4021
        %v4023 = vsel %vm1082, %v4002, 0.0
        %4024 = vadd.xlane.f32.xlu0 %v4023
        %v4025 = vpop.xlane.xlu0 %4024
        %v4026 = vsel %vm1082, %v4004, 0.0
        %4027 = vadd.xlane.f32.xlu0 %v4026
        %v4028 = vpop.xlane.xlu0 %4027
        %v4029 = vrcp.pop %v4007
        %v4030 = vrcp.pop %v4010
        %v4031 = vrcp.pop %v4013
        %v4032 = vrcp.pop %v4016
        %v4033 = vrcp.pop %v4019
        %v4034 = vrcp.pop %v4022
        %v4035 = vrcp.pop %v4025
        %v4036 = vrcp.pop %v4028
        %v4037 = vmul.f32 %v3990, %v4029
        %v4038 = vmul.f32 %v3992, %v4030
        %v4039 = vmul.f32 %v3994, %v4031
        %v4040 = vmul.f32 %v3996, %v4032
        %v4041 = vmul.f32 %v3998, %v4033
        %v4042 = vmul.f32 %v4000, %v4034
        %v4043 = vmul.f32 %v4002, %v4035
        %v4044 = vmul.f32 %v4004, %v4036
        %v4045 = vpack.c.bf16 %v4038, %v4037
        %v4046 = vpack.c.bf16 %v4040, %v4039
        %v4047 = vpack.c.bf16 %v4042, %v4041
        %v4048 = vpack.c.bf16 %v4044, %v4043
        %4049 = vrot.lane.b32.xlu0 %v3561, 64
        %v4050 = vpop.permute.xlu0 %4049
        %4051 = vrot.lane.b32.xlu0 %v3562, 64
        %v4052 = vpop.permute.xlu0 %4051
        %4053 = vrot.lane.b32.xlu0 %v3563, 64
        %v4054 = vpop.permute.xlu0 %4053
        %4055 = vrot.lane.b32.xlu0 %v3564, 64
        %v4056 = vpop.permute.xlu0 %4055
        %v4062 = vsel %vm1082, %v4045, 0
        %v4065 = vsel %vm1082, %v4046, 0
        %v4068 = vsel %vm1082, %v4047, 0
        %v4071 = vsel %vm1082, %v4048, 0
        %4073 = vmatpush.bf16.msra.mxu0 0
        %4074 = vmatpush.bf16.msra.mxu0 0
        %4075 = vmatpush.bf16.msra.mxu0 0
        %4076 = vmatpush.bf16.msra.mxu0 0
        %4077 = vmatpush.bf16.msra.mxu0 %v4056
        %4078 = vmatpush.bf16.msra.mxu0 %v4054
        %4079 = vmatpush.bf16.msra.mxu0 %v4052
        %4080 = vmatpush.bf16.msra.mxu0 %v4050
        %4081 = vmatmul.bf16.gmra.mxu0 %v4062
        %v4082 = vpop.f32.mrf.mxu0
        %v4083 = vadd.f32 0.0, %v4082
        %v4084 = vpop.f32.mrf.mxu0
        %v4085 = vadd.f32 0.0, %v4084
        %4086 = vmatmul.bf16.gmra.mxu0 %v4065
        %v4087 = vpop.f32.mrf.mxu0
        %v4088 = vadd.f32 0.0, %v4087
        %v4089 = vpop.f32.mrf.mxu0
        %v4090 = vadd.f32 0.0, %v4089
        %4091 = vmatmul.bf16.gmra.mxu0 %v4068
        %v4092 = vpop.f32.mrf.mxu0
        %v4093 = vadd.f32 0.0, %v4092
        %v4094 = vpop.f32.mrf.mxu0
        %v4095 = vadd.f32 0.0, %v4094
        %4096 = vmatmul.bf16.gmra.mxu0 %v4071
        %v4097 = vpop.f32.mrf.mxu0
        %v4098 = vadd.f32 0.0, %v4097
        %v4099 = vpop.f32.mrf.mxu0
        %v4100 = vadd.f32 0.0, %v4099
        %4101 = vdwg.mxu0
        %v4102 = vpack.c.bf16 %v4083, %v4083
        %v4103 = vpack.c.bf16 %v4085, %v4085
        %v4104 = vpack.c.bf16 %v4088, %v4088
        %v4105 = vpack.c.bf16 %v4090, %v4090
        %v4106 = vpack.c.bf16 %v4093, %v4093
        %v4107 = vpack.c.bf16 %v4095, %v4095
        %v4108 = vpack.c.bf16 %v4098, %v4098
        %v4109 = vpack.c.bf16 %v4100, %v4100
        %4118 = vrot.lane.b32.xlu0 %v4102, 64
        %v4119 = vpop.permute.xlu0 %4118
        %4120 = vrot.lane.b32.xlu0 %v4103, 64
        %v4121 = vpop.permute.xlu0 %4120
        %4122 = vrot.lane.b32.xlu0 %v4104, 64
        %v4123 = vpop.permute.xlu0 %4122
        %4124 = vrot.lane.b32.xlu0 %v4105, 64
        %v4125 = vpop.permute.xlu0 %4124
        %4126 = vrot.lane.b32.xlu0 %v4106, 64
        %v4127 = vpop.permute.xlu0 %4126
        %4128 = vrot.lane.b32.xlu0 %v4107, 64
        %v4129 = vpop.permute.xlu0 %4128
        %4130 = vrot.lane.b32.xlu0 %v4108, 64
        %v4131 = vpop.permute.xlu0 %4130
        %4132 = vrot.lane.b32.xlu0 %v4109, 64
        %v4133 = vpop.permute.xlu0 %4132
        %4142 = vst.msk [vmem:[#allocation2] sm:$0xf] %vm1774, %v4119
        %4143 = vst.msk [vmem:[#allocation2 + $0x4] sm:$0xf] %vm1774, %v4121
        %4144 = vst.msk [vmem:[#allocation2 + $0x8] sm:$0xf] %vm1774, %v4123
        %4145 = vst.msk [vmem:[#allocation2 + $0xc] sm:$0xf] %vm1774, %v4125
        %4146 = vst.msk [vmem:[#allocation2 + $0x10] sm:$0xf] %vm1774, %v4127
        %4147 = vst.msk [vmem:[#allocation2 + $0x14] sm:$0xf] %vm1774, %v4129
        %4148 = vst.msk [vmem:[#allocation2 + $0x18] sm:$0xf] %vm1774, %v4131
        %4149 = vst.msk [vmem:[#allocation2 + $0x1c] sm:$0xf] %vm1774, %v4133
        %4150 = vrot.lane.b32.xlu0 %v3376, 32
        %v4151 = vpop.permute.xlu0 %4150
        %4152 = vrot.lane.b32.xlu0 %v3377, 32
        %v4153 = vpop.permute.xlu0 %4152
        %4154 = vrot.lane.b32.xlu0 %v3378, 32
        %v4155 = vpop.permute.xlu0 %4154
        %4156 = vrot.lane.b32.xlu0 %v3379, 32
        %v4157 = vpop.permute.xlu0 %4156
        %4158 = vrot.lane.b32.xlu0 %v3396, 32
        %v4159 = vpop.permute.xlu0 %4158
        %4160 = vrot.lane.b32.xlu0 %v3397, 32
        %v4161 = vpop.permute.xlu0 %4160
        %4162 = vrot.lane.b32.xlu0 %v3398, 32
        %v4163 = vpop.permute.xlu0 %4162
        %4164 = vrot.lane.b32.xlu0 %v3399, 32
        %v4165 = vpop.permute.xlu0 %4164
        %v4167 = vsel %vm1028, %v4151, 0
        %v4170 = vsel %vm1028, %v4153, 0
        %v4173 = vsel %vm1028, %v4155, 0
        %v4176 = vsel %vm1028, %v4157, 0
        %v4179 = vsel %vm1028, %v4159, 0
        %v4182 = vsel %vm1028, %v4161, 0
        %v4185 = vsel %vm1028, %v4163, 0
        %v4188 = vsel %vm1028, %v4165, 0
        %4190 = vmatpush.bf16.xpose.msra.mxu0 0
        %4191 = vmatpush.bf16.xpose.msra.mxu0 0
        %4192 = vmatpush.bf16.xpose.msra.mxu0 0
        %4193 = vmatpush.bf16.xpose.msra.mxu0 0
        %4194 = vmatpush.bf16.xpose.msra.mxu0 %v4188
        %4195 = vmatpush.bf16.xpose.msra.mxu0 %v4185
        %4196 = vmatpush.bf16.xpose.msra.mxu0 %v4182
        %4197 = vmatpush.bf16.xpose.msra.mxu0 %v4179
        %4198 = vmatmul.bf16.gmra.mxu0 %v4167
        %v4199 = vpop.f32.mrf.mxu0
        %v4200 = vadd.f32 %v683, %v4199
        %v4201 = vpop.f32.mrf.mxu0
        %v4202 = vadd.f32 %v683, %v4201
        %4203 = vmatmul.bf16.gmra.mxu0 %v4170
        %v4204 = vpop.f32.mrf.mxu0
        %v4205 = vadd.f32 %v683, %v4204
        %v4206 = vpop.f32.mrf.mxu0
        %v4207 = vadd.f32 %v683, %v4206
        %4208 = vmatmul.bf16.gmra.mxu0 %v4173
        %v4209 = vpop.f32.mrf.mxu0
        %v4210 = vadd.f32 %v683, %v4209
        %v4211 = vpop.f32.mrf.mxu0
        %v4212 = vadd.f32 %v683, %v4211
        %4213 = vmatmul.bf16.gmra.mxu0 %v4176
        %v4214 = vpop.f32.mrf.mxu0
        %v4215 = vadd.f32 %v683, %v4214
        %v4216 = vpop.f32.mrf.mxu0
        %v4217 = vadd.f32 %v683, %v4216
        %4218 = vdwg.mxu0
        %v4219 = vsel %vm1082, %v4200, -inf
        %4220 = vmax.xlane.f32.xlu0 %v4219
        %v4221 = vpop.xlane.xlu0 %4220
        %v4222 = vsel %vm1082, %v4202, -inf
        %4223 = vmax.xlane.f32.xlu0 %v4222
        %v4224 = vpop.xlane.xlu0 %4223
        %v4225 = vsel %vm1082, %v4205, -inf
        %4226 = vmax.xlane.f32.xlu0 %v4225
        %v4227 = vpop.xlane.xlu0 %4226
        %v4228 = vsel %vm1082, %v4207, -inf
        %4229 = vmax.xlane.f32.xlu0 %v4228
        %v4230 = vpop.xlane.xlu0 %4229
        %v4231 = vsel %vm1082, %v4210, -inf
        %4232 = vmax.xlane.f32.xlu0 %v4231
        %v4233 = vpop.xlane.xlu0 %4232
        %v4234 = vsel %vm1082, %v4212, -inf
        %4235 = vmax.xlane.f32.xlu0 %v4234
        %v4236 = vpop.xlane.xlu0 %4235
        %v4237 = vsel %vm1082, %v4215, -inf
        %4238 = vmax.xlane.f32.xlu0 %v4237
        %v4239 = vpop.xlane.xlu0 %4238
        %v4240 = vsel %vm1082, %v4217, -inf
        %4241 = vmax.xlane.f32.xlu0 %v4240
        %v4242 = vpop.xlane.xlu0 %4241
        %v4243 = vsub.f32 %v4200, %v4221
        %v4244 = vsub.f32 %v4202, %v4224
        %v4245 = vsub.f32 %v4205, %v4227
        %v4246 = vsub.f32 %v4207, %v4230
        %v4247 = vsub.f32 %v4210, %v4233
        %v4248 = vsub.f32 %v4212, %v4236
        %v4249 = vsub.f32 %v4215, %v4239
        %v4250 = vsub.f32 %v4217, %v4242
        %v4251 = vmul.f32 %v4243, 1.442695
        %v4252 = vpow.pop %v4251
        %v4253 = vmul.f32 %v4244, 1.442695
        %v4254 = vpow.pop %v4253
        %v4255 = vmul.f32 %v4245, 1.442695
        %v4256 = vpow.pop %v4255
        %v4257 = vmul.f32 %v4246, 1.442695
        %v4258 = vpow.pop %v4257
        %v4259 = vmul.f32 %v4247, 1.442695
        %v4260 = vpow.pop %v4259
        %v4261 = vmul.f32 %v4248, 1.442695
        %v4262 = vpow.pop %v4261
        %v4263 = vmul.f32 %v4249, 1.442695
        %v4264 = vpow.pop %v4263
        %v4265 = vmul.f32 %v4250, 1.442695
        %v4266 = vpow.pop %v4265
        %v4267 = vsel %vm1082, %v4252, 0.0
        %4268 = vadd.xlane.f32.xlu0 %v4267
        %v4269 = vpop.xlane.xlu0 %4268
        %v4270 = vsel %vm1082, %v4254, 0.0
        %4271 = vadd.xlane.f32.xlu0 %v4270
        %v4272 = vpop.xlane.xlu0 %4271
        %v4273 = vsel %vm1082, %v4256, 0.0
        %4274 = vadd.xlane.f32.xlu0 %v4273
        %v4275 = vpop.xlane.xlu0 %4274
        %v4276 = vsel %vm1082, %v4258, 0.0
        %4277 = vadd.xlane.f32.xlu0 %v4276
        %v4278 = vpop.xlane.xlu0 %4277
        %v4279 = vsel %vm1082, %v4260, 0.0
        %4280 = vadd.xlane.f32.xlu0 %v4279
        %v4281 = vpop.xlane.xlu0 %4280
        %v4282 = vsel %vm1082, %v4262, 0.0
        %4283 = vadd.xlane.f32.xlu0 %v4282
        %v4284 = vpop.xlane.xlu0 %4283
        %v4285 = vsel %vm1082, %v4264, 0.0
        %4286 = vadd.xlane.f32.xlu0 %v4285
        %v4287 = vpop.xlane.xlu0 %4286
        %v4288 = vsel %vm1082, %v4266, 0.0
        %4289 = vadd.xlane.f32.xlu0 %v4288
        %v4290 = vpop.xlane.xlu0 %4289
        %v4291 = vrcp.pop %v4269
        %v4292 = vrcp.pop %v4272
        %v4293 = vrcp.pop %v4275
        %v4294 = vrcp.pop %v4278
        %v4295 = vrcp.pop %v4281
        %v4296 = vrcp.pop %v4284
        %v4297 = vrcp.pop %v4287
        %v4298 = vrcp.pop %v4290
        %v4299 = vmul.f32 %v4252, %v4291
        %v4300 = vmul.f32 %v4254, %v4292
        %v4301 = vmul.f32 %v4256, %v4293
        %v4302 = vmul.f32 %v4258, %v4294
        %v4303 = vmul.f32 %v4260, %v4295
        %v4304 = vmul.f32 %v4262, %v4296
        %v4305 = vmul.f32 %v4264, %v4297
        %v4306 = vmul.f32 %v4266, %v4298
        %v4307 = vpack.c.bf16 %v4300, %v4299
        %v4308 = vpack.c.bf16 %v4302, %v4301
        %v4309 = vpack.c.bf16 %v4304, %v4303
        %v4310 = vpack.c.bf16 %v4306, %v4305
        %4311 = vrot.lane.b32.xlu0 %v3561, 32
        %v4312 = vpop.permute.xlu0 %4311
        %4313 = vrot.lane.b32.xlu0 %v3562, 32
        %v4314 = vpop.permute.xlu0 %4313
        %4315 = vrot.lane.b32.xlu0 %v3563, 32
        %v4316 = vpop.permute.xlu0 %4315
        %4317 = vrot.lane.b32.xlu0 %v3564, 32
        %v4318 = vpop.permute.xlu0 %4317
        %v4324 = vsel %vm1082, %v4307, 0
        %v4327 = vsel %vm1082, %v4308, 0
        %v4330 = vsel %vm1082, %v4309, 0
        %v4333 = vsel %vm1082, %v4310, 0
        %4335 = vmatpush.bf16.msra.mxu0 0
        %4336 = vmatpush.bf16.msra.mxu0 0
        %4337 = vmatpush.bf16.msra.mxu0 0
        %4338 = vmatpush.bf16.msra.mxu0 0
        %4339 = vmatpush.bf16.msra.mxu0 %v4318
        %4340 = vmatpush.bf16.msra.mxu0 %v4316
        %4341 = vmatpush.bf16.msra.mxu0 %v4314
        %4342 = vmatpush.bf16.msra.mxu0 %v4312
        %4343 = vmatmul.bf16.gmra.mxu0 %v4324
        %v4344 = vpop.f32.mrf.mxu0
        %v4345 = vadd.f32 0.0, %v4344
        %v4346 = vpop.f32.mrf.mxu0
        %v4347 = vadd.f32 0.0, %v4346
        %4348 = vmatmul.bf16.gmra.mxu0 %v4327
        %v4349 = vpop.f32.mrf.mxu0
        %v4350 = vadd.f32 0.0, %v4349
        %v4351 = vpop.f32.mrf.mxu0
        %v4352 = vadd.f32 0.0, %v4351
        %4353 = vmatmul.bf16.gmra.mxu0 %v4330
        %v4354 = vpop.f32.mrf.mxu0
        %v4355 = vadd.f32 0.0, %v4354
        %v4356 = vpop.f32.mrf.mxu0
        %v4357 = vadd.f32 0.0, %v4356
        %4358 = vmatmul.bf16.gmra.mxu0 %v4333
        %v4359 = vpop.f32.mrf.mxu0
        %v4360 = vadd.f32 0.0, %v4359
        %v4361 = vpop.f32.mrf.mxu0
        %v4362 = vadd.f32 0.0, %v4361
        %4363 = vdwg.mxu0
        %v4364 = vpack.c.bf16 %v4345, %v4345
        %v4365 = vpack.c.bf16 %v4347, %v4347
        %v4366 = vpack.c.bf16 %v4350, %v4350
        %v4367 = vpack.c.bf16 %v4352, %v4352
        %v4368 = vpack.c.bf16 %v4355, %v4355
        %v4369 = vpack.c.bf16 %v4357, %v4357
        %v4370 = vpack.c.bf16 %v4360, %v4360
        %v4371 = vpack.c.bf16 %v4362, %v4362
        %4380 = vrot.lane.b32.xlu0 %v4364, 96
        %v4381 = vpop.permute.xlu0 %4380
        %4382 = vrot.lane.b32.xlu0 %v4365, 96
        %v4383 = vpop.permute.xlu0 %4382
        %4384 = vrot.lane.b32.xlu0 %v4366, 96
        %v4385 = vpop.permute.xlu0 %4384
        %4386 = vrot.lane.b32.xlu0 %v4367, 96
        %v4387 = vpop.permute.xlu0 %4386
        %4388 = vrot.lane.b32.xlu0 %v4368, 96
        %v4389 = vpop.permute.xlu0 %4388
        %4390 = vrot.lane.b32.xlu0 %v4369, 96
        %v4391 = vpop.permute.xlu0 %4390
        %4392 = vrot.lane.b32.xlu0 %v4370, 96
        %v4393 = vpop.permute.xlu0 %4392
        %4394 = vrot.lane.b32.xlu0 %v4371, 96
        %v4395 = vpop.permute.xlu0 %4394
        %4404 = vst.msk [vmem:[#allocation2] sm:$0xf] %vm2037, %v4381
        %4405 = vst.msk [vmem:[#allocation2 + $0x4] sm:$0xf] %vm2037, %v4383
        %4406 = vst.msk [vmem:[#allocation2 + $0x8] sm:$0xf] %vm2037, %v4385
        %4407 = vst.msk [vmem:[#allocation2 + $0xc] sm:$0xf] %vm2037, %v4387
        %4408 = vst.msk [vmem:[#allocation2 + $0x10] sm:$0xf] %vm2037, %v4389
        %4409 = vst.msk [vmem:[#allocation2 + $0x14] sm:$0xf] %vm2037, %v4391
        %4410 = vst.msk [vmem:[#allocation2 + $0x18] sm:$0xf] %vm2037, %v4393
        %4411 = vst.msk [vmem:[#allocation2 + $0x1c] sm:$0xf] %vm2037, %v4395
        %v4412 = vld [vmem:[#allocation2] sm:$0xf]
        %v4413 = vld [vmem:[#allocation2 + $0x4] sm:$0xf]
        %v4414 = vld [vmem:[#allocation2 + $0x8] sm:$0xf]
        %v4415 = vld [vmem:[#allocation2 + $0xc] sm:$0xf]
        %v4416 = vld [vmem:[#allocation2 + $0x10] sm:$0xf]
        %v4417 = vld [vmem:[#allocation2 + $0x14] sm:$0xf]
        %v4418 = vld [vmem:[#allocation2 + $0x18] sm:$0xf]
        %v4419 = vld [vmem:[#allocation2 + $0x1c] sm:$0xf]
        %s4420 = scalar_lea.vmem %s4, 64
        %v4421 = vld [vmem:[%s4420] sm:$0xf]
        %v4422 = vld [vmem:[%s4420 + $0x4] sm:$0xf]
        %v4423 = vld [vmem:[%s4420 + $0x8] sm:$0xf]
        %v4424 = vld [vmem:[%s4420 + $0xc] sm:$0xf]
        %v4425 = vld [vmem:[%s4420 + $0x10] sm:$0xf]
        %v4426 = vld [vmem:[%s4420 + $0x14] sm:$0xf]
        %v4427 = vld [vmem:[%s4420 + $0x18] sm:$0xf]
        %v4428 = vld [vmem:[%s4420 + $0x1c] sm:$0xf]
        %v4429 = vld [vmem:[%s4420 + $0x20] sm:$0xf]
        %v4430 = vld [vmem:[%s4420 + $0x24] sm:$0xf]
        %v4431 = vld [vmem:[%s4420 + $0x28] sm:$0xf]
        %v4432 = vld [vmem:[%s4420 + $0x2c] sm:$0xf]
        %v4433 = vld [vmem:[%s4420 + $0x30] sm:$0xf]
        %v4434 = vld [vmem:[%s4420 + $0x34] sm:$0xf]
        %v4435 = vld [vmem:[%s4420 + $0x38] sm:$0xf]
        %v4436 = vld [vmem:[%s4420 + $0x3c] sm:$0xf]
        %v4437 = vperm.slane %v3055, 3
        %v4446 = vunpack.c.l.b16 %v4412
        %v4447 = vunpack.c.l.b16 %v4413
        %v4448 = vunpack.c.l.b16 %v4414
        %v4449 = vunpack.c.l.b16 %v4415
        %v4450 = vunpack.c.l.b16 %v4416
        %v4451 = vunpack.c.l.b16 %v4417
        %v4452 = vunpack.c.l.b16 %v4418
        %v4453 = vunpack.c.l.b16 %v4419
        %v4454 = vpack.c.b16 %v4447, %v4446
        %v4455 = vpack.c.b16 %v4449, %v4448
        %v4456 = vpack.c.b16 %v4451, %v4450
        %v4457 = vpack.c.b16 %v4453, %v4452
        %v4478 = vunpack.c.l.b16 %v4421
        %v4479 = vunpack.c.l.b16 %v4422
        %v4480 = vunpack.c.l.b16 %v4423
        %v4481 = vunpack.c.l.b16 %v4424
        %v4482 = vunpack.c.l.b16 %v4425
        %v4483 = vunpack.c.l.b16 %v4426
        %v4484 = vunpack.c.l.b16 %v4427
        %v4485 = vunpack.c.l.b16 %v4428
        %v4486 = vunpack.c.l.b16 %v4429
        %v4487 = vunpack.c.l.b16 %v4430
        %v4488 = vunpack.c.l.b16 %v4431
        %v4489 = vunpack.c.l.b16 %v4432
        %v4490 = vunpack.c.l.b16 %v4433
        %v4491 = vunpack.c.l.b16 %v4434
        %v4492 = vunpack.c.l.b16 %v4435
        %v4493 = vunpack.c.l.b16 %v4436
        %v4494 = vpack.c.b16 %v4479, %v4478
        %v4495 = vpack.c.b16 %v4481, %v4480
        %v4496 = vpack.c.b16 %v4483, %v4482
        %v4497 = vpack.c.b16 %v4485, %v4484
        %v4498 = vpack.c.b16 %v4487, %v4486
        %v4499 = vpack.c.b16 %v4489, %v4488
        %v4500 = vpack.c.b16 %v4491, %v4490
        %v4501 = vpack.c.b16 %v4493, %v4492
        %4510 = vmatpush.bf16.msra.mxu0 %v4501
        %4511 = vmatpush.bf16.msra.mxu0 %v4500
        %4512 = vmatpush.bf16.msra.mxu0 %v4499
        %4513 = vmatpush.bf16.msra.mxu0 %v4498
        %4514 = vmatpush.bf16.msra.mxu0 %v4497
        %4515 = vmatpush.bf16.msra.mxu0 %v4496
        %4516 = vmatpush.bf16.msra.mxu0 %v4495
        %4517 = vmatpush.bf16.msra.mxu0 %v4494
        %4518 = vmatmul.bf16.gmra.mxu0 %v4454
        %v4519 = vpop.f32.mrf.mxu0
        %v4520 = vadd.f32 %v4437, %v4519
        %v4521 = vpop.f32.mrf.mxu0
        %v4522 = vadd.f32 %v4437, %v4521
        %4523 = vmatmul.bf16.gmra.mxu0 %v4455
        %v4524 = vpop.f32.mrf.mxu0
        %v4525 = vadd.f32 %v4437, %v4524
        %v4526 = vpop.f32.mrf.mxu0
        %v4527 = vadd.f32 %v4437, %v4526
        %4528 = vmatmul.bf16.gmra.mxu0 %v4456
        %v4529 = vpop.f32.mrf.mxu0
        %v4530 = vadd.f32 %v4437, %v4529
        %v4531 = vpop.f32.mrf.mxu0
        %v4532 = vadd.f32 %v4437, %v4531
        %4533 = vmatmul.bf16.gmra.mxu0 %v4457
        %v4534 = vpop.f32.mrf.mxu0
        %v4535 = vadd.f32 %v4437, %v4534
        %v4536 = vpop.f32.mrf.mxu0
        %v4537 = vadd.f32 %v4437, %v4536
        %4538 = vdwg.mxu0
        %v4539 = vadd.f32 %v3046, %v4520
        %v4540 = vadd.f32 %v3047, %v4522
        %v4541 = vadd.f32 %v3048, %v4525
        %v4542 = vadd.f32 %v3049, %v4527
        %v4543 = vadd.f32 %v3050, %v4530
        %v4544 = vadd.f32 %v3051, %v4532
        %v4545 = vadd.f32 %v3052, %v4535
        %v4546 = vadd.f32 %v3053, %v4537
        %4547 = vadd.xlane.f32.xlu0 %v4539
        %v4548 = vpop.xlane.xlu0 %4547
        %4549 = vadd.xlane.f32.xlu0 %v4540
        %v4550 = vpop.xlane.xlu0 %4549
        %4551 = vadd.xlane.f32.xlu0 %v4541
        %v4552 = vpop.xlane.xlu0 %4551
        %4553 = vadd.xlane.f32.xlu0 %v4542
        %v4554 = vpop.xlane.xlu0 %4553
        %4555 = vadd.xlane.f32.xlu0 %v4543
        %v4556 = vpop.xlane.xlu0 %4555
        %4557 = vadd.xlane.f32.xlu0 %v4544
        %v4558 = vpop.xlane.xlu0 %4557
        %4559 = vadd.xlane.f32.xlu0 %v4545
        %v4560 = vpop.xlane.xlu0 %4559
        %4561 = vadd.xlane.f32.xlu0 %v4546
        %v4562 = vpop.xlane.xlu0 %4561
        %v4563 = vmul.f32 %v4548, %v2202
        %v4564 = vmul.f32 %v4550, %v2202
        %v4565 = vmul.f32 %v4552, %v2202
        %v4566 = vmul.f32 %v4554, %v2202
        %v4567 = vmul.f32 %v4556, %v2202
        %v4568 = vmul.f32 %v4558, %v2202
        %v4569 = vmul.f32 %v4560, %v2202
        %v4570 = vmul.f32 %v4562, %v2202
        %v4571 = vsub.f32 %v4539, %v4563
        %v4572 = vsub.f32 %v4540, %v4564
        %v4573 = vsub.f32 %v4541, %v4565
        %v4574 = vsub.f32 %v4542, %v4566
        %v4575 = vsub.f32 %v4543, %v4567
        %v4576 = vsub.f32 %v4544, %v4568
        %v4577 = vsub.f32 %v4545, %v4569
        %v4578 = vsub.f32 %v4546, %v4570
        %v4579 = vmul.f32 %v4571, %v4571
        %v4580 = vmul.f32 %v4572, %v4572
        %v4581 = vmul.f32 %v4573, %v4573
        %v4582 = vmul.f32 %v4574, %v4574
        %v4583 = vmul.f32 %v4575, %v4575
        %v4584 = vmul.f32 %v4576, %v4576
        %v4585 = vmul.f32 %v4577, %v4577
        %v4586 = vmul.f32 %v4578, %v4578
        %4587 = vadd.xlane.f32.xlu0 %v4579
        %v4588 = vpop.xlane.xlu0 %4587
        %4589 = vadd.xlane.f32.xlu0 %v4580
        %v4590 = vpop.xlane.xlu0 %4589
        %4591 = vadd.xlane.f32.xlu0 %v4581
        %v4592 = vpop.xlane.xlu0 %4591
        %4593 = vadd.xlane.f32.xlu0 %v4582
        %v4594 = vpop.xlane.xlu0 %4593
        %4595 = vadd.xlane.f32.xlu0 %v4583
        %v4596 = vpop.xlane.xlu0 %4595
        %4597 = vadd.xlane.f32.xlu0 %v4584
        %v4598 = vpop.xlane.xlu0 %4597
        %4599 = vadd.xlane.f32.xlu0 %v4585
        %v4600 = vpop.xlane.xlu0 %4599
        %4601 = vadd.xlane.f32.xlu0 %v4586
        %v4602 = vpop.xlane.xlu0 %4601
        %v4603 = vmul.f32 %v4588, %v2202
        %v4604 = vmul.f32 %v4590, %v2202
        %v4605 = vmul.f32 %v4592, %v2202
        %v4606 = vmul.f32 %v4594, %v2202
        %v4607 = vmul.f32 %v4596, %v2202
        %v4608 = vmul.f32 %v4598, %v2202
        %v4609 = vmul.f32 %v4600, %v2202
        %v4610 = vmul.f32 %v4602, %v2202
        %v4611 = vadd.f32 %v4603, 1e-05
        %v4612 = vadd.f32 %v4604, 1e-05
        %v4613 = vadd.f32 %v4605, 1e-05
        %v4614 = vadd.f32 %v4606, 1e-05
        %v4615 = vadd.f32 %v4607, 1e-05
        %v4616 = vadd.f32 %v4608, 1e-05
        %v4617 = vadd.f32 %v4609, 1e-05
        %v4618 = vadd.f32 %v4610, 1e-05
        %v4619 = vrsqrt.pop %v4611
        %v4620 = vmul.f32 %v4619, %v4611
        %v4621 = vmul.f32 %v4620, %v4619
        %v4622 = vmul.f32 0.5, %v4621
        %v4623 = vsub.f32 1.5, %v4622
        %v4624 = vmul.f32 %v4619, %v4623
        %vm4625 = vweird.f32 %v4611
        %vm4626 = vweird.f32 %v4619
        %vm4627 = vmor %vm4625, %vm4626
        %v4628 = vsel %vm4627, %v4619, %v4624
        %v4629 = vrsqrt.pop %v4612
        %v4630 = vmul.f32 %v4629, %v4612
        %v4631 = vmul.f32 %v4630, %v4629
        %v4632 = vmul.f32 0.5, %v4631
        %v4633 = vsub.f32 1.5, %v4632
        %v4634 = vmul.f32 %v4629, %v4633
        %vm4635 = vweird.f32 %v4612
        %vm4636 = vweird.f32 %v4629
        %vm4637 = vmor %vm4635, %vm4636
        %v4638 = vsel %vm4637, %v4629, %v4634
        %v4639 = vrsqrt.pop %v4613
        %v4640 = vmul.f32 %v4639, %v4613
        %v4641 = vmul.f32 %v4640, %v4639
        %v4642 = vmul.f32 0.5, %v4641
        %v4643 = vsub.f32 1.5, %v4642
        %v4644 = vmul.f32 %v4639, %v4643
        %vm4645 = vweird.f32 %v4613
        %vm4646 = vweird.f32 %v4639
        %vm4647 = vmor %vm4645, %vm4646
        %v4648 = vsel %vm4647, %v4639, %v4644
        %v4649 = vrsqrt.pop %v4614
        %v4650 = vmul.f32 %v4649, %v4614
        %v4651 = vmul.f32 %v4650, %v4649
        %v4652 = vmul.f32 0.5, %v4651
        %v4653 = vsub.f32 1.5, %v4652
        %v4654 = vmul.f32 %v4649, %v4653
        %vm4655 = vweird.f32 %v4614
        %vm4656 = vweird.f32 %v4649
        %vm4657 = vmor %vm4655, %vm4656
        %v4658 = vsel %vm4657, %v4649, %v4654
        %v4659 = vrsqrt.pop %v4615
        %v4660 = vmul.f32 %v4659, %v4615
        %v4661 = vmul.f32 %v4660, %v4659
        %v4662 = vmul.f32 0.5, %v4661
        %v4663 = vsub.f32 1.5, %v4662
        %v4664 = vmul.f32 %v4659, %v4663
        %vm4665 = vweird.f32 %v4615
        %vm4666 = vweird.f32 %v4659
        %vm4667 = vmor %vm4665, %vm4666
        %v4668 = vsel %vm4667, %v4659, %v4664
        %v4669 = vrsqrt.pop %v4616
        %v4670 = vmul.f32 %v4669, %v4616
        %v4671 = vmul.f32 %v4670, %v4669
        %v4672 = vmul.f32 0.5, %v4671
        %v4673 = vsub.f32 1.5, %v4672
        %v4674 = vmul.f32 %v4669, %v4673
        %vm4675 = vweird.f32 %v4616
        %vm4676 = vweird.f32 %v4669
        %vm4677 = vmor %vm4675, %vm4676
        %v4678 = vsel %vm4677, %v4669, %v4674
        %v4679 = vrsqrt.pop %v4617
        %v4680 = vmul.f32 %v4679, %v4617
        %v4681 = vmul.f32 %v4680, %v4679
        %v4682 = vmul.f32 0.5, %v4681
        %v4683 = vsub.f32 1.5, %v4682
        %v4684 = vmul.f32 %v4679, %v4683
        %vm4685 = vweird.f32 %v4617
        %vm4686 = vweird.f32 %v4679
        %vm4687 = vmor %vm4685, %vm4686
        %v4688 = vsel %vm4687, %v4679, %v4684
        %v4689 = vrsqrt.pop %v4618
        %v4690 = vmul.f32 %v4689, %v4618
        %v4691 = vmul.f32 %v4690, %v4689
        %v4692 = vmul.f32 0.5, %v4691
        %v4693 = vsub.f32 1.5, %v4692
        %v4694 = vmul.f32 %v4689, %v4693
        %vm4695 = vweird.f32 %v4618
        %vm4696 = vweird.f32 %v4689
        %vm4697 = vmor %vm4695, %vm4696
        %v4698 = vsel %vm4697, %v4689, %v4694
        %v4699 = vmul.f32 %v4571, %v4628
        %v4700 = vmul.f32 %v4572, %v4638
        %v4701 = vmul.f32 %v4573, %v4648
        %v4702 = vmul.f32 %v4574, %v4658
        %v4703 = vmul.f32 %v4575, %v4668
        %v4704 = vmul.f32 %v4576, %v4678
        %v4705 = vmul.f32 %v4577, %v4688
        %v4706 = vmul.f32 %v4578, %v4698
        %v4707 = vperm.slane %v3055, 4
        %v4708 = vmul.f32 %v4699, %v4707
        %v4709 = vmul.f32 %v4700, %v4707
        %v4710 = vmul.f32 %v4701, %v4707
        %v4711 = vmul.f32 %v4702, %v4707
        %v4712 = vmul.f32 %v4703, %v4707
        %v4713 = vmul.f32 %v4704, %v4707
        %v4714 = vmul.f32 %v4705, %v4707
        %v4715 = vmul.f32 %v4706, %v4707
        %v4716 = vperm.slane %v3055, 5
        %v4717 = vadd.f32 %v4708, %v4716
        %v4718 = vadd.f32 %v4709, %v4716
        %v4719 = vadd.f32 %v4710, %v4716
        %v4720 = vadd.f32 %v4711, %v4716
        %v4721 = vadd.f32 %v4712, %v4716
        %v4722 = vadd.f32 %v4713, %v4716
        %v4723 = vadd.f32 %v4714, %v4716
        %v4724 = vadd.f32 %v4715, %v4716
        %v4725 = vpack.c.bf16 %v4718, %v4717
        %v4726 = vpack.c.bf16 %v4720, %v4719
        %v4727 = vpack.c.bf16 %v4722, %v4721
        %v4728 = vpack.c.bf16 %v4724, %v4723
        %s4729 = scalar_lea.vmem [#allocation7], 128
        %v4730 = vld [vmem:[%s4729] sm:$0xff]
        %v4731 = vld [vmem:[%s4729 + $0x8] sm:$0xff]
        %v4732 = vld [vmem:[%s4729 + $0x10] sm:$0xff]
        %v4733 = vld [vmem:[%s4729 + $0x18] sm:$0xff]
        %v4734 = vld [vmem:[%s4729 + $0x20] sm:$0xff]
        %v4735 = vld [vmem:[%s4729 + $0x28] sm:$0xff]
        %v4736 = vld [vmem:[%s4729 + $0x30] sm:$0xff]
        %v4737 = vld [vmem:[%s4729 + $0x38] sm:$0xff]
        %v4738 = vld [vmem:[%s4729 + $0x40] sm:$0xff]
        %v4739 = vld [vmem:[%s4729 + $0x48] sm:$0xff]
        %v4740 = vld [vmem:[%s4729 + $0x50] sm:$0xff]
        %v4741 = vld [vmem:[%s4729 + $0x58] sm:$0xff]
        %v4742 = vld [vmem:[%s4729 + $0x60] sm:$0xff]
        %v4743 = vld [vmem:[%s4729 + $0x68] sm:$0xff]
        %v4744 = vld [vmem:[%s4729 + $0x70] sm:$0xff]
        %v4745 = vld [vmem:[%s4729 + $0x78] sm:$0xff]
        %s4746 = scalar_lea.vmem %s8, 2
        %v4747 = vld [vmem:[%s4746] sm:$0x3]
        %v4749 = vperm.slane %v4747, 0
        %v4750 = vperm.slane %v4747, 1
        %v4769 = vunpack.c.l.b16 %v4730
        %v4770 = vunpack.c.h.b16 %v4730
        %v4771 = vunpack.c.l.b16 %v4731
        %v4772 = vunpack.c.h.b16 %v4731
        %v4773 = vunpack.c.l.b16 %v4732
        %v4774 = vunpack.c.h.b16 %v4732
        %v4775 = vunpack.c.l.b16 %v4733
        %v4776 = vunpack.c.h.b16 %v4733
        %v4777 = vunpack.c.l.b16 %v4734
        %v4778 = vunpack.c.h.b16 %v4734
        %v4779 = vunpack.c.l.b16 %v4735
        %v4780 = vunpack.c.h.b16 %v4735
        %v4781 = vunpack.c.l.b16 %v4736
        %v4782 = vunpack.c.h.b16 %v4736
        %v4783 = vunpack.c.l.b16 %v4737
        %v4784 = vunpack.c.h.b16 %v4737
        %v4785 = vunpack.c.l.b16 %v4738
        %v4786 = vunpack.c.h.b16 %v4738
        %v4787 = vunpack.c.l.b16 %v4739
        %v4788 = vunpack.c.h.b16 %v4739
        %v4789 = vunpack.c.l.b16 %v4740
        %v4790 = vunpack.c.h.b16 %v4740
        %v4791 = vunpack.c.l.b16 %v4741
        %v4792 = vunpack.c.h.b16 %v4741
        %v4793 = vunpack.c.l.b16 %v4742
        %v4794 = vunpack.c.h.b16 %v4742
        %v4795 = vunpack.c.l.b16 %v4743
        %v4796 = vunpack.c.h.b16 %v4743
        %v4797 = vunpack.c.l.b16 %v4744
        %v4798 = vunpack.c.h.b16 %v4744
        %v4799 = vunpack.c.l.b16 %v4745
        %v4800 = vunpack.c.h.b16 %v4745
        %v4801 = vpack.c.b16 %v4771, %v4769
        %v4802 = vpack.c.b16 %v4772, %v4770
        %v4803 = vpack.c.b16 %v4775, %v4773
        %v4804 = vpack.c.b16 %v4776, %v4774
        %v4805 = vpack.c.b16 %v4779, %v4777
        %v4806 = vpack.c.b16 %v4780, %v4778
        %v4807 = vpack.c.b16 %v4783, %v4781
        %v4808 = vpack.c.b16 %v4784, %v4782
        %v4809 = vpack.c.b16 %v4787, %v4785
        %v4810 = vpack.c.b16 %v4788, %v4786
        %v4811 = vpack.c.b16 %v4791, %v4789
        %v4812 = vpack.c.b16 %v4792, %v4790
        %v4813 = vpack.c.b16 %v4795, %v4793
        %v4814 = vpack.c.b16 %v4796, %v4794
        %v4815 = vpack.c.b16 %v4799, %v4797
        %v4816 = vpack.c.b16 %v4800, %v4798
        %4833 = vmatpush.bf16.msra.mxu0 %v4815
        %4834 = vmatpush.bf16.msra.mxu0 %v4813
        %4835 = vmatpush.bf16.msra.mxu0 %v4811
        %4836 = vmatpush.bf16.msra.mxu0 %v4809
        %4837 = vmatpush.bf16.msra.mxu0 %v4807
        %4838 = vmatpush.bf16.msra.mxu0 %v4805
        %4839 = vmatpush.bf16.msra.mxu0 %v4803
        %4840 = vmatpush.bf16.msra.mxu0 %v4801
        %4841 = vmatmul.bf16.gmra.mxu0 %v4725
        %v4842 = vpop.f32.mrf.mxu0
        %v4843 = vadd.f32 %v4749, %v4842
        %v4844 = vpop.f32.mrf.mxu0
        %v4845 = vadd.f32 %v4749, %v4844
        %4846 = vmatmul.bf16.gmra.mxu0 %v4726
        %v4847 = vpop.f32.mrf.mxu0
        %v4848 = vadd.f32 %v4749, %v4847
        %v4849 = vpop.f32.mrf.mxu0
        %v4850 = vadd.f32 %v4749, %v4849
        %4851 = vmatmul.bf16.gmra.mxu0 %v4727
        %v4852 = vpop.f32.mrf.mxu0
        %v4853 = vadd.f32 %v4749, %v4852
        %v4854 = vpop.f32.mrf.mxu0
        %v4855 = vadd.f32 %v4749, %v4854
        %4856 = vmatmul.bf16.gmra.mxu0 %v4728
        %v4857 = vpop.f32.mrf.mxu0
        %v4858 = vadd.f32 %v4749, %v4857
        %v4859 = vpop.f32.mrf.mxu0
        %v4860 = vadd.f32 %v4749, %v4859
        %4861 = vdwg.mxu0
        %4862 = vmatpush.bf16.msra.mxu0 %v4816
        %4863 = vmatpush.bf16.msra.mxu0 %v4814
        %4864 = vmatpush.bf16.msra.mxu0 %v4812
        %4865 = vmatpush.bf16.msra.mxu0 %v4810
        %4866 = vmatpush.bf16.msra.mxu0 %v4808
        %4867 = vmatpush.bf16.msra.mxu0 %v4806
        %4868 = vmatpush.bf16.msra.mxu0 %v4804
        %4869 = vmatpush.bf16.msra.mxu0 %v4802
        %4870 = vmatmul.bf16.gmra.mxu0 %v4725
        %v4871 = vpop.f32.mrf.mxu0
        %v4872 = vadd.f32 %v4750, %v4871
        %v4873 = vpop.f32.mrf.mxu0
        %v4874 = vadd.f32 %v4750, %v4873
        %4875 = vmatmul.bf16.gmra.mxu0 %v4726
        %v4876 = vpop.f32.mrf.mxu0
        %v4877 = vadd.f32 %v4750, %v4876
        %v4878 = vpop.f32.mrf.mxu0
        %v4879 = vadd.f32 %v4750, %v4878
        %4880 = vmatmul.bf16.gmra.mxu0 %v4727
        %v4881 = vpop.f32.mrf.mxu0
        %v4882 = vadd.f32 %v4750, %v4881
        %v4883 = vpop.f32.mrf.mxu0
        %v4884 = vadd.f32 %v4750, %v4883
        %4885 = vmatmul.bf16.gmra.mxu0 %v4728
        %v4886 = vpop.f32.mrf.mxu0
        %v4887 = vadd.f32 %v4750, %v4886
        %v4888 = vpop.f32.mrf.mxu0
        %v4889 = vadd.f32 %v4750, %v4888
        %4890 = vdwg.mxu0
        %v4891 = vmul.f32 %v4843, 0.5
        %v4892 = vmul.f32 %v4872, 0.5
        %v4893 = vmul.f32 %v4845, 0.5
        %v4894 = vmul.f32 %v4874, 0.5
        %v4895 = vmul.f32 %v4848, 0.5
        %v4896 = vmul.f32 %v4877, 0.5
        %v4897 = vmul.f32 %v4850, 0.5
        %v4898 = vmul.f32 %v4879, 0.5
        %v4899 = vmul.f32 %v4853, 0.5
        %v4900 = vmul.f32 %v4882, 0.5
        %v4901 = vmul.f32 %v4855, 0.5
        %v4902 = vmul.f32 %v4884, 0.5
        %v4903 = vmul.f32 %v4858, 0.5
        %v4904 = vmul.f32 %v4887, 0.5
        %v4905 = vmul.f32 %v4860, 0.5
        %v4906 = vmul.f32 %v4889, 0.5
        %v4907 = vmul.f32 %v4843, 0.044715
        %v4908 = vmul.f32 %v4872, 0.044715
        %v4909 = vmul.f32 %v4845, 0.044715
        %v4910 = vmul.f32 %v4874, 0.044715
        %v4911 = vmul.f32 %v4848, 0.044715
        %v4912 = vmul.f32 %v4877, 0.044715
        %v4913 = vmul.f32 %v4850, 0.044715
        %v4914 = vmul.f32 %v4879, 0.044715
        %v4915 = vmul.f32 %v4853, 0.044715
        %v4916 = vmul.f32 %v4882, 0.044715
        %v4917 = vmul.f32 %v4855, 0.044715
        %v4918 = vmul.f32 %v4884, 0.044715
        %v4919 = vmul.f32 %v4858, 0.044715
        %v4920 = vmul.f32 %v4887, 0.044715
        %v4921 = vmul.f32 %v4860, 0.044715
        %v4922 = vmul.f32 %v4889, 0.044715
        %v4923 = vmul.f32 %v4907, %v4843
        %v4924 = vmul.f32 %v4908, %v4872
        %v4925 = vmul.f32 %v4909, %v4845
        %v4926 = vmul.f32 %v4910, %v4874
        %v4927 = vmul.f32 %v4911, %v4848
        %v4928 = vmul.f32 %v4912, %v4877
        %v4929 = vmul.f32 %v4913, %v4850
        %v4930 = vmul.f32 %v4914, %v4879
        %v4931 = vmul.f32 %v4915, %v4853
        %v4932 = vmul.f32 %v4916, %v4882
        %v4933 = vmul.f32 %v4917, %v4855
        %v4934 = vmul.f32 %v4918, %v4884
        %v4935 = vmul.f32 %v4919, %v4858
        %v4936 = vmul.f32 %v4920, %v4887
        %v4937 = vmul.f32 %v4921, %v4860
        %v4938 = vmul.f32 %v4922, %v4889
        %v4939 = vmul.f32 %v4923, %v4843
        %v4940 = vmul.f32 %v4924, %v4872
        %v4941 = vmul.f32 %v4925, %v4845
        %v4942 = vmul.f32 %v4926, %v4874
        %v4943 = vmul.f32 %v4927, %v4848
        %v4944 = vmul.f32 %v4928, %v4877
        %v4945 = vmul.f32 %v4929, %v4850
        %v4946 = vmul.f32 %v4930, %v4879
        %v4947 = vmul.f32 %v4931, %v4853
        %v4948 = vmul.f32 %v4932, %v4882
        %v4949 = vmul.f32 %v4933, %v4855
        %v4950 = vmul.f32 %v4934, %v4884
        %v4951 = vmul.f32 %v4935, %v4858
        %v4952 = vmul.f32 %v4936, %v4887
        %v4953 = vmul.f32 %v4937, %v4860
        %v4954 = vmul.f32 %v4938, %v4889
        %v4955 = vadd.f32 %v4843, %v4939
        %v4956 = vadd.f32 %v4872, %v4940
        %v4957 = vadd.f32 %v4845, %v4941
        %v4958 = vadd.f32 %v4874, %v4942
        %v4959 = vadd.f32 %v4848, %v4943
        %v4960 = vadd.f32 %v4877, %v4944
        %v4961 = vadd.f32 %v4850, %v4945
        %v4962 = vadd.f32 %v4879, %v4946
        %v4963 = vadd.f32 %v4853, %v4947
        %v4964 = vadd.f32 %v4882, %v4948
        %v4965 = vadd.f32 %v4855, %v4949
        %v4966 = vadd.f32 %v4884, %v4950
        %v4967 = vadd.f32 %v4858, %v4951
        %v4968 = vadd.f32 %v4887, %v4952
        %v4969 = vadd.f32 %v4860, %v4953
        %v4970 = vadd.f32 %v4889, %v4954
        %v4971 = vmul.f32 %v4955, 0.7978846
        %v4972 = vmul.f32 %v4956, 0.7978846
        %v4973 = vmul.f32 %v4957, 0.7978846
        %v4974 = vmul.f32 %v4958, 0.7978846
        %v4975 = vmul.f32 %v4959, 0.7978846
        %v4976 = vmul.f32 %v4960, 0.7978846
        %v4977 = vmul.f32 %v4961, 0.7978846
        %v4978 = vmul.f32 %v4962, 0.7978846
        %v4979 = vmul.f32 %v4963, 0.7978846
        %v4980 = vmul.f32 %v4964, 0.7978846
        %v4981 = vmul.f32 %v4965, 0.7978846
        %v4982 = vmul.f32 %v4966, 0.7978846
        %v4983 = vmul.f32 %v4967, 0.7978846
        %v4984 = vmul.f32 %v4968, 0.7978846
        %v4985 = vmul.f32 %v4969, 0.7978846
        %v4986 = vmul.f32 %v4970, 0.7978846
        %v4987 = vtanh.pop %v4971
        %v4988 = vtanh.pop %v4972
        %v4989 = vtanh.pop %v4973
        %v4990 = vtanh.pop %v4974
        %v4991 = vtanh.pop %v4975
        %v4992 = vtanh.pop %v4976
        %v4993 = vtanh.pop %v4977
        %v4994 = vtanh.pop %v4978
        %v4995 = vtanh.pop %v4979
        %v4996 = vtanh.pop %v4980
        %v4997 = vtanh.pop %v4981
        %v4998 = vtanh.pop %v4982
        %v4999 = vtanh.pop %v4983
        %v5000 = vtanh.pop %v4984
        %v5001 = vtanh.pop %v4985
        %v5002 = vtanh.pop %v4986
        %v5003 = vadd.f32 %v4987, 1.0
        %v5004 = vadd.f32 %v4988, 1.0
        %v5005 = vadd.f32 %v4989, 1.0
        %v5006 = vadd.f32 %v4990, 1.0
        %v5007 = vadd.f32 %v4991, 1.0
        %v5008 = vadd.f32 %v4992, 1.0
        %v5009 = vadd.f32 %v4993, 1.0
        %v5010 = vadd.f32 %v4994, 1.0
        %v5011 = vadd.f32 %v4995, 1.0
        %v5012 = vadd.f32 %v4996, 1.0
        %v5013 = vadd.f32 %v4997, 1.0
        %v5014 = vadd.f32 %v4998, 1.0
        %v5015 = vadd.f32 %v4999, 1.0
        %v5016 = vadd.f32 %v5000, 1.0
        %v5017 = vadd.f32 %v5001, 1.0
        %v5018 = vadd.f32 %v5002, 1.0
        %v5019 = vmul.f32 %v4891, %v5003
        %v5020 = vmul.f32 %v4892, %v5004
        %v5021 = vmul.f32 %v4893, %v5005
        %v5022 = vmul.f32 %v4894, %v5006
        %v5023 = vmul.f32 %v4895, %v5007
        %v5024 = vmul.f32 %v4896, %v5008
        %v5025 = vmul.f32 %v4897, %v5009
        %v5026 = vmul.f32 %v4898, %v5010
        %v5027 = vmul.f32 %v4899, %v5011
        %v5028 = vmul.f32 %v4900, %v5012
        %v5029 = vmul.f32 %v4901, %v5013
        %v5030 = vmul.f32 %v4902, %v5014
        %v5031 = vmul.f32 %v4903, %v5015
        %v5032 = vmul.f32 %v4904, %v5016
        %v5033 = vmul.f32 %v4905, %v5017
        %v5034 = vmul.f32 %v4906, %v5018
        %v5035 = vpack.c.bf16 %v5021, %v5019
        %v5036 = vpack.c.bf16 %v5022, %v5020
        %v5037 = vpack.c.bf16 %v5025, %v5023
        %v5038 = vpack.c.bf16 %v5026, %v5024
        %v5039 = vpack.c.bf16 %v5029, %v5027
        %v5040 = vpack.c.bf16 %v5030, %v5028
        %v5041 = vpack.c.bf16 %v5033, %v5031
        %v5042 = vpack.c.bf16 %v5034, %v5032
        %s5043 = scalar_lea.vmem [#allocation8], 128
        %v5044 = vld [vmem:[%s5043] sm:$0xf]
        %v5045 = vld [vmem:[%s5043 + $0x4] sm:$0xf]
        %v5046 = vld [vmem:[%s5043 + $0x8] sm:$0xf]
        %v5047 = vld [vmem:[%s5043 + $0xc] sm:$0xf]
        %v5048 = vld [vmem:[%s5043 + $0x10] sm:$0xf]
        %v5049 = vld [vmem:[%s5043 + $0x14] sm:$0xf]
        %v5050 = vld [vmem:[%s5043 + $0x18] sm:$0xf]
        %v5051 = vld [vmem:[%s5043 + $0x1c] sm:$0xf]
        %v5052 = vld [vmem:[%s5043 + $0x20] sm:$0xf]
        %v5053 = vld [vmem:[%s5043 + $0x24] sm:$0xf]
        %v5054 = vld [vmem:[%s5043 + $0x28] sm:$0xf]
        %v5055 = vld [vmem:[%s5043 + $0x2c] sm:$0xf]
        %v5056 = vld [vmem:[%s5043 + $0x30] sm:$0xf]
        %v5057 = vld [vmem:[%s5043 + $0x34] sm:$0xf]
        %v5058 = vld [vmem:[%s5043 + $0x38] sm:$0xf]
        %v5059 = vld [vmem:[%s5043 + $0x3c] sm:$0xf]
        %v5060 = vld [vmem:[%s5043 + $0x40] sm:$0xf]
        %v5061 = vld [vmem:[%s5043 + $0x44] sm:$0xf]
        %v5062 = vld [vmem:[%s5043 + $0x48] sm:$0xf]
        %v5063 = vld [vmem:[%s5043 + $0x4c] sm:$0xf]
        %v5064 = vld [vmem:[%s5043 + $0x50] sm:$0xf]
        %v5065 = vld [vmem:[%s5043 + $0x54] sm:$0xf]
        %v5066 = vld [vmem:[%s5043 + $0x58] sm:$0xf]
        %v5067 = vld [vmem:[%s5043 + $0x5c] sm:$0xf]
        %v5068 = vld [vmem:[%s5043 + $0x60] sm:$0xf]
        %v5069 = vld [vmem:[%s5043 + $0x64] sm:$0xf]
        %v5070 = vld [vmem:[%s5043 + $0x68] sm:$0xf]
        %v5071 = vld [vmem:[%s5043 + $0x6c] sm:$0xf]
        %v5072 = vld [vmem:[%s5043 + $0x70] sm:$0xf]
        %v5073 = vld [vmem:[%s5043 + $0x74] sm:$0xf]
        %v5074 = vld [vmem:[%s5043 + $0x78] sm:$0xf]
        %v5075 = vld [vmem:[%s5043 + $0x7c] sm:$0xf]
        %v5076 = vperm.slane %v3055, 6
        %v5109 = vunpack.c.l.b16 %v5044
        %v5110 = vunpack.c.l.b16 %v5045
        %v5111 = vunpack.c.l.b16 %v5046
        %v5112 = vunpack.c.l.b16 %v5047
        %v5113 = vunpack.c.l.b16 %v5048
        %v5114 = vunpack.c.l.b16 %v5049
        %v5115 = vunpack.c.l.b16 %v5050
        %v5116 = vunpack.c.l.b16 %v5051
        %v5117 = vunpack.c.l.b16 %v5052
        %v5118 = vunpack.c.l.b16 %v5053
        %v5119 = vunpack.c.l.b16 %v5054
        %v5120 = vunpack.c.l.b16 %v5055
        %v5121 = vunpack.c.l.b16 %v5056
        %v5122 = vunpack.c.l.b16 %v5057
        %v5123 = vunpack.c.l.b16 %v5058
        %v5124 = vunpack.c.l.b16 %v5059
        %v5125 = vunpack.c.l.b16 %v5060
        %v5126 = vunpack.c.l.b16 %v5061
        %v5127 = vunpack.c.l.b16 %v5062
        %v5128 = vunpack.c.l.b16 %v5063
        %v5129 = vunpack.c.l.b16 %v5064
        %v5130 = vunpack.c.l.b16 %v5065
        %v5131 = vunpack.c.l.b16 %v5066
        %v5132 = vunpack.c.l.b16 %v5067
        %v5133 = vunpack.c.l.b16 %v5068
        %v5134 = vunpack.c.l.b16 %v5069
        %v5135 = vunpack.c.l.b16 %v5070
        %v5136 = vunpack.c.l.b16 %v5071
        %v5137 = vunpack.c.l.b16 %v5072
        %v5138 = vunpack.c.l.b16 %v5073
        %v5139 = vunpack.c.l.b16 %v5074
        %v5140 = vunpack.c.l.b16 %v5075
        %v5141 = vpack.c.b16 %v5110, %v5109
        %v5142 = vpack.c.b16 %v5112, %v5111
        %v5143 = vpack.c.b16 %v5114, %v5113
        %v5144 = vpack.c.b16 %v5116, %v5115
        %v5145 = vpack.c.b16 %v5118, %v5117
        %v5146 = vpack.c.b16 %v5120, %v5119
        %v5147 = vpack.c.b16 %v5122, %v5121
        %v5148 = vpack.c.b16 %v5124, %v5123
        %v5149 = vpack.c.b16 %v5126, %v5125
        %v5150 = vpack.c.b16 %v5128, %v5127
        %v5151 = vpack.c.b16 %v5130, %v5129
        %v5152 = vpack.c.b16 %v5132, %v5131
        %v5153 = vpack.c.b16 %v5134, %v5133
        %v5154 = vpack.c.b16 %v5136, %v5135
        %v5155 = vpack.c.b16 %v5138, %v5137
        %v5156 = vpack.c.b16 %v5140, %v5139
        %5173 = vmatpush.bf16.msra.mxu0 %v5148
        %5174 = vmatpush.bf16.msra.mxu0 %v5147
        %5175 = vmatpush.bf16.msra.mxu0 %v5146
        %5176 = vmatpush.bf16.msra.mxu0 %v5145
        %5177 = vmatpush.bf16.msra.mxu0 %v5144
        %5178 = vmatpush.bf16.msra.mxu0 %v5143
        %5179 = vmatpush.bf16.msra.mxu0 %v5142
        %5180 = vmatpush.bf16.msra.mxu0 %v5141
        %5181 = vmatmul.bf16.gmra.mxu0 %v5035
        %v5182 = vpop.f32.mrf.mxu0
        %v5183 = vadd.f32 %v5076, %v5182
        %v5184 = vpop.f32.mrf.mxu0
        %v5185 = vadd.f32 %v5076, %v5184
        %5186 = vmatmul.bf16.gmra.mxu0 %v5037
        %v5187 = vpop.f32.mrf.mxu0
        %v5188 = vadd.f32 %v5076, %v5187
        %v5189 = vpop.f32.mrf.mxu0
        %v5190 = vadd.f32 %v5076, %v5189
        %5191 = vmatmul.bf16.gmra.mxu0 %v5039
        %v5192 = vpop.f32.mrf.mxu0
        %v5193 = vadd.f32 %v5076, %v5192
        %v5194 = vpop.f32.mrf.mxu0
        %v5195 = vadd.f32 %v5076, %v5194
        %5196 = vmatmul.bf16.gmra.mxu0 %v5041
        %v5197 = vpop.f32.mrf.mxu0
        %v5198 = vadd.f32 %v5076, %v5197
        %v5199 = vpop.f32.mrf.mxu0
        %v5200 = vadd.f32 %v5076, %v5199
        %5201 = vdwg.mxu0
        %5202 = vmatpush.bf16.msra.mxu0 %v5156
        %5203 = vmatpush.bf16.msra.mxu0 %v5155
        %5204 = vmatpush.bf16.msra.mxu0 %v5154
        %5205 = vmatpush.bf16.msra.mxu0 %v5153
        %5206 = vmatpush.bf16.msra.mxu0 %v5152
        %5207 = vmatpush.bf16.msra.mxu0 %v5151
        %5208 = vmatpush.bf16.msra.mxu0 %v5150
        %5209 = vmatpush.bf16.msra.mxu0 %v5149
        %5210 = vmatmul.bf16.gmra.mxu0 %v5036
        %v5211 = vpop.f32.mrf.mxu0
        %v5212 = vadd.f32 %v5183, %v5211
        %v5213 = vpop.f32.mrf.mxu0
        %v5214 = vadd.f32 %v5185, %v5213
        %5215 = vmatmul.bf16.gmra.mxu0 %v5038
        %v5216 = vpop.f32.mrf.mxu0
        %v5217 = vadd.f32 %v5188, %v5216
        %v5218 = vpop.f32.mrf.mxu0
        %v5219 = vadd.f32 %v5190, %v5218
        %5220 = vmatmul.bf16.gmra.mxu0 %v5040
        %v5221 = vpop.f32.mrf.mxu0
        %v5222 = vadd.f32 %v5193, %v5221
        %v5223 = vpop.f32.mrf.mxu0
        %v5224 = vadd.f32 %v5195, %v5223
        %5225 = vmatmul.bf16.gmra.mxu0 %v5042
        %v5226 = vpop.f32.mrf.mxu0
        %v5227 = vadd.f32 %v5198, %v5226
        %v5228 = vpop.f32.mrf.mxu0
        %v5229 = vadd.f32 %v5200, %v5228
        %5230 = vdwg.mxu0
        %v5231 = vadd.f32 %v4717, %v5212
        %v5232 = vadd.f32 %v4718, %v5214
        %v5233 = vadd.f32 %v4719, %v5217
        %v5234 = vadd.f32 %v4720, %v5219
        %v5235 = vadd.f32 %v4721, %v5222
        %v5236 = vadd.f32 %v4722, %v5224
        %v5237 = vadd.f32 %v4723, %v5227
        %v5238 = vadd.f32 %v4724, %v5229
        %5239 = vadd.xlane.f32.xlu0 %v5231
        %v5240 = vpop.xlane.xlu0 %5239
        %5241 = vadd.xlane.f32.xlu0 %v5232
        %v5242 = vpop.xlane.xlu0 %5241
        %5243 = vadd.xlane.f32.xlu0 %v5233
        %v5244 = vpop.xlane.xlu0 %5243
        %5245 = vadd.xlane.f32.xlu0 %v5234
        %v5246 = vpop.xlane.xlu0 %5245
        %5247 = vadd.xlane.f32.xlu0 %v5235
        %v5248 = vpop.xlane.xlu0 %5247
        %5249 = vadd.xlane.f32.xlu0 %v5236
        %v5250 = vpop.xlane.xlu0 %5249
        %5251 = vadd.xlane.f32.xlu0 %v5237
        %v5252 = vpop.xlane.xlu0 %5251
        %5253 = vadd.xlane.f32.xlu0 %v5238
        %v5254 = vpop.xlane.xlu0 %5253
        %v5255 = vmul.f32 %v5240, %v2202
        %v5256 = vmul.f32 %v5242, %v2202
        %v5257 = vmul.f32 %v5244, %v2202
        %v5258 = vmul.f32 %v5246, %v2202
        %v5259 = vmul.f32 %v5248, %v2202
        %v5260 = vmul.f32 %v5250, %v2202
        %v5261 = vmul.f32 %v5252, %v2202
        %v5262 = vmul.f32 %v5254, %v2202
        %v5263 = vsub.f32 %v5231, %v5255
        %v5264 = vsub.f32 %v5232, %v5256
        %v5265 = vsub.f32 %v5233, %v5257
        %v5266 = vsub.f32 %v5234, %v5258
        %v5267 = vsub.f32 %v5235, %v5259
        %v5268 = vsub.f32 %v5236, %v5260
        %v5269 = vsub.f32 %v5237, %v5261
        %v5270 = vsub.f32 %v5238, %v5262
        %v5271 = vmul.f32 %v5263, %v5263
        %v5272 = vmul.f32 %v5264, %v5264
        %v5273 = vmul.f32 %v5265, %v5265
        %v5274 = vmul.f32 %v5266, %v5266
        %v5275 = vmul.f32 %v5267, %v5267
        %v5276 = vmul.f32 %v5268, %v5268
        %v5277 = vmul.f32 %v5269, %v5269
        %v5278 = vmul.f32 %v5270, %v5270
        %5279 = vadd.xlane.f32.xlu0 %v5271
        %v5280 = vpop.xlane.xlu0 %5279
        %5281 = vadd.xlane.f32.xlu0 %v5272
        %v5282 = vpop.xlane.xlu0 %5281
        %5283 = vadd.xlane.f32.xlu0 %v5273
        %v5284 = vpop.xlane.xlu0 %5283
        %5285 = vadd.xlane.f32.xlu0 %v5274
        %v5286 = vpop.xlane.xlu0 %5285
        %5287 = vadd.xlane.f32.xlu0 %v5275
        %v5288 = vpop.xlane.xlu0 %5287
        %5289 = vadd.xlane.f32.xlu0 %v5276
        %v5290 = vpop.xlane.xlu0 %5289
        %5291 = vadd.xlane.f32.xlu0 %v5277
        %v5292 = vpop.xlane.xlu0 %5291
        %5293 = vadd.xlane.f32.xlu0 %v5278
        %v5294 = vpop.xlane.xlu0 %5293
        %v5295 = vmul.f32 %v5280, %v2202
        %v5296 = vmul.f32 %v5282, %v2202
        %v5297 = vmul.f32 %v5284, %v2202
        %v5298 = vmul.f32 %v5286, %v2202
        %v5299 = vmul.f32 %v5288, %v2202
        %v5300 = vmul.f32 %v5290, %v2202
        %v5301 = vmul.f32 %v5292, %v2202
        %v5302 = vmul.f32 %v5294, %v2202
        %v5303 = vadd.f32 %v5295, 1e-05
        %v5304 = vadd.f32 %v5296, 1e-05
        %v5305 = vadd.f32 %v5297, 1e-05
        %v5306 = vadd.f32 %v5298, 1e-05
        %v5307 = vadd.f32 %v5299, 1e-05
        %v5308 = vadd.f32 %v5300, 1e-05
        %v5309 = vadd.f32 %v5301, 1e-05
        %v5310 = vadd.f32 %v5302, 1e-05
        %v5311 = vrsqrt.pop %v5303
        %v5312 = vmul.f32 %v5311, %v5303
        %v5313 = vmul.f32 %v5312, %v5311
        %v5314 = vmul.f32 0.5, %v5313
        %v5315 = vsub.f32 1.5, %v5314
        %v5316 = vmul.f32 %v5311, %v5315
        %vm5317 = vweird.f32 %v5303
        %vm5318 = vweird.f32 %v5311
        %vm5319 = vmor %vm5317, %vm5318
        %v5320 = vsel %vm5319, %v5311, %v5316
        %v5321 = vrsqrt.pop %v5304
        %v5322 = vmul.f32 %v5321, %v5304
        %v5323 = vmul.f32 %v5322, %v5321
        %v5324 = vmul.f32 0.5, %v5323
        %v5325 = vsub.f32 1.5, %v5324
        %v5326 = vmul.f32 %v5321, %v5325
        %vm5327 = vweird.f32 %v5304
        %vm5328 = vweird.f32 %v5321
        %vm5329 = vmor %vm5327, %vm5328
        %v5330 = vsel %vm5329, %v5321, %v5326
        %v5331 = vrsqrt.pop %v5305
        %v5332 = vmul.f32 %v5331, %v5305
        %v5333 = vmul.f32 %v5332, %v5331
        %v5334 = vmul.f32 0.5, %v5333
        %v5335 = vsub.f32 1.5, %v5334
        %v5336 = vmul.f32 %v5331, %v5335
        %vm5337 = vweird.f32 %v5305
        %vm5338 = vweird.f32 %v5331
        %vm5339 = vmor %vm5337, %vm5338
        %v5340 = vsel %vm5339, %v5331, %v5336
        %v5341 = vrsqrt.pop %v5306
        %v5342 = vmul.f32 %v5341, %v5306
        %v5343 = vmul.f32 %v5342, %v5341
        %v5344 = vmul.f32 0.5, %v5343
        %v5345 = vsub.f32 1.5, %v5344
        %v5346 = vmul.f32 %v5341, %v5345
        %vm5347 = vweird.f32 %v5306
        %vm5348 = vweird.f32 %v5341
        %vm5349 = vmor %vm5347, %vm5348
        %v5350 = vsel %vm5349, %v5341, %v5346
        %v5351 = vrsqrt.pop %v5307
        %v5352 = vmul.f32 %v5351, %v5307
        %v5353 = vmul.f32 %v5352, %v5351
        %v5354 = vmul.f32 0.5, %v5353
        %v5355 = vsub.f32 1.5, %v5354
        %v5356 = vmul.f32 %v5351, %v5355
        %vm5357 = vweird.f32 %v5307
        %vm5358 = vweird.f32 %v5351
        %vm5359 = vmor %vm5357, %vm5358
        %v5360 = vsel %vm5359, %v5351, %v5356
        %v5361 = vrsqrt.pop %v5308
        %v5362 = vmul.f32 %v5361, %v5308
        %v5363 = vmul.f32 %v5362, %v5361
        %v5364 = vmul.f32 0.5, %v5363
        %v5365 = vsub.f32 1.5, %v5364
        %v5366 = vmul.f32 %v5361, %v5365
        %vm5367 = vweird.f32 %v5308
        %vm5368 = vweird.f32 %v5361
        %vm5369 = vmor %vm5367, %vm5368
        %v5370 = vsel %vm5369, %v5361, %v5366
        %v5371 = vrsqrt.pop %v5309
        %v5372 = vmul.f32 %v5371, %v5309
        %v5373 = vmul.f32 %v5372, %v5371
        %v5374 = vmul.f32 0.5, %v5373
        %v5375 = vsub.f32 1.5, %v5374
        %v5376 = vmul.f32 %v5371, %v5375
        %vm5377 = vweird.f32 %v5309
        %vm5378 = vweird.f32 %v5371
        %vm5379 = vmor %vm5377, %vm5378
        %v5380 = vsel %vm5379, %v5371, %v5376
        %v5381 = vrsqrt.pop %v5310
        %v5382 = vmul.f32 %v5381, %v5310
        %v5383 = vmul.f32 %v5382, %v5381
        %v5384 = vmul.f32 0.5, %v5383
        %v5385 = vsub.f32 1.5, %v5384
        %v5386 = vmul.f32 %v5381, %v5385
        %vm5387 = vweird.f32 %v5310
        %vm5388 = vweird.f32 %v5381
        %vm5389 = vmor %vm5387, %vm5388
        %v5390 = vsel %vm5389, %v5381, %v5386
        %v5391 = vmul.f32 %v5263, %v5320
        %v5392 = vmul.f32 %v5264, %v5330
        %v5393 = vmul.f32 %v5265, %v5340
        %v5394 = vmul.f32 %v5266, %v5350
        %v5395 = vmul.f32 %v5267, %v5360
        %v5396 = vmul.f32 %v5268, %v5370
        %v5397 = vmul.f32 %v5269, %v5380
        %v5398 = vmul.f32 %v5270, %v5390
        %v5399 = vperm.slane %v3055, 7
        %v5400 = vmul.f32 %v5391, %v5399
        %v5401 = vmul.f32 %v5392, %v5399
        %v5402 = vmul.f32 %v5393, %v5399
        %v5403 = vmul.f32 %v5394, %v5399
        %v5404 = vmul.f32 %v5395, %v5399
        %v5405 = vmul.f32 %v5396, %v5399
        %v5406 = vmul.f32 %v5397, %v5399
        %v5407 = vmul.f32 %v5398, %v5399
        %v5408 = vperm.slane %v3056, 0
        %v5409 = vadd.f32 %v5400, %v5408
        %v5410 = vadd.f32 %v5401, %v5408
        %v5411 = vadd.f32 %v5402, %v5408
        %v5412 = vadd.f32 %v5403, %v5408
        %v5413 = vadd.f32 %v5404, %v5408
        %v5414 = vadd.f32 %v5405, %v5408
        %v5415 = vadd.f32 %v5406, %v5408
        %v5416 = vadd.f32 %v5407, %v5408
        %v5417 = vlaneseq
        %v5418 = vshrl.u32 %v5417, 7
        %vm5419 = vcmp.eq.s32.totalorder %v5418, 0
        %vm5420 = vmand %vm5419, %vm682
        %v5421 = vsel %vm5420, 0.023809524, 0.0
        %v5423 = vsel %vm1082, %v5421, 0
        %5425 = vmatpush.msra.mxu0 0.0
        %5426 = vmatpush.msra.mxu0 0.0
        %5427 = vmatpush.msra.mxu0 0.0
        %5428 = vmatpush.msra.mxu0 0.0
        %5429 = vmatpush.msra.mxu0 0.0
        %5430 = vmatpush.msra.mxu0 0.0
        %5431 = vmatpush.msra.mxu0 0.0
        %5432 = vmatpush.msra.mxu0 0.0
        %5433 = vmatpush.msra.mxu0 %v5416
        %5434 = vmatpush.msra.mxu0 %v5415
        %5435 = vmatpush.msra.mxu0 %v5414
        %5436 = vmatpush.msra.mxu0 %v5413
        %5437 = vmatpush.msra.mxu0 %v5412
        %5438 = vmatpush.msra.mxu0 %v5411
        %5439 = vmatpush.msra.mxu0 %v5410
        %5440 = vmatpush.msra.mxu0 %v5409
        %5441 = vmatmul.f32.gmra.mxu0 %v5423
        %v5442 = vpop.f32.mrf.mxu0
        %v5443 = vadd.f32 0.0, %v5442
        %5444 = vdwg.mxu0
        %v5445 = vpack.c.bf16 %v5443, %v5443
        %v5446 = vld [vmem:[#allocation10] sm:$0xff]
        %v5447 = vld [vmem:[#allocation10 + $0x8] sm:$0xff]
        %v5448 = vld [vmem:[#allocation10 + $0x10] sm:$0xff]
        %v5449 = vld [vmem:[#allocation10 + $0x18] sm:$0xff]
        %v5450 = vld [vmem:[#allocation10 + $0x20] sm:$0xff]
        %v5451 = vld [vmem:[#allocation10 + $0x28] sm:$0xff]
        %v5452 = vld [vmem:[#allocation10 + $0x30] sm:$0xff]
        %v5453 = vld [vmem:[#allocation10 + $0x38] sm:$0xff]
        %v5454 = vld [vmem:[#allocation10 + $0x40] sm:$0xff]
        %v5455 = vld [vmem:[#allocation10 + $0x48] sm:$0xff]
        %v5456 = vld [vmem:[#allocation10 + $0x50] sm:$0xff]
        %v5457 = vld [vmem:[#allocation10 + $0x58] sm:$0xff]
        %v5458 = vld [vmem:[#allocation10 + $0x60] sm:$0xff]
        %v5459 = vld [vmem:[#allocation10 + $0x68] sm:$0xff]
        %v5460 = vld [vmem:[#allocation10 + $0x70] sm:$0xff]
        %v5461 = vld [vmem:[#allocation10 + $0x78] sm:$0xff]
        %v5462 = vld [vmem:[#allocation10 + $0x80] sm:$0xff]
        %v5463 = vld [vmem:[#allocation10 + $0x88] sm:$0xff]
        %v5464 = vld [vmem:[#allocation10 + $0x90] sm:$0xff]
        %v5465 = vld [vmem:[#allocation10 + $0x98] sm:$0xff]
        %v5466 = vld [vmem:[#allocation10 + $0xa0] sm:$0xff]
        %v5467 = vld [vmem:[#allocation10 + $0xa8] sm:$0xff]
        %v5468 = vld [vmem:[#allocation10 + $0xb0] sm:$0xff]
        %v5469 = vld [vmem:[#allocation10 + $0xb8] sm:$0xff]
        %v5470 = vld [vmem:[#allocation10 + $0xc0] sm:$0xff]
        %v5471 = vld [vmem:[#allocation10 + $0xc8] sm:$0xff]
        %v5472 = vld [vmem:[#allocation10 + $0xd0] sm:$0xff]
        %v5473 = vld [vmem:[#allocation10 + $0xd8] sm:$0xff]
        %v5474 = vld [vmem:[#allocation10 + $0xe0] sm:$0xff]
        %v5475 = vld [vmem:[#allocation10 + $0xe8] sm:$0xff]
        %v5476 = vld [vmem:[#allocation10 + $0xf0] sm:$0xff]
        %v5477 = vld [vmem:[#allocation10 + $0xf8] sm:$0xff]
        %v5478 = vld [vmem:[%s10] sm:$0xf]
        %v5480 = vperm.slane %v5478, 0
        %v5481 = vperm.slane %v5478, 1
        %v5482 = vperm.slane %v5478, 2
        %v5483 = vperm.slane %v5478, 3
        %v5520 = vunpack.c.l.b16 %v5446
        %v5521 = vunpack.c.h.b16 %v5446
        %v5522 = vunpack.c.l.b16 %v5447
        %v5523 = vunpack.c.h.b16 %v5447
        %v5524 = vunpack.c.l.b16 %v5448
        %v5525 = vunpack.c.h.b16 %v5448
        %v5526 = vunpack.c.l.b16 %v5449
        %v5527 = vunpack.c.h.b16 %v5449
        %v5528 = vunpack.c.l.b16 %v5450
        %v5529 = vunpack.c.h.b16 %v5450
        %v5530 = vunpack.c.l.b16 %v5451
        %v5531 = vunpack.c.h.b16 %v5451
        %v5532 = vunpack.c.l.b16 %v5452
        %v5533 = vunpack.c.h.b16 %v5452
        %v5534 = vunpack.c.l.b16 %v5453
        %v5535 = vunpack.c.h.b16 %v5453
        %v5536 = vunpack.c.l.b16 %v5454
        %v5537 = vunpack.c.h.b16 %v5454
        %v5538 = vunpack.c.l.b16 %v5455
        %v5539 = vunpack.c.h.b16 %v5455
        %v5540 = vunpack.c.l.b16 %v5456
        %v5541 = vunpack.c.h.b16 %v5456
        %v5542 = vunpack.c.l.b16 %v5457
        %v5543 = vunpack.c.h.b16 %v5457
        %v5544 = vunpack.c.l.b16 %v5458
        %v5545 = vunpack.c.h.b16 %v5458
        %v5546 = vunpack.c.l.b16 %v5459
        %v5547 = vunpack.c.h.b16 %v5459
        %v5548 = vunpack.c.l.b16 %v5460
        %v5549 = vunpack.c.h.b16 %v5460
        %v5550 = vunpack.c.l.b16 %v5461
        %v5551 = vunpack.c.h.b16 %v5461
        %v5552 = vunpack.c.l.b16 %v5462
        %v5553 = vunpack.c.h.b16 %v5462
        %v5554 = vunpack.c.l.b16 %v5463
        %v5555 = vunpack.c.h.b16 %v5463
        %v5556 = vunpack.c.l.b16 %v5464
        %v5557 = vunpack.c.h.b16 %v5464
        %v5558 = vunpack.c.l.b16 %v5465
        %v5559 = vunpack.c.h.b16 %v5465
        %v5560 = vunpack.c.l.b16 %v5466
        %v5561 = vunpack.c.h.b16 %v5466
        %v5562 = vunpack.c.l.b16 %v5467
        %v5563 = vunpack.c.h.b16 %v5467
        %v5564 = vunpack.c.l.b16 %v5468
        %v5565 = vunpack.c.h.b16 %v5468
        %v5566 = vunpack.c.l.b16 %v5469
        %v5567 = vunpack.c.h.b16 %v5469
        %v5568 = vunpack.c.l.b16 %v5470
        %v5569 = vunpack.c.h.b16 %v5470
        %v5570 = vunpack.c.l.b16 %v5471
        %v5571 = vunpack.c.h.b16 %v5471
        %v5572 = vunpack.c.l.b16 %v5472
        %v5573 = vunpack.c.h.b16 %v5472
        %v5574 = vunpack.c.l.b16 %v5473
        %v5575 = vunpack.c.h.b16 %v5473
        %v5576 = vunpack.c.l.b16 %v5474
        %v5577 = vunpack.c.h.b16 %v5474
        %v5578 = vunpack.c.l.b16 %v5475
        %v5579 = vunpack.c.h.b16 %v5475
        %v5580 = vunpack.c.l.b16 %v5476
        %v5581 = vunpack.c.h.b16 %v5476
        %v5582 = vunpack.c.l.b16 %v5477
        %v5583 = vunpack.c.h.b16 %v5477
        %v5584 = vpack.c.b16 %v5524, %v5520
        %v5585 = vpack.c.b16 %v5525, %v5521
        %v5586 = vpack.c.b16 %v5526, %v5522
        %v5587 = vpack.c.b16 %v5527, %v5523
        %v5588 = vpack.c.b16 %v5532, %v5528
        %v5589 = vpack.c.b16 %v5533, %v5529
        %v5590 = vpack.c.b16 %v5534, %v5530
        %v5591 = vpack.c.b16 %v5535, %v5531
        %v5592 = vpack.c.b16 %v5540, %v5536
        %v5593 = vpack.c.b16 %v5541, %v5537
        %v5594 = vpack.c.b16 %v5542, %v5538
        %v5595 = vpack.c.b16 %v5543, %v5539
        %v5596 = vpack.c.b16 %v5548, %v5544
        %v5597 = vpack.c.b16 %v5549, %v5545
        %v5598 = vpack.c.b16 %v5550, %v5546
        %v5599 = vpack.c.b16 %v5551, %v5547
        %v5600 = vpack.c.b16 %v5556, %v5552
        %v5601 = vpack.c.b16 %v5557, %v5553
        %v5602 = vpack.c.b16 %v5558, %v5554
        %v5603 = vpack.c.b16 %v5559, %v5555
        %v5604 = vpack.c.b16 %v5564, %v5560
        %v5605 = vpack.c.b16 %v5565, %v5561
        %v5606 = vpack.c.b16 %v5566, %v5562
        %v5607 = vpack.c.b16 %v5567, %v5563
        %v5608 = vpack.c.b16 %v5572, %v5568
        %v5609 = vpack.c.b16 %v5573, %v5569
        %v5610 = vpack.c.b16 %v5574, %v5570
        %v5611 = vpack.c.b16 %v5575, %v5571
        %v5612 = vpack.c.b16 %v5580, %v5576
        %v5613 = vpack.c.b16 %v5581, %v5577
        %v5614 = vpack.c.b16 %v5582, %v5578
        %v5615 = vpack.c.b16 %v5583, %v5579
        %5648 = vmatpush.bf16.msra.mxu0 %v5612
        %5649 = vmatpush.bf16.msra.mxu0 %v5608
        %5650 = vmatpush.bf16.msra.mxu0 %v5604
        %5651 = vmatpush.bf16.msra.mxu0 %v5600
        %5652 = vmatpush.bf16.msra.mxu0 %v5596
        %5653 = vmatpush.bf16.msra.mxu0 %v5592
        %5654 = vmatpush.bf16.msra.mxu0 %v5588
        %5655 = vmatpush.bf16.msra.mxu0 %v5584
        %5656 = vmatmul.bf16.gmra.mxu0 %v5445
        %v5657 = vpop.f32.mrf.mxu0
        %v5658 = vadd.f32 %v5480, %v5657
        %v5659 = vpop.f32.mrf.mxu0
        %5660 = vdwg.mxu0
        %5661 = vmatpush.bf16.msra.mxu0 %v5613
        %5662 = vmatpush.bf16.msra.mxu0 %v5609
        %5663 = vmatpush.bf16.msra.mxu0 %v5605
        %5664 = vmatpush.bf16.msra.mxu0 %v5601
        %5665 = vmatpush.bf16.msra.mxu0 %v5597
        %5666 = vmatpush.bf16.msra.mxu0 %v5593
        %5667 = vmatpush.bf16.msra.mxu0 %v5589
        %5668 = vmatpush.bf16.msra.mxu0 %v5585
        %5669 = vmatmul.bf16.gmra.mxu0 %v5445
        %v5670 = vpop.f32.mrf.mxu0
        %v5671 = vadd.f32 %v5481, %v5670
        %v5672 = vpop.f32.mrf.mxu0
        %5673 = vdwg.mxu0
        %5674 = vmatpush.bf16.msra.mxu0 %v5614
        %5675 = vmatpush.bf16.msra.mxu0 %v5610
        %5676 = vmatpush.bf16.msra.mxu0 %v5606
        %5677 = vmatpush.bf16.msra.mxu0 %v5602
        %5678 = vmatpush.bf16.msra.mxu0 %v5598
        %5679 = vmatpush.bf16.msra.mxu0 %v5594
        %5680 = vmatpush.bf16.msra.mxu0 %v5590
        %5681 = vmatpush.bf16.msra.mxu0 %v5586
        %5682 = vmatmul.bf16.gmra.mxu0 %v5445
        %v5683 = vpop.f32.mrf.mxu0
        %v5684 = vadd.f32 %v5482, %v5683
        %v5685 = vpop.f32.mrf.mxu0
        %5686 = vdwg.mxu0
        %5687 = vmatpush.bf16.msra.mxu0 %v5615
        %5688 = vmatpush.bf16.msra.mxu0 %v5611
        %5689 = vmatpush.bf16.msra.mxu0 %v5607
        %5690 = vmatpush.bf16.msra.mxu0 %v5603
        %5691 = vmatpush.bf16.msra.mxu0 %v5599
        %5692 = vmatpush.bf16.msra.mxu0 %v5595
        %5693 = vmatpush.bf16.msra.mxu0 %v5591
        %5694 = vmatpush.bf16.msra.mxu0 %v5587
        %5695 = vmatmul.bf16.gmra.mxu0 %v5445
        %v5696 = vpop.f32.mrf.mxu0
        %v5697 = vadd.f32 %v5483, %v5696
        %v5698 = vpop.f32.mrf.mxu0
        %5699 = vdwg.mxu0
        %v5700 = vmax.f32 %v5658, 0.0
        %v5701 = vmax.f32 %v5671, 0.0
        %v5702 = vmax.f32 %v5684, 0.0
        %v5703 = vmax.f32 %v5697, 0.0
        %v5704 = vpack.c.bf16 %v5700, %v5700
        %v5705 = vpack.c.bf16 %v5701, %v5701
        %v5706 = vpack.c.bf16 %v5702, %v5702
        %v5707 = vpack.c.bf16 %v5703, %v5703
        %v5708 = vld [vmem:[#allocation11] sm:$0xf]
        %v5709 = vld [vmem:[#allocation11 + $0x4] sm:$0xf]
        %v5710 = vld [vmem:[#allocation11 + $0x8] sm:$0xf]
        %v5711 = vld [vmem:[#allocation11 + $0xc] sm:$0xf]
        %v5712 = vld [vmem:[#allocation11 + $0x10] sm:$0xf]
        %v5713 = vld [vmem:[#allocation11 + $0x14] sm:$0xf]
        %v5714 = vld [vmem:[#allocation11 + $0x18] sm:$0xf]
        %v5715 = vld [vmem:[#allocation11 + $0x1c] sm:$0xf]
        %v5716 = vld [vmem:[#allocation11 + $0x20] sm:$0xf]
        %v5717 = vld [vmem:[#allocation11 + $0x24] sm:$0xf]
        %v5718 = vld [vmem:[#allocation11 + $0x28] sm:$0xf]
        %v5719 = vld [vmem:[#allocation11 + $0x2c] sm:$0xf]
        %v5720 = vld [vmem:[#allocation11 + $0x30] sm:$0xf]
        %v5721 = vld [vmem:[#allocation11 + $0x34] sm:$0xf]
        %v5722 = vld [vmem:[#allocation11 + $0x38] sm:$0xf]
        %v5723 = vld [vmem:[#allocation11 + $0x3c] sm:$0xf]
        %v5724 = vld [vmem:[#allocation11 + $0x40] sm:$0xf]
        %v5725 = vld [vmem:[#allocation11 + $0x44] sm:$0xf]
        %v5726 = vld [vmem:[#allocation11 + $0x48] sm:$0xf]
        %v5727 = vld [vmem:[#allocation11 + $0x4c] sm:$0xf]
        %v5728 = vld [vmem:[#allocation11 + $0x50] sm:$0xf]
        %v5729 = vld [vmem:[#allocation11 + $0x54] sm:$0xf]
        %v5730 = vld [vmem:[#allocation11 + $0x58] sm:$0xf]
        %v5731 = vld [vmem:[#allocation11 + $0x5c] sm:$0xf]
        %v5732 = vld [vmem:[#allocation11 + $0x60] sm:$0xf]
        %v5733 = vld [vmem:[#allocation11 + $0x64] sm:$0xf]
        %v5734 = vld [vmem:[#allocation11 + $0x68] sm:$0xf]
        %v5735 = vld [vmem:[#allocation11 + $0x6c] sm:$0xf]
        %v5736 = vld [vmem:[#allocation11 + $0x70] sm:$0xf]
        %v5737 = vld [vmem:[#allocation11 + $0x74] sm:$0xf]
        %v5738 = vld [vmem:[#allocation11 + $0x78] sm:$0xf]
        %v5739 = vld [vmem:[#allocation11 + $0x7c] sm:$0xf]
        %v5740 = vld [vmem:[#allocation11 + $0x80] sm:$0xf]
        %v5741 = vld [vmem:[#allocation11 + $0x84] sm:$0xf]
        %v5742 = vld [vmem:[#allocation11 + $0x88] sm:$0xf]
        %v5743 = vld [vmem:[#allocation11 + $0x8c] sm:$0xf]
        %v5744 = vld [vmem:[#allocation11 + $0x90] sm:$0xf]
        %v5745 = vld [vmem:[#allocation11 + $0x94] sm:$0xf]
        %v5746 = vld [vmem:[#allocation11 + $0x98] sm:$0xf]
        %v5747 = vld [vmem:[#allocation11 + $0x9c] sm:$0xf]
        %v5748 = vld [vmem:[#allocation11 + $0xa0] sm:$0xf]
        %v5749 = vld [vmem:[#allocation11 + $0xa4] sm:$0xf]
        %v5750 = vld [vmem:[#allocation11 + $0xa8] sm:$0xf]
        %v5751 = vld [vmem:[#allocation11 + $0xac] sm:$0xf]
        %v5752 = vld [vmem:[#allocation11 + $0xb0] sm:$0xf]
        %v5753 = vld [vmem:[#allocation11 + $0xb4] sm:$0xf]
        %v5754 = vld [vmem:[#allocation11 + $0xb8] sm:$0xf]
        %v5755 = vld [vmem:[#allocation11 + $0xbc] sm:$0xf]
        %v5756 = vld [vmem:[#allocation11 + $0xc0] sm:$0xf]
        %v5757 = vld [vmem:[#allocation11 + $0xc4] sm:$0xf]
        %v5758 = vld [vmem:[#allocation11 + $0xc8] sm:$0xf]
        %v5759 = vld [vmem:[#allocation11 + $0xcc] sm:$0xf]
        %v5760 = vld [vmem:[#allocation11 + $0xd0] sm:$0xf]
        %v5761 = vld [vmem:[#allocation11 + $0xd4] sm:$0xf]
        %v5762 = vld [vmem:[#allocation11 + $0xd8] sm:$0xf]
        %v5763 = vld [vmem:[#allocation11 + $0xdc] sm:$0xf]
        %v5764 = vld [vmem:[#allocation11 + $0xe0] sm:$0xf]
        %v5765 = vld [vmem:[#allocation11 + $0xe4] sm:$0xf]
        %v5766 = vld [vmem:[#allocation11 + $0xe8] sm:$0xf]
        %v5767 = vld [vmem:[#allocation11 + $0xec] sm:$0xf]
        %v5768 = vld [vmem:[#allocation11 + $0xf0] sm:$0xf]
        %v5769 = vld [vmem:[#allocation11 + $0xf4] sm:$0xf]
        %v5770 = vld [vmem:[#allocation11 + $0xf8] sm:$0xf]
        %v5771 = vld [vmem:[#allocation11 + $0xfc] sm:$0xf]
        %v5772 = vld [vmem:[%s12] sm:$0x1]
        %v5774 = vperm.slane %v5772, 0
        %v5840 = vunpack.c.l.b16 %v5708
        %v5841 = vunpack.c.l.b16 %v5709
        %v5842 = vunpack.c.l.b16 %v5710
        %v5843 = vunpack.c.l.b16 %v5711
        %v5844 = vunpack.c.l.b16 %v5712
        %v5845 = vunpack.c.l.b16 %v5713
        %v5846 = vunpack.c.l.b16 %v5714
        %v5847 = vunpack.c.l.b16 %v5715
        %v5848 = vunpack.c.l.b16 %v5716
        %v5849 = vunpack.c.l.b16 %v5717
        %v5850 = vunpack.c.l.b16 %v5718
        %v5851 = vunpack.c.l.b16 %v5719
        %v5852 = vunpack.c.l.b16 %v5720
        %v5853 = vunpack.c.l.b16 %v5721
        %v5854 = vunpack.c.l.b16 %v5722
        %v5855 = vunpack.c.l.b16 %v5723
        %v5856 = vunpack.c.l.b16 %v5724
        %v5857 = vunpack.c.l.b16 %v5725
        %v5858 = vunpack.c.l.b16 %v5726
        %v5859 = vunpack.c.l.b16 %v5727
        %v5860 = vunpack.c.l.b16 %v5728
        %v5861 = vunpack.c.l.b16 %v5729
        %v5862 = vunpack.c.l.b16 %v5730
        %v5863 = vunpack.c.l.b16 %v5731
        %v5864 = vunpack.c.l.b16 %v5732
        %v5865 = vunpack.c.l.b16 %v5733
        %v5866 = vunpack.c.l.b16 %v5734
        %v5867 = vunpack.c.l.b16 %v5735
        %v5868 = vunpack.c.l.b16 %v5736
        %v5869 = vunpack.c.l.b16 %v5737
        %v5870 = vunpack.c.l.b16 %v5738
        %v5871 = vunpack.c.l.b16 %v5739
        %v5872 = vunpack.c.l.b16 %v5740
        %v5873 = vunpack.c.l.b16 %v5741
        %v5874 = vunpack.c.l.b16 %v5742
        %v5875 = vunpack.c.l.b16 %v5743
        %v5876 = vunpack.c.l.b16 %v5744
        %v5877 = vunpack.c.l.b16 %v5745
        %v5878 = vunpack.c.l.b16 %v5746
        %v5879 = vunpack.c.l.b16 %v5747
        %v5880 = vunpack.c.l.b16 %v5748
        %v5881 = vunpack.c.l.b16 %v5749
        %v5882 = vunpack.c.l.b16 %v5750
        %v5883 = vunpack.c.l.b16 %v5751
        %v5884 = vunpack.c.l.b16 %v5752
        %v5885 = vunpack.c.l.b16 %v5753
        %v5886 = vunpack.c.l.b16 %v5754
        %v5887 = vunpack.c.l.b16 %v5755
        %v5888 = vunpack.c.l.b16 %v5756
        %v5889 = vunpack.c.l.b16 %v5757
        %v5890 = vunpack.c.l.b16 %v5758
        %v5891 = vunpack.c.l.b16 %v5759
        %v5892 = vunpack.c.l.b16 %v5760
        %v5893 = vunpack.c.l.b16 %v5761
        %v5894 = vunpack.c.l.b16 %v5762
        %v5895 = vunpack.c.l.b16 %v5763
        %v5896 = vunpack.c.l.b16 %v5764
        %v5897 = vunpack.c.l.b16 %v5765
        %v5898 = vunpack.c.l.b16 %v5766
        %v5899 = vunpack.c.l.b16 %v5767
        %v5900 = vunpack.c.l.b16 %v5768
        %v5901 = vunpack.c.l.b16 %v5769
        %v5902 = vunpack.c.l.b16 %v5770
        %v5903 = vunpack.c.l.b16 %v5771
        %v5904 = vpack.c.b16 %v5841, %v5840
        %v5905 = vpack.c.b16 %v5843, %v5842
        %v5906 = vpack.c.b16 %v5845, %v5844
        %v5907 = vpack.c.b16 %v5847, %v5846
        %v5908 = vpack.c.b16 %v5849, %v5848
        %v5909 = vpack.c.b16 %v5851, %v5850
        %v5910 = vpack.c.b16 %v5853, %v5852
        %v5911 = vpack.c.b16 %v5855, %v5854
        %v5912 = vpack.c.b16 %v5857, %v5856
        %v5913 = vpack.c.b16 %v5859, %v5858
        %v5914 = vpack.c.b16 %v5861, %v5860
        %v5915 = vpack.c.b16 %v5863, %v5862
        %v5916 = vpack.c.b16 %v5865, %v5864
        %v5917 = vpack.c.b16 %v5867, %v5866
        %v5918 = vpack.c.b16 %v5869, %v5868
        %v5919 = vpack.c.b16 %v5871, %v5870
        %v5920 = vpack.c.b16 %v5873, %v5872
        %v5921 = vpack.c.b16 %v5875, %v5874
        %v5922 = vpack.c.b16 %v5877, %v5876
        %v5923 = vpack.c.b16 %v5879, %v5878
        %v5924 = vpack.c.b16 %v5881, %v5880
        %v5925 = vpack.c.b16 %v5883, %v5882
        %v5926 = vpack.c.b16 %v5885, %v5884
        %v5927 = vpack.c.b16 %v5887, %v5886
        %v5928 = vpack.c.b16 %v5889, %v5888
        %v5929 = vpack.c.b16 %v5891, %v5890
        %v5930 = vpack.c.b16 %v5893, %v5892
        %v5931 = vpack.c.b16 %v5895, %v5894
        %v5932 = vpack.c.b16 %v5897, %v5896
        %v5933 = vpack.c.b16 %v5899, %v5898
        %v5934 = vpack.c.b16 %v5901, %v5900
        %v5935 = vpack.c.b16 %v5903, %v5902
        %5968 = vmatpush.bf16.msra.mxu0 %v5911
        %5969 = vmatpush.bf16.msra.mxu0 %v5910
        %5970 = vmatpush.bf16.msra.mxu0 %v5909
        %5971 = vmatpush.bf16.msra.mxu0 %v5908
        %5972 = vmatpush.bf16.msra.mxu0 %v5907
        %5973 = vmatpush.bf16.msra.mxu0 %v5906
        %5974 = vmatpush.bf16.msra.mxu0 %v5905
        %5975 = vmatpush.bf16.msra.mxu0 %v5904
        %5976 = vmatmul.bf16.gmra.mxu0 %v5704
        %v5977 = vpop.f32.mrf.mxu0
        %v5978 = vadd.f32 %v5774, %v5977
        %v5979 = vpop.f32.mrf.mxu0
        %5980 = vdwg.mxu0
        %5981 = vmatpush.bf16.msra.mxu0 %v5919
        %5982 = vmatpush.bf16.msra.mxu0 %v5918
        %5983 = vmatpush.bf16.msra.mxu0 %v5917
        %5984 = vmatpush.bf16.msra.mxu0 %v5916
        %5985 = vmatpush.bf16.msra.mxu0 %v5915
        %5986 = vmatpush.bf16.msra.mxu0 %v5914
        %5987 = vmatpush.bf16.msra.mxu0 %v5913
        %5988 = vmatpush.bf16.msra.mxu0 %v5912
        %5989 = vmatmul.bf16.gmra.mxu0 %v5705
        %v5990 = vpop.f32.mrf.mxu0
        %v5991 = vadd.f32 %v5978, %v5990
        %v5992 = vpop.f32.mrf.mxu0
        %5993 = vdwg.mxu0
        %5994 = vmatpush.bf16.msra.mxu0 %v5927
        %5995 = vmatpush.bf16.msra.mxu0 %v5926
        %5996 = vmatpush.bf16.msra.mxu0 %v5925
        %5997 = vmatpush.bf16.msra.mxu0 %v5924
        %5998 = vmatpush.bf16.msra.mxu0 %v5923
        %5999 = vmatpush.bf16.msra.mxu0 %v5922
        %6000 = vmatpush.bf16.msra.mxu0 %v5921
        %6001 = vmatpush.bf16.msra.mxu0 %v5920
        %6002 = vmatmul.bf16.gmra.mxu0 %v5706
        %v6003 = vpop.f32.mrf.mxu0
        %v6004 = vadd.f32 %v5991, %v6003
        %v6005 = vpop.f32.mrf.mxu0
        %6006 = vdwg.mxu0
        %6007 = vmatpush.bf16.msra.mxu0 %v5935
        %6008 = vmatpush.bf16.msra.mxu0 %v5934
        %6009 = vmatpush.bf16.msra.mxu0 %v5933
        %6010 = vmatpush.bf16.msra.mxu0 %v5932
        %6011 = vmatpush.bf16.msra.mxu0 %v5931
        %6012 = vmatpush.bf16.msra.mxu0 %v5930
        %6013 = vmatpush.bf16.msra.mxu0 %v5929
        %6014 = vmatpush.bf16.msra.mxu0 %v5928
        %6015 = vmatmul.bf16.gmra.mxu0 %v5707
        %v6016 = vpop.f32.mrf.mxu0
        %v6017 = vadd.f32 %v6004, %v6016
        %v6018 = vpop.f32.mrf.mxu0
        %6019 = vdwg.mxu0
        %vm6020 = vcmp.eq.s32.totalorder %v681, 7
        %v6021 = vtanh.pop %v6017
        %v6022 = vsel %vm6020, %v6021, %v6017
        %6023 = vst [vmem:[%s538] sm:$0xff] %v6022
        %p6024 = scmp.lt.s32.totalorder %s28, 1
        %s6025 = scalar_select %p6024, %s28, 1
        %s6026 = smul.addr %s6025, 8
        %s6027 = scalar_lea.vmem %s13, %s6026
        // Predicated region
        $region97: #{forward.1} parent=71 // pred_check
          %p6028 = pneg %p324
        $region98: #{forward.1} parent=71 // pred_check_branch
          %6030 = sbr.rel (%p6028) target = $region100
        $region99: #{forward.1} parent=71 // pred_region
          _
        $region100: #{forward.1} parent=71 // pred_fallthru
          _
      $region72: #{forward.1} parent=5 // pred_fallthru
        _
      %p6031 = scmp.le.s32.totalorder 2, %s23
      // Predicated region
      $region101: #{forward.1} parent=5 // pred_check
        %p6032 = pneg %p6031
      $region102: #{forward.1} parent=5 // pred_check_branch
        %6034 = sbr.rel (%p6032) target = $region104
      $region103: #{forward.1} parent=5 // pred_region
        %s6035 = ssub.s32 %s23, 2
        // Predicated region
        $region105: #{forward.1} parent=103 // pred_check
          %p6036 = pneg %p330
        $region106: #{forward.1} parent=103 // pred_check_branch
          %6038 = sbr.rel (%p6036) target = $region108
        $region107: #{forward.1} parent=103 // pred_region
          %p6039 = scmp.lt.s32.totalorder %s29, 1
          %s6040 = scalar_select %p6039, %s29, 1
          %s6041 = smul.addr %s6040, 8
          %s6042 = scalar_lea.vmem %s13, %s6041
        $region108: #{forward.1} parent=103 // pred_fallthru
          _
      $region104: #{forward.1} parent=5 // pred_fallthru
        _
    $region6: #{forward.1} parent=1 // loop_footer
      %s27 = sadd.s32 1, %s23
    $region7: #{forward.1} parent=1 // loop_footer_branch
      %22 = sbr.rel target = $region3
    $region8: #{forward.1} parent=1 // loop_exit
      _
    %6043 = vsyncpa [#allocation4], 1
    %s6044 = scalar_lea.sflag [#allocation4], 1
    %6045 = vsyncpa %s6044, 1
    %6046 = vsyncpa [#allocation6], 1
    %6047 = vsyncpa [#allocation9], 1
    %6048 = vsyncpa [#allocation12], 1

</llo_original>
